<compile_context>
chip_gen: v7x
topology: tpu7x:2x2x1
jax: 0.10.0
libtpu: 0.0.40
codegen_flags: <defaults>
</compile_context>

<pallas_src>
import jax
import jax.numpy as jnp
import numpy as np
from jax.experimental import pallas as pl
from jax.experimental.pallas import tpu as pltpu

EPS = 1e-5                      # nn.InstanceNorm2d default eps (affine=False)
COMPUTE_DTYPE = jnp.bfloat16    # MXU operand / I-O dtype; accumulation is f32
LANES = 128


def residual_block_kernel(x_ref, w1_ref, w2_ref, o_ref):
    x = x_ref[0]                                   # (H, W, Cp) bf16
    H, W, Cp = x.shape
    inv_hw = 1.0 / (H * W)

    def conv3x3_in(xc, w_ref):
        """3x3 conv (stride 1, reflect pad 1) + InstanceNorm(affine=False) stats.

        xc:    (H, W, Cp) bf16
        w_ref: Ref of (3, 3*Cp, Cp) bf16 — per-ky weights with the 3 kx taps
               folded into the K (input-channel) axis.
        Returns (acc (H*W, Cp) f32, mean (1, Cp), inv_std (1, Cp)).
        """
        # Column (kx) taps folded into the matmul K dim: build the two
        # column-shifted (reflect) copies once and lane-concat with xc.
        x_m = jnp.concatenate([xc[:, 1:2], xc[:, :W - 1]], axis=1)       # j-1, reflect
        x_p = jnp.concatenate([xc[:, 1:], xc[:, W - 2:W - 1]], axis=1)   # j+1, reflect
        x3 = jnp.concatenate([x_m, xc, x_p], axis=2).reshape(H * W, 3 * Cp)

        # One matmul per ky with K = 3*Cp (3 accumulator passes instead of 9).
        s0 = jnp.dot(x3, w_ref[0], preferred_element_type=jnp.float32).reshape(H, W, Cp)
        s1 = jnp.dot(x3, w_ref[1], preferred_element_type=jnp.float32).reshape(H, W, Cp)
        s2 = jnp.dot(x3, w_ref[2], preferred_element_type=jnp.float32).reshape(H, W, Cp)

        # Row (ky) taps applied to the f32 results: shifts (with reflect fixup)
        # along the leading, untiled H axis — cheap vreg moves, no relayout.
        s0s = jnp.concatenate([s0[1:2], s0[:H - 1]], axis=0)             # i-1, reflect
        s2s = jnp.concatenate([s2[1:], s2[H - 2:H - 1]], axis=0)         # i+1, reflect
        acc = (s0s + s1 + s2s).reshape(H * W, Cp)

        # Single-pass InstanceNorm statistics (biased variance, f32).
        # Conv bias intentionally omitted: a per-channel constant is exactly
        # cancelled by the mean subtraction (affine=False IN follows directly).
        mean = jnp.sum(acc, axis=0, keepdims=True) * inv_hw              # (1, Cp)
        mean_sq = jnp.sum(acc * acc, axis=0, keepdims=True) * inv_hw     # (1, Cp)
        var = mean_sq - mean * mean
        inv_std = jax.lax.rsqrt(var + EPS)                               # EUP
        return acc, mean, inv_std

    # conv1 + IN + ReLU, downcast to bf16 so the inter-conv intermediate held
    # live in VMEM (and the second MXU operand) is bf16, not f32.
    acc1, m1, r1 = conv3x3_in(x, w1_ref)
    h = jnp.maximum((acc1 - m1) * r1, 0.0).astype(COMPUTE_DTYPE).reshape(H, W, Cp)

    # conv2 + IN fused with the residual add and the output cast.
    acc2, m2, r2 = conv3x3_in(h, w2_ref)
    y = ((acc2 - m2) * r2).reshape(H, W, Cp)
    o_ref[0] = (x.astype(jnp.float32) + y).astype(o_ref.dtype)


def _vmem_limit_bytes():
    try:
        cap = pltpu.get_tpu_info().vmem_capacity_bytes
    except Exception:
        cap = 64 * 1024 * 1024
    # ~25% headroom for compiler scratch; v7x -> ~48 MiB, v5e/v6e -> ~96 MiB.
    return min(int(cap * 3 // 4), 100 * 1024 * 1024)


def residual_block(x_nchw, w1, b1, w2, b2):
    """x_nchw: (N, C, H, W); w*: (Cout, Cin, 3, 3) PyTorch layout; b*: (Cout,).

    Biases are accepted for API parity with the PyTorch module but unused:
    with affine=False InstanceNorm directly after each conv, a per-channel
    constant bias has no effect on the output.
    """
    del b1, b2
    N, C, H, W = x_nchw.shape
    assert H >= 2 and W >= 2, "reflect padding of 1 requires H, W >= 2"

    # NOTE: channel padding to 128 lanes makes tiny-C demos do Cp^2/C^2 extra
    # MXU work; at production CycleGAN C=256 the padding is a no-op.
    Cp = ((C + LANES - 1) // LANES) * LANES

    x = jnp.transpose(x_nchw, (0, 2, 3, 1))                  # NHWC
    if Cp != C:
        x = jnp.pad(x, ((0, 0), (0, 0), (0, 0), (0, Cp - C)))
    x = x.astype(COMPUTE_DTYPE)                              # bf16 kernel input

    def prep_w(w):
        wk = jnp.transpose(w, (2, 3, 1, 0))                  # (3, 3, Cin, Cout)
        if Cp != C:
            wk = jnp.pad(wk, ((0, 0), (0, 0), (0, Cp - C), (0, Cp - C)))
        # Fold the 3 kx taps into the K dim: (ky, kx*Cin, Cout) = (3, 3*Cp, Cp).
        return wk.reshape(3, 3 * Cp, Cp).astype(COMPUTE_DTYPE)

    w1_k, w2_k = prep_w(w1), prep_w(w2)

    out_dtype = x_nchw.dtype
    out_itemsize = jnp.dtype(out_dtype).itemsize
    flops = 2 * 2 * 9 * N * H * W * Cp * Cp                  # 2 convs, 9 taps, mul+add
    bytes_accessed = (N * H * W * Cp * (2 + out_itemsize)    # bf16 in + out
                      + 2 * 3 * 3 * Cp * Cp * 2)             # bf16 weights

    out = pl.pallas_call(
        residual_block_kernel,
        out_shape=jax.ShapeDtypeStruct((N, H, W, Cp), out_dtype),
        grid_spec=pltpu.PrefetchScalarGridSpec(
            num_scalar_prefetch=0,
            grid=(N,),                                       # one image per grid step
            in_specs=[
                pl.BlockSpec((1, H, W, Cp), lambda n: (n, 0, 0, 0)),
                # Grid-invariant weights: single-buffered to save VMEM.
                pl.BlockSpec((3, 3 * Cp, Cp), lambda n: (0, 0, 0),
                             pipeline_mode=pl.Buffered(1)),
                pl.BlockSpec((3, 3 * Cp, Cp), lambda n: (0, 0, 0),
                             pipeline_mode=pl.Buffered(1)),
            ],
            out_specs=pl.BlockSpec((1, H, W, Cp), lambda n: (n, 0, 0, 0)),
        ),
        compiler_params=pltpu.CompilerParams(
            dimension_semantics=("parallel",),
            vmem_limit_bytes=_vmem_limit_bytes(),
        ),
        cost_estimate=pl.CostEstimate(
            flops=flops, transcendentals=2 * N * Cp, bytes_accessed=bytes_accessed),
    )(x, w1_k, w2_k)

    if Cp != C:
        out = out[..., :C]
    return jnp.transpose(out, (0, 3, 1, 2))                  # back to NCHW


# ---------------- pure-JAX reference (for correctness check) ----------------
def ref_residual_block(x_nchw, w1, b1, w2, b2):
    def conv_in(x, w, b):
        N, C, H, W = x.shape
        xp = jnp.pad(x, ((0, 0), (0, 0), (1, 1), (1, 1)), mode="reflect")
        y = jnp.zeros((N, w.shape[0], H, W), jnp.float32)
        for ky in range(3):
            for kx in range(3):
                y = y + jnp.einsum("nchw,oc->nohw",
                                   xp[:, :, ky:ky + H, kx:kx + W], w[:, :, ky, kx])
        y = y + b.reshape(1, -1, 1, 1)
        m = y.mean(axis=(2, 3), keepdims=True)
        v = ((y - m) ** 2).mean(axis=(2, 3), keepdims=True)
        return (y - m) / jnp.sqrt(v + EPS)

    y = jnp.maximum(conv_in(x_nchw, w1, b1), 0.0)
    y = conv_in(y, w2, b2)
    return x_nchw + y


if __name__ == "__main__":
    key = jax.random.PRNGKey(0)
    kx, k1, kb1, k2, kb2 = jax.random.split(key, 5)
    N, C, H, W = 2, 4, 16, 16

    x = jax.random.normal(kx, (N, C, H, W), jnp.float32)
    bound = 1.0 / np.sqrt(C * 3 * 3)                 # PyTorch conv init bound
    w1 = jax.random.uniform(k1, (C, C, 3, 3), jnp.float32, -bound, bound)
    b1 = jax.random.uniform(kb1, (C,), jnp.float32, -bound, bound)
    w2 = jax.random.uniform(k2, (C, C, 3, 3), jnp.float32, -bound, bound)
    b2 = jax.random.uniform(kb2, (C,), jnp.float32, -bound, bound)

    out = jax.block_until_ready(jax.jit(residual_block)(x, w1, b1, w2, b2))
    ref = ref_residual_block(x, w1, b1, w2, b2)
    # Tolerance reflects intentional bf16 input / bf16 MXU operands (f32 accum).
    np.testing.assert_allclose(np.asarray(out), np.asarray(ref), rtol=5e-2, atol=5e-2)
    print("KERNEL_OK")
</pallas_src>

<mosaic_0001>
module attributes {stable_mosaic.version = 11 : i64} {
  func.func @residual_block_kernel(%arg0: i32, %arg1: memref<1x16x16x128xbf16, #tpu.memory_space<vmem>>, %arg2: memref<3x384x128xbf16, #tpu.memory_space<vmem>>, %arg3: memref<3x384x128xbf16, #tpu.memory_space<vmem>>, %arg4: memref<1x16x16x128xf32, #tpu.memory_space<vmem>>) attributes {dimension_semantics = [#tpu.dimension_semantics<parallel>], iteration_bounds = array<i64: 2>, scalar_prefetch = 0 : i64, scratch_operands = 0 : i64, tpu.core_type = #tpu.core_type<tc>, window_params = [{transform_indices = @transform_0, window_bounds = array<i64: 1, 16, 16, 128>}, {pipeline_mode = #tpu.pipeline_mode<synchronous>, transform_indices = @transform_1, window_bounds = array<i64: 3, 384, 128>}, {pipeline_mode = #tpu.pipeline_mode<synchronous>, transform_indices = @transform_2, window_bounds = array<i64: 3, 384, 128>}, {transform_indices = @transform_3, window_bounds = array<i64: 1, 16, 16, 128>}]} {
    %c0 = arith.constant 0 : index
    %c0_0 = arith.constant 0 : index
    %c0_1 = arith.constant 0 : index
    %c0_2 = arith.constant 0 : index
    %0 = vector.load %arg1[%c0, %c0_0, %c0_1, %c0_2] : memref<1x16x16x128xbf16, #tpu.memory_space<vmem>>, vector<1x16x16x128xbf16>
    %1 = vector.shape_cast %0 : vector<1x16x16x128xbf16> to vector<16x16x128xbf16>
    %2 = vector.extract_strided_slice %1 {offsets = [0, 1, 0], sizes = [16, 1, 128], strides = [1, 1, 1]} : vector<16x16x128xbf16> to vector<16x1x128xbf16>
    %3 = vector.extract_strided_slice %1 {offsets = [0, 0, 0], sizes = [16, 15, 128], strides = [1, 1, 1]} : vector<16x16x128xbf16> to vector<16x15x128xbf16>
    %4 = tpu.concatenate %2, %3 in 1 : vector<16x1x128xbf16>, vector<16x15x128xbf16> -> vector<16x16x128xbf16>
    %5 = vector.extract_strided_slice %1 {offsets = [0, 1, 0], sizes = [16, 15, 128], strides = [1, 1, 1]} : vector<16x16x128xbf16> to vector<16x15x128xbf16>
    %6 = vector.extract_strided_slice %1 {offsets = [0, 14, 0], sizes = [16, 1, 128], strides = [1, 1, 1]} : vector<16x16x128xbf16> to vector<16x1x128xbf16>
    %7 = tpu.concatenate %5, %6 in 1 : vector<16x15x128xbf16>, vector<16x1x128xbf16> -> vector<16x16x128xbf16>
    %8 = tpu.concatenate %4, %1, %7 in 2 : vector<16x16x128xbf16>, vector<16x16x128xbf16>, vector<16x16x128xbf16> -> vector<16x16x384xbf16>
    %9 = vector.shape_cast %8 : vector<16x16x384xbf16> to vector<256x384xbf16>
    %c0_3 = arith.constant 0 : index
    %c0_4 = arith.constant 0 : index
    %c0_5 = arith.constant 0 : index
    %10 = vector.load %arg2[%c0_3, %c0_4, %c0_5] : memref<3x384x128xbf16, #tpu.memory_space<vmem>>, vector<1x384x128xbf16>
    %11 = vector.shape_cast %10 : vector<1x384x128xbf16> to vector<384x128xbf16>
    %cst = arith.constant dense<0.000000e+00> : vector<256x128xf32>
    %12 = tpu.matmul %9, %11, %cst {dimension_numbers = #tpu.dot_dimension_numbers<[1], [0], [0], [1], [0, 0, 1, 1], [], []>} : vector<256x384xbf16>, vector<384x128xbf16>, vector<256x128xf32> -> vector<256x128xf32>
    %13 = vector.shape_cast %12 : vector<256x128xf32> to vector<16x16x128xf32>
    %c1 = arith.constant 1 : index
    %c0_6 = arith.constant 0 : index
    %c0_7 = arith.constant 0 : index
    %14 = vector.load %arg2[%c1, %c0_6, %c0_7] : memref<3x384x128xbf16, #tpu.memory_space<vmem>>, vector<1x384x128xbf16>
    %15 = vector.shape_cast %14 : vector<1x384x128xbf16> to vector<384x128xbf16>
    %cst_8 = arith.constant dense<0.000000e+00> : vector<256x128xf32>
    %16 = tpu.matmul %9, %15, %cst_8 {dimension_numbers = #tpu.dot_dimension_numbers<[1], [0], [0], [1], [0, 0, 1, 1], [], []>} : vector<256x384xbf16>, vector<384x128xbf16>, vector<256x128xf32> -> vector<256x128xf32>
    %17 = vector.shape_cast %16 : vector<256x128xf32> to vector<16x16x128xf32>
    %c2 = arith.constant 2 : index
    %c0_9 = arith.constant 0 : index
    %c0_10 = arith.constant 0 : index
    %18 = vector.load %arg2[%c2, %c0_9, %c0_10] : memref<3x384x128xbf16, #tpu.memory_space<vmem>>, vector<1x384x128xbf16>
    %19 = vector.shape_cast %18 : vector<1x384x128xbf16> to vector<384x128xbf16>
    %cst_11 = arith.constant dense<0.000000e+00> : vector<256x128xf32>
    %20 = tpu.matmul %9, %19, %cst_11 {dimension_numbers = #tpu.dot_dimension_numbers<[1], [0], [0], [1], [0, 0, 1, 1], [], []>} : vector<256x384xbf16>, vector<384x128xbf16>, vector<256x128xf32> -> vector<256x128xf32>
    %21 = vector.shape_cast %20 : vector<256x128xf32> to vector<16x16x128xf32>
    %22 = vector.extract_strided_slice %13 {offsets = [1, 0, 0], sizes = [1, 16, 128], strides = [1, 1, 1]} : vector<16x16x128xf32> to vector<1x16x128xf32>
    %23 = vector.extract_strided_slice %13 {offsets = [0, 0, 0], sizes = [15, 16, 128], strides = [1, 1, 1]} : vector<16x16x128xf32> to vector<15x16x128xf32>
    %24 = tpu.concatenate %22, %23 in 0 : vector<1x16x128xf32>, vector<15x16x128xf32> -> vector<16x16x128xf32>
    %25 = vector.extract_strided_slice %21 {offsets = [1, 0, 0], sizes = [15, 16, 128], strides = [1, 1, 1]} : vector<16x16x128xf32> to vector<15x16x128xf32>
    %26 = vector.extract_strided_slice %21 {offsets = [14, 0, 0], sizes = [1, 16, 128], strides = [1, 1, 1]} : vector<16x16x128xf32> to vector<1x16x128xf32>
    %27 = tpu.concatenate %25, %26 in 0 : vector<15x16x128xf32>, vector<1x16x128xf32> -> vector<16x16x128xf32>
    %28 = arith.addf %24, %17 : vector<16x16x128xf32>
    %29 = arith.addf %28, %27 : vector<16x16x128xf32>
    %30 = vector.shape_cast %29 : vector<16x16x128xf32> to vector<256x128xf32>
    %cst_12 = arith.constant dense<0.000000e+00> : vector<128xf32>
    %31 = vector.multi_reduction <add>, %30, %cst_12 [0] : vector<256x128xf32> to vector<128xf32>
    %32 = vector.shape_cast %31 : vector<128xf32> to vector<1x128xf32>
    %cst_13 = arith.constant 3.906250e-03 : f32
    %33 = vector.broadcast %cst_13 : f32 to vector<1x128xf32>
    %34 = arith.mulf %32, %33 : vector<1x128xf32>
    %35 = arith.mulf %30, %30 : vector<256x128xf32>
    %cst_14 = arith.constant dense<0.000000e+00> : vector<128xf32>
    %36 = vector.multi_reduction <add>, %35, %cst_14 [0] : vector<256x128xf32> to vector<128xf32>
    %37 = vector.shape_cast %36 : vector<128xf32> to vector<1x128xf32>
    %cst_15 = arith.constant 3.906250e-03 : f32
    %38 = vector.broadcast %cst_15 : f32 to vector<1x128xf32>
    %39 = arith.mulf %37, %38 : vector<1x128xf32>
    %40 = arith.mulf %34, %34 : vector<1x128xf32>
    %41 = arith.subf %39, %40 : vector<1x128xf32>
    %cst_16 = arith.constant 9.99999974E-6 : f32
    %42 = vector.broadcast %cst_16 : f32 to vector<1x128xf32>
    %43 = arith.addf %41, %42 : vector<1x128xf32>
    %44 = math.rsqrt %43 : vector<1x128xf32>
    %45 = vector.broadcast %34 : vector<1x128xf32> to vector<256x128xf32>
    %46 = arith.subf %30, %45 : vector<256x128xf32>
    %47 = vector.broadcast %44 : vector<1x128xf32> to vector<256x128xf32>
    %48 = arith.mulf %46, %47 : vector<256x128xf32>
    %cst_17 = arith.constant 0.000000e+00 : f32
    %49 = vector.broadcast %cst_17 : f32 to vector<256x128xf32>
    %50 = arith.maximumf %48, %49 : vector<256x128xf32>
    %51 = arith.truncf %50 : vector<256x128xf32> to vector<256x128xbf16>
    %52 = vector.shape_cast %51 : vector<256x128xbf16> to vector<16x16x128xbf16>
    %53 = vector.extract_strided_slice %52 {offsets = [0, 1, 0], sizes = [16, 1, 128], strides = [1, 1, 1]} : vector<16x16x128xbf16> to vector<16x1x128xbf16>
    %54 = vector.extract_strided_slice %52 {offsets = [0, 0, 0], sizes = [16, 15, 128], strides = [1, 1, 1]} : vector<16x16x128xbf16> to vector<16x15x128xbf16>
    %55 = tpu.concatenate %53, %54 in 1 : vector<16x1x128xbf16>, vector<16x15x128xbf16> -> vector<16x16x128xbf16>
    %56 = vector.extract_strided_slice %52 {offsets = [0, 1, 0], sizes = [16, 15, 128], strides = [1, 1, 1]} : vector<16x16x128xbf16> to vector<16x15x128xbf16>
    %57 = vector.extract_strided_slice %52 {offsets = [0, 14, 0], sizes = [16, 1, 128], strides = [1, 1, 1]} : vector<16x16x128xbf16> to vector<16x1x128xbf16>
    %58 = tpu.concatenate %56, %57 in 1 : vector<16x15x128xbf16>, vector<16x1x128xbf16> -> vector<16x16x128xbf16>
    %59 = tpu.concatenate %55, %52, %58 in 2 : vector<16x16x128xbf16>, vector<16x16x128xbf16>, vector<16x16x128xbf16> -> vector<16x16x384xbf16>
    %60 = vector.shape_cast %59 : vector<16x16x384xbf16> to vector<256x384xbf16>
    %c0_18 = arith.constant 0 : index
    %c0_19 = arith.constant 0 : index
    %c0_20 = arith.constant 0 : index
    %61 = vector.load %arg3[%c0_18, %c0_19, %c0_20] : memref<3x384x128xbf16, #tpu.memory_space<vmem>>, vector<1x384x128xbf16>
    %62 = vector.shape_cast %61 : vector<1x384x128xbf16> to vector<384x128xbf16>
    %cst_21 = arith.constant dense<0.000000e+00> : vector<256x128xf32>
    %63 = tpu.matmul %60, %62, %cst_21 {dimension_numbers = #tpu.dot_dimension_numbers<[1], [0], [0], [1], [0, 0, 1, 1], [], []>} : vector<256x384xbf16>, vector<384x128xbf16>, vector<256x128xf32> -> vector<256x128xf32>
    %64 = vector.shape_cast %63 : vector<256x128xf32> to vector<16x16x128xf32>
    %c1_22 = arith.constant 1 : index
    %c0_23 = arith.constant 0 : index
    %c0_24 = arith.constant 0 : index
    %65 = vector.load %arg3[%c1_22, %c0_23, %c0_24] : memref<3x384x128xbf16, #tpu.memory_space<vmem>>, vector<1x384x128xbf16>
    %66 = vector.shape_cast %65 : vector<1x384x128xbf16> to vector<384x128xbf16>
    %cst_25 = arith.constant dense<0.000000e+00> : vector<256x128xf32>
    %67 = tpu.matmul %60, %66, %cst_25 {dimension_numbers = #tpu.dot_dimension_numbers<[1], [0], [0], [1], [0, 0, 1, 1], [], []>} : vector<256x384xbf16>, vector<384x128xbf16>, vector<256x128xf32> -> vector<256x128xf32>
    %68 = vector.shape_cast %67 : vector<256x128xf32> to vector<16x16x128xf32>
    %c2_26 = arith.constant 2 : index
    %c0_27 = arith.constant 0 : index
    %c0_28 = arith.constant 0 : index
    %69 = vector.load %arg3[%c2_26, %c0_27, %c0_28] : memref<3x384x128xbf16, #tpu.memory_space<vmem>>, vector<1x384x128xbf16>
    %70 = vector.shape_cast %69 : vector<1x384x128xbf16> to vector<384x128xbf16>
    %cst_29 = arith.constant dense<0.000000e+00> : vector<256x128xf32>
    %71 = tpu.matmul %60, %70, %cst_29 {dimension_numbers = #tpu.dot_dimension_numbers<[1], [0], [0], [1], [0, 0, 1, 1], [], []>} : vector<256x384xbf16>, vector<384x128xbf16>, vector<256x128xf32> -> vector<256x128xf32>
    %72 = vector.shape_cast %71 : vector<256x128xf32> to vector<16x16x128xf32>
    %73 = vector.extract_strided_slice %64 {offsets = [1, 0, 0], sizes = [1, 16, 128], strides = [1, 1, 1]} : vector<16x16x128xf32> to vector<1x16x128xf32>
    %74 = vector.extract_strided_slice %64 {offsets = [0, 0, 0], sizes = [15, 16, 128], strides = [1, 1, 1]} : vector<16x16x128xf32> to vector<15x16x128xf32>
    %75 = tpu.concatenate %73, %74 in 0 : vector<1x16x128xf32>, vector<15x16x128xf32> -> vector<16x16x128xf32>
    %76 = vector.extract_strided_slice %72 {offsets = [1, 0, 0], sizes = [15, 16, 128], strides = [1, 1, 1]} : vector<16x16x128xf32> to vector<15x16x128xf32>
    %77 = vector.extract_strided_slice %72 {offsets = [14, 0, 0], sizes = [1, 16, 128], strides = [1, 1, 1]} : vector<16x16x128xf32> to vector<1x16x128xf32>
    %78 = tpu.concatenate %76, %77 in 0 : vector<15x16x128xf32>, vector<1x16x128xf32> -> vector<16x16x128xf32>
    %79 = arith.addf %75, %68 : vector<16x16x128xf32>
    %80 = arith.addf %79, %78 : vector<16x16x128xf32>
    %81 = vector.shape_cast %80 : vector<16x16x128xf32> to vector<256x128xf32>
    %cst_30 = arith.constant dense<0.000000e+00> : vector<128xf32>
    %82 = vector.multi_reduction <add>, %81, %cst_30 [0] : vector<256x128xf32> to vector<128xf32>
    %83 = vector.shape_cast %82 : vector<128xf32> to vector<1x128xf32>
    %cst_31 = arith.constant 3.906250e-03 : f32
    %84 = vector.broadcast %cst_31 : f32 to vector<1x128xf32>
    %85 = arith.mulf %83, %84 : vector<1x128xf32>
    %86 = arith.mulf %81, %81 : vector<256x128xf32>
    %cst_32 = arith.constant dense<0.000000e+00> : vector<128xf32>
    %87 = vector.multi_reduction <add>, %86, %cst_32 [0] : vector<256x128xf32> to vector<128xf32>
    %88 = vector.shape_cast %87 : vector<128xf32> to vector<1x128xf32>
    %cst_33 = arith.constant 3.906250e-03 : f32
    %89 = vector.broadcast %cst_33 : f32 to vector<1x128xf32>
    %90 = arith.mulf %88, %89 : vector<1x128xf32>
    %91 = arith.mulf %85, %85 : vector<1x128xf32>
    %92 = arith.subf %90, %91 : vector<1x128xf32>
    %cst_34 = arith.constant 9.99999974E-6 : f32
    %93 = vector.broadcast %cst_34 : f32 to vector<1x128xf32>
    %94 = arith.addf %92, %93 : vector<1x128xf32>
    %95 = math.rsqrt %94 : vector<1x128xf32>
    %96 = vector.broadcast %85 : vector<1x128xf32> to vector<256x128xf32>
    %97 = arith.subf %81, %96 : vector<256x128xf32>
    %98 = vector.broadcast %95 : vector<1x128xf32> to vector<256x128xf32>
    %99 = arith.mulf %97, %98 : vector<256x128xf32>
    %100 = vector.shape_cast %99 : vector<256x128xf32> to vector<16x16x128xf32>
    %101 = arith.extf %1 : vector<16x16x128xbf16> to vector<16x16x128xf32>
    %102 = arith.addf %101, %100 : vector<16x16x128xf32>
    %c0_35 = arith.constant 0 : index
    %c0_36 = arith.constant 0 : index
    %c0_37 = arith.constant 0 : index
    %c0_38 = arith.constant 0 : index
    %103 = vector.load %arg4[%c0_35, %c0_36, %c0_37, %c0_38] : memref<1x16x16x128xf32, #tpu.memory_space<vmem>>, vector<1x16x16x128xf32>
    %104 = vector.shape_cast %103 : vector<1x16x16x128xf32> to vector<16x16x128xf32>
    %105 = vector.shape_cast %102 : vector<16x16x128xf32> to vector<1x16x16x128xf32>
    tpu.vector_store %arg4[%c0_35, %c0_36, %c0_37, %c0_38], %105 {strides = array<i32>} : memref<1x16x16x128xf32, #tpu.memory_space<vmem>>, vector<1x16x16x128xf32>,
    return
  }
  func.func @transform_0(%arg0: i32) -> (i32, i32, i32, i32) {
    %c0_i32 = arith.constant 0 : i32
    %c0_i32_0 = arith.constant 0 : i32
    %c0_i32_1 = arith.constant 0 : i32
    %c0_i32_2 = arith.constant 0 : i32
    return %arg0, %c0_i32, %c0_i32_0, %c0_i32_1 : i32, i32, i32, i32
  }
  func.func @transform_1(%arg0: i32) -> (i32, i32, i32) {
    %c0_i32 = arith.constant 0 : i32
    %c0_i32_0 = arith.constant 0 : i32
    %c0_i32_1 = arith.constant 0 : i32
    %c0_i32_2 = arith.constant 0 : i32
    return %c0_i32, %c0_i32_0, %c0_i32_1 : i32, i32, i32
  }
  func.func @transform_2(%arg0: i32) -> (i32, i32, i32) {
    %c0_i32 = arith.constant 0 : i32
    %c0_i32_0 = arith.constant 0 : i32
    %c0_i32_1 = arith.constant 0 : i32
    %c0_i32_2 = arith.constant 0 : i32
    return %c0_i32, %c0_i32_0, %c0_i32_1 : i32, i32, i32
  }
  func.func @transform_3(%arg0: i32) -> (i32, i32, i32, i32) {
    %c0_i32 = arith.constant 0 : i32
    %c0_i32_0 = arith.constant 0 : i32
    %c0_i32_1 = arith.constant 0 : i32
    %c0_i32_2 = arith.constant 0 : i32
    return %arg0, %c0_i32, %c0_i32_0, %c0_i32_1 : i32, i32, i32, i32
  }
}

</mosaic_0001>

<llo_original>
// kernel: residual_block.1
$region0: #{residual_block.1}
  #allocation0 [shape = 'u32[]', space=smem, size = 0x4, offset = 0x4, fixed_abs, tag = 'smem constant byte address 0x4 - core index']
  #allocation1 [shape = 'u32[144,128]{1,0:T(1,128)}', space=vmem, size = 0x12000, scoped, tag = 'internal scratch']
  %s0 = inlined_call_operand.vmem [shape: bf16[2,16,16,128], index: 0, kind: input, shape index: {}]
  %s1 = inlined_call_operand.vmem [shape: bf16[3,384,128], index: 1, kind: input, shape index: {}]
  %s2 = inlined_call_operand.vmem [shape: bf16[3,384,128], index: 2, kind: input, shape index: {}]
  %s3 = inlined_call_operand.vmem [shape: f32[2,16,16,128], index: 3, kind: output, shape index: {}]
  %s4 = sld [smem:[#allocation0]]
  $region45: #{residual_block.1} parent=0
    _
  %s6 = ssub.s32 1, %s4
  %s7 = scalar_select 0, %s6, %s4
  loop: start=0, step=1, limit=4
  $region2: #{residual_block.1} parent=0 // loop_pre_header
    _
  $region3: #{residual_block.1} parent=0 // loop_header
    %s9 = sphi 0, %s13
    %p10 = scmp.ge.s32.totalorder %s9, 4
    %s19 = sphi 0, %s21
    %s22 = sphi 0, %s19
    %s23 = sphi 0, %s22
    %s39 = sphi 0, %s23
    %s43 = sphi 0, %s43
    %s45 = sphi 0, %s43
    %s46 = sphi 0, %s45
    %s60 = sphi 0, %s46
    %s64 = sphi 0, %s64
    %s66 = sphi 0, %s64
    %s67 = sphi 0, %s66
    %s81 = sphi 0, %s67
    %s87 = sphi 0, %s89
    %s90 = sphi 0, %s87
    %s91 = sphi 0, %s90
    %s107 = sphi 0, %s91
  $region4: #{residual_block.1} parent=0 // loop_header_branch
    %12 = sbr.rel (%p10) target = $region8
  $region5: #{residual_block.1} parent=0 // loop_body
    %s14 = ssub.s32 %s9, 1
    %s15 = ssub.s32 %s9, 2
    %s16 = sadd.s32 %s9, 1
    %s17 = ssub.s32 %s9, %s16
    %p18 = scmp.eq.s32.totalorder %s17, 0
    %s20 = sadd.s32 %s19, 1
    %s21 = scalar_select %p18, %s19, %s20
    %p24 = pneg %p18
    %p25 = scmp.eq.s32.totalorder %s9, 1
    %p26 = por %p24, %p25
    %p27 = scmp.ne.s32.totalorder %s19, %s22
    %p28 = scmp.eq.s32.totalorder %s9, 0
    %p29 = por %p27, %p28
    %p30 = scmp.ne.s32.totalorder %s19, %s22
    %p31 = scmp.eq.s32.totalorder %s14, 1
    %p32 = por %p30, %p31
    %p33 = scmp.ne.s32.totalorder %s22, %s23
    %p34 = scmp.eq.s32.totalorder %s14, 0
    %p35 = por %p33, %p34
    %p36 = scmp.ne.s32.totalorder %s22, %s23
    %p37 = scmp.eq.s32.totalorder %s15, 1
    %p38 = por %p36, %p37
    %p40 = scmp.ne.s32.totalorder %s23, %s39
    %p41 = scmp.eq.s32.totalorder %s15, 0
    %p42 = por %p40, %p41
    %s44 = sadd.s32 %s43, 1
    %p47 = scmp.eq.s32.totalorder %s9, 1
    %p48 = scmp.ne.s32.totalorder %s43, %s45
    %p49 = scmp.eq.s32.totalorder %s9, 0
    %p50 = por %p48, %p49
    %p51 = scmp.ne.s32.totalorder %s43, %s45
    %p52 = scmp.eq.s32.totalorder %s14, 1
    %p53 = por %p51, %p52
    %p54 = scmp.ne.s32.totalorder %s45, %s46
    %p55 = scmp.eq.s32.totalorder %s14, 0
    %p56 = por %p54, %p55
    %p57 = scmp.ne.s32.totalorder %s45, %s46
    %p58 = scmp.eq.s32.totalorder %s15, 1
    %p59 = por %p57, %p58
    %p61 = scmp.ne.s32.totalorder %s46, %s60
    %p62 = scmp.eq.s32.totalorder %s15, 0
    %p63 = por %p61, %p62
    %s65 = sadd.s32 %s64, 1
    %p68 = scmp.eq.s32.totalorder %s9, 1
    %p69 = scmp.ne.s32.totalorder %s64, %s66
    %p70 = scmp.eq.s32.totalorder %s9, 0
    %p71 = por %p69, %p70
    %p72 = scmp.ne.s32.totalorder %s64, %s66
    %p73 = scmp.eq.s32.totalorder %s14, 1
    %p74 = por %p72, %p73
    %p75 = scmp.ne.s32.totalorder %s66, %s67
    %p76 = scmp.eq.s32.totalorder %s14, 0
    %p77 = por %p75, %p76
    %p78 = scmp.ne.s32.totalorder %s66, %s67
    %p79 = scmp.eq.s32.totalorder %s15, 1
    %p80 = por %p78, %p79
    %p82 = scmp.ne.s32.totalorder %s67, %s81
    %p83 = scmp.eq.s32.totalorder %s15, 0
    %p84 = por %p82, %p83
    %s85 = ssub.s32 %s9, %s16
    %p86 = scmp.eq.s32.totalorder %s85, 0
    %s88 = sadd.s32 %s87, 1
    %s89 = scalar_select %p86, %s87, %s88
    %p92 = pneg %p86
    %p93 = scmp.eq.s32.totalorder %s9, 1
    %p94 = por %p92, %p93
    %p95 = scmp.ne.s32.totalorder %s87, %s90
    %p96 = scmp.eq.s32.totalorder %s9, 0
    %p97 = por %p95, %p96
    %p98 = scmp.ne.s32.totalorder %s87, %s90
    %p99 = scmp.eq.s32.totalorder %s14, 1
    %p100 = por %p98, %p99
    %p101 = scmp.ne.s32.totalorder %s90, %s91
    %p102 = scmp.eq.s32.totalorder %s14, 0
    %p103 = por %p101, %p102
    %p104 = scmp.ne.s32.totalorder %s90, %s91
    %p105 = scmp.eq.s32.totalorder %s15, 1
    %p106 = por %p104, %p105
    %p108 = scmp.ne.s32.totalorder %s91, %s107
    %p109 = scmp.eq.s32.totalorder %s15, 0
    %p110 = por %p108, %p109
    %p111 = scmp.le.s32.totalorder 1, %s9
    %p112 = scmp.lt.s32.totalorder %s9, 3
    %p113 = pnand %p111, %p112
    %p114 = pneg %p113
    // Predicated region
    $region9: #{residual_block.1} parent=5 // pred_check
      _
    $region10: #{residual_block.1} parent=5 // pred_check_branch
      %116 = sbr.rel (%p113) target = $region12
    $region11: #{residual_block.1} parent=5 // pred_region
      %s117 = ssub.s32 %s9, 1
      // Predicated region
      $region13: #{residual_block.1} parent=11 // pred_check
        %p118 = pneg %p56
      $region14: #{residual_block.1} parent=11 // pred_check_branch
        %120 = sbr.rel (%p118) target = $region16
      $region15: #{residual_block.1} parent=11 // pred_region
        _
      $region16: #{residual_block.1} parent=11 // pred_fallthru
        _
      // Predicated region
      $region17: #{residual_block.1} parent=11 // pred_check
        %p121 = pneg %p77
      $region18: #{residual_block.1} parent=11 // pred_check_branch
        %123 = sbr.rel (%p121) target = $region20
      $region19: #{residual_block.1} parent=11 // pred_region
        _
      $region20: #{residual_block.1} parent=11 // pred_fallthru
        _
    $region12: #{residual_block.1} parent=5 // pred_fallthru
      _
    %p124 = scmp.lt.s32.totalorder %s9, 2
    // Predicated region
    $region21: #{residual_block.1} parent=5 // pred_check
      %p125 = pneg %p124
    $region22: #{residual_block.1} parent=5 // pred_check_branch
      %127 = sbr.rel (%p125) target = $region24
    $region23: #{residual_block.1} parent=5 // pred_region
      // Predicated region
      $region25: #{residual_block.1} parent=23 // pred_check
        %p128 = pneg %p29
      $region26: #{residual_block.1} parent=23 // pred_check_branch
        %130 = sbr.rel (%p128) target = $region28
      $region27: #{residual_block.1} parent=23 // pred_region
        %p131 = scmp.lt.s32.totalorder %s9, 1
        %s132 = scalar_select %p131, %s9, 1
        %s133 = smul.addr %s132, 32
        %s134 = smul.addr %s133, 4
        %s135 = scalar_lea.vmem %s0, %s134
      $region28: #{residual_block.1} parent=23 // pred_fallthru
        _
    $region24: #{residual_block.1} parent=5 // pred_fallthru
      _
    %p136 = scmp.le.s32.totalorder 1, %s9
    %p137 = scmp.lt.s32.totalorder %s9, 3
    %p138 = pnand %p136, %p137
    %p139 = pneg %p138
    // Predicated region
    $region29: #{residual_block.1} parent=5 // pred_check
      _
    $region30: #{residual_block.1} parent=5 // pred_check_branch
      %141 = sbr.rel (%p138) target = $region32
    $region31: #{residual_block.1} parent=5 // pred_region
      %s142 = ssub.s32 %s9, 1
      %p143 = scmp.lt.s32.totalorder %s14, 1
      %s144 = scalar_select %p143, %s14, 1
      %s145 = smul.addr %s144, 32
      %s146 = smul.addr %s145, 4
      %s147 = scalar_lea.vmem %s0, %s146
      %p148 = pneg %p35
      %p149 = pneg %p32
      %p150 = pneg %p56
      %p151 = pneg %p53
      %p152 = pneg %p77
      %p153 = pneg %p74
      %p154 = pneg %p103
      %p155 = pneg %p100
      %p156 = scmp.lt.s32.totalorder %s14, 1
      %s157 = scalar_select %p156, %s14, 1
      %s158 = smul.addr %s157, 32
      %s159 = smul.addr %s158, 8
      %s160 = scalar_lea.vmem %s3, %s159
      %p161 = scmp.lt.s32.totalorder %s14, 1
      %s162 = scalar_select %p161, %s14, 1
      %s163 = smul.addr %s162, 32
      %s164 = smul.addr %s163, 4
      %s165 = scalar_lea.vmem %s0, %s164
      %p166 = scmp.lt.s32.totalorder %s14, 1
      %s167 = scalar_select %p166, %s14, 1
      %s168 = smul.addr %s167, 32
      %s169 = smul.addr %s168, 8
      %s170 = scalar_lea.vmem %s3, %s169
      %v172 = vld [vmem:[%s165] sm:$0xf]
      %v173 = vld [vmem:[%s165 + $0x4] sm:$0xf]
      %v174 = vld [vmem:[%s165 + $0x8] sm:$0xf]
      %v175 = vld [vmem:[%s165 + $0xc] sm:$0xf]
      %v176 = vld [vmem:[%s165 + $0x10] sm:$0xf]
      %v177 = vld [vmem:[%s165 + $0x14] sm:$0xf]
      %v178 = vld [vmem:[%s165 + $0x18] sm:$0xf]
      %v179 = vld [vmem:[%s165 + $0x1c] sm:$0xf]
      %v180 = vld [vmem:[%s165 + $0x20] sm:$0xf]
      %v181 = vld [vmem:[%s165 + $0x24] sm:$0xf]
      %v182 = vld [vmem:[%s165 + $0x28] sm:$0xf]
      %v183 = vld [vmem:[%s165 + $0x2c] sm:$0xf]
      %v184 = vld [vmem:[%s165 + $0x30] sm:$0xf]
      %v185 = vld [vmem:[%s165 + $0x34] sm:$0xf]
      %v186 = vld [vmem:[%s165 + $0x38] sm:$0xf]
      %v187 = vld [vmem:[%s165 + $0x3c] sm:$0xf]
      %v188 = vld [vmem:[%s165 + $0x40] sm:$0xf]
      %v189 = vld [vmem:[%s165 + $0x44] sm:$0xf]
      %v190 = vld [vmem:[%s165 + $0x48] sm:$0xf]
      %v191 = vld [vmem:[%s165 + $0x4c] sm:$0xf]
      %v192 = vld [vmem:[%s165 + $0x50] sm:$0xf]
      %v193 = vld [vmem:[%s165 + $0x54] sm:$0xf]
      %v194 = vld [vmem:[%s165 + $0x58] sm:$0xf]
      %v195 = vld [vmem:[%s165 + $0x5c] sm:$0xf]
      %v196 = vld [vmem:[%s165 + $0x60] sm:$0xf]
      %v197 = vld [vmem:[%s165 + $0x64] sm:$0xf]
      %v198 = vld [vmem:[%s165 + $0x68] sm:$0xf]
      %v199 = vld [vmem:[%s165 + $0x6c] sm:$0xf]
      %v200 = vld [vmem:[%s165 + $0x70] sm:$0xf]
      %v201 = vld [vmem:[%s165 + $0x74] sm:$0xf]
      %v202 = vld [vmem:[%s165 + $0x78] sm:$0xf]
      %v203 = vld [vmem:[%s165 + $0x7c] sm:$0xf]
      %v220 = vunpack.c.l.b16 %v172
      %v221 = vunpack.c.l.b16 %v174
      %v222 = vunpack.c.l.b16 %v176
      %v223 = vunpack.c.l.b16 %v178
      %v224 = vunpack.c.l.b16 %v180
      %v225 = vunpack.c.l.b16 %v182
      %v226 = vunpack.c.l.b16 %v184
      %v227 = vunpack.c.l.b16 %v186
      %v228 = vunpack.c.l.b16 %v188
      %v229 = vunpack.c.l.b16 %v190
      %v230 = vunpack.c.l.b16 %v192
      %v231 = vunpack.c.l.b16 %v194
      %v232 = vunpack.c.l.b16 %v196
      %v233 = vunpack.c.l.b16 %v198
      %v234 = vunpack.c.l.b16 %v200
      %v235 = vunpack.c.l.b16 %v202
      %v236 = vpack.c.b16 %v220, %v220
      %v237 = vpack.c.b16 %v221, %v221
      %v238 = vpack.c.b16 %v222, %v222
      %v239 = vpack.c.b16 %v223, %v223
      %v240 = vpack.c.b16 %v224, %v224
      %v241 = vpack.c.b16 %v225, %v225
      %v242 = vpack.c.b16 %v226, %v226
      %v243 = vpack.c.b16 %v227, %v227
      %v244 = vpack.c.b16 %v228, %v228
      %v245 = vpack.c.b16 %v229, %v229
      %v246 = vpack.c.b16 %v230, %v230
      %v247 = vpack.c.b16 %v231, %v231
      %v248 = vpack.c.b16 %v232, %v232
      %v249 = vpack.c.b16 %v233, %v233
      %v250 = vpack.c.b16 %v234, %v234
      %v251 = vpack.c.b16 %v235, %v235
      %v253 = vshrl.u32 %v236, 16
      %v256 = vshrl.u32 %v237, 16
      %v259 = vshrl.u32 %v238, 16
      %v262 = vshrl.u32 %v239, 16
      %v265 = vshrl.u32 %v240, 16
      %v268 = vshrl.u32 %v241, 16
      %v271 = vshrl.u32 %v242, 16
      %v274 = vshrl.u32 %v243, 16
      %v277 = vshrl.u32 %v244, 16
      %v280 = vshrl.u32 %v245, 16
      %v283 = vshrl.u32 %v246, 16
      %v286 = vshrl.u32 %v247, 16
      %v289 = vshrl.u32 %v248, 16
      %v292 = vshrl.u32 %v249, 16
      %v295 = vshrl.u32 %v250, 16
      %v298 = vshrl.u32 %v251, 16
      %v332 = vunpack.c.l.b16 %v173
      %v333 = vunpack.c.l.b16 %v175
      %v334 = vunpack.c.l.b16 %v177
      %v335 = vunpack.c.l.b16 %v179
      %v336 = vunpack.c.l.b16 %v181
      %v337 = vunpack.c.l.b16 %v183
      %v338 = vunpack.c.l.b16 %v185
      %v339 = vunpack.c.l.b16 %v187
      %v340 = vunpack.c.l.b16 %v189
      %v341 = vunpack.c.l.b16 %v191
      %v342 = vunpack.c.l.b16 %v193
      %v343 = vunpack.c.l.b16 %v195
      %v344 = vunpack.c.l.b16 %v197
      %v345 = vunpack.c.l.b16 %v199
      %v346 = vunpack.c.l.b16 %v201
      %v347 = vunpack.c.l.b16 %v203
      %v348 = vpack.c.b16 %v332, %v220
      %v349 = vpack.c.b16 %v333, %v221
      %v350 = vpack.c.b16 %v334, %v222
      %v351 = vpack.c.b16 %v335, %v223
      %v352 = vpack.c.b16 %v336, %v224
      %v353 = vpack.c.b16 %v337, %v225
      %v354 = vpack.c.b16 %v338, %v226
      %v355 = vpack.c.b16 %v339, %v227
      %v356 = vpack.c.b16 %v340, %v228
      %v357 = vpack.c.b16 %v341, %v229
      %v358 = vpack.c.b16 %v342, %v230
      %v359 = vpack.c.b16 %v343, %v231
      %v360 = vpack.c.b16 %v344, %v232
      %v361 = vpack.c.b16 %v345, %v233
      %v362 = vpack.c.b16 %v346, %v234
      %v363 = vpack.c.b16 %v347, %v235
      %v365 = vshrl.u32 %v348, 16
      %v367 = vrot.slane %v365, 7
      %v368 = vshll.u32 %v348, 16
      %v370 = vor.u32 %v367, %v368
      %v372 = vshrl.u32 %v349, 16
      %v374 = vrot.slane %v372, 7
      %v375 = vshll.u32 %v349, 16
      %v377 = vor.u32 %v374, %v375
      %v379 = vshrl.u32 %v350, 16
      %v381 = vrot.slane %v379, 7
      %v382 = vshll.u32 %v350, 16
      %v384 = vor.u32 %v381, %v382
      %v386 = vshrl.u32 %v351, 16
      %v388 = vrot.slane %v386, 7
      %v389 = vshll.u32 %v351, 16
      %v391 = vor.u32 %v388, %v389
      %v393 = vshrl.u32 %v352, 16
      %v395 = vrot.slane %v393, 7
      %v396 = vshll.u32 %v352, 16
      %v398 = vor.u32 %v395, %v396
      %v400 = vshrl.u32 %v353, 16
      %v402 = vrot.slane %v400, 7
      %v403 = vshll.u32 %v353, 16
      %v405 = vor.u32 %v402, %v403
      %v407 = vshrl.u32 %v354, 16
      %v409 = vrot.slane %v407, 7
      %v410 = vshll.u32 %v354, 16
      %v412 = vor.u32 %v409, %v410
      %v414 = vshrl.u32 %v355, 16
      %v416 = vrot.slane %v414, 7
      %v417 = vshll.u32 %v355, 16
      %v419 = vor.u32 %v416, %v417
      %v421 = vshrl.u32 %v356, 16
      %v423 = vrot.slane %v421, 7
      %v424 = vshll.u32 %v356, 16
      %v426 = vor.u32 %v423, %v424
      %v428 = vshrl.u32 %v357, 16
      %v430 = vrot.slane %v428, 7
      %v431 = vshll.u32 %v357, 16
      %v433 = vor.u32 %v430, %v431
      %v435 = vshrl.u32 %v358, 16
      %v437 = vrot.slane %v435, 7
      %v438 = vshll.u32 %v358, 16
      %v440 = vor.u32 %v437, %v438
      %v442 = vshrl.u32 %v359, 16
      %v444 = vrot.slane %v442, 7
      %v445 = vshll.u32 %v359, 16
      %v447 = vor.u32 %v444, %v445
      %v449 = vshrl.u32 %v360, 16
      %v451 = vrot.slane %v449, 7
      %v452 = vshll.u32 %v360, 16
      %v454 = vor.u32 %v451, %v452
      %v456 = vshrl.u32 %v361, 16
      %v458 = vrot.slane %v456, 7
      %v459 = vshll.u32 %v361, 16
      %v461 = vor.u32 %v458, %v459
      %v463 = vshrl.u32 %v362, 16
      %v465 = vrot.slane %v463, 7
      %v466 = vshll.u32 %v362, 16
      %v468 = vor.u32 %v465, %v466
      %v470 = vshrl.u32 %v363, 16
      %v472 = vrot.slane %v470, 7
      %v473 = vshll.u32 %v363, 16
      %v475 = vor.u32 %v472, %v473
      %vm492 = vcmask 1040384
      %vm493 = vsmask.f32 256
      %vm494 = vmand %vm492, %vm493
      %v495 = vsel %vm494, %v253, %v370
      %v496 = vsel %vm494, %v256, %v377
      %v497 = vsel %vm494, %v259, %v384
      %v498 = vsel %vm494, %v262, %v391
      %v499 = vsel %vm494, %v265, %v398
      %v500 = vsel %vm494, %v268, %v405
      %v501 = vsel %vm494, %v271, %v412
      %v502 = vsel %vm494, %v274, %v419
      %v503 = vsel %vm494, %v277, %v426
      %v504 = vsel %vm494, %v280, %v433
      %v505 = vsel %vm494, %v283, %v440
      %v506 = vsel %vm494, %v286, %v447
      %v507 = vsel %vm494, %v289, %v454
      %v508 = vsel %vm494, %v292, %v461
      %v509 = vsel %vm494, %v295, %v468
      %v510 = vsel %vm494, %v298, %v475
      %v511 = vrot.slane %v368, 1
      %v512 = vor.u32 %v365, %v511
      %v513 = vrot.slane %v375, 1
      %v514 = vor.u32 %v372, %v513
      %v515 = vrot.slane %v382, 1
      %v516 = vor.u32 %v379, %v515
      %v517 = vrot.slane %v389, 1
      %v518 = vor.u32 %v386, %v517
      %v519 = vrot.slane %v396, 1
      %v520 = vor.u32 %v393, %v519
      %v521 = vrot.slane %v403, 1
      %v522 = vor.u32 %v400, %v521
      %v523 = vrot.slane %v410, 1
      %v524 = vor.u32 %v407, %v523
      %v525 = vrot.slane %v417, 1
      %v526 = vor.u32 %v414, %v525
      %v527 = vrot.slane %v424, 1
      %v528 = vor.u32 %v421, %v527
      %v529 = vrot.slane %v431, 1
      %v530 = vor.u32 %v428, %v529
      %v531 = vrot.slane %v438, 1
      %v532 = vor.u32 %v435, %v531
      %v533 = vrot.slane %v445, 1
      %v534 = vor.u32 %v442, %v533
      %v535 = vrot.slane %v452, 1
      %v536 = vor.u32 %v449, %v535
      %v537 = vrot.slane %v459, 1
      %v538 = vor.u32 %v456, %v537
      %v539 = vrot.slane %v466, 1
      %v540 = vor.u32 %v463, %v539
      %v541 = vrot.slane %v473, 1
      %v542 = vor.u32 %v470, %v541
      %v559 = vpack.c.b16 %v332, %v332
      %v560 = vpack.c.b16 %v333, %v333
      %v561 = vpack.c.b16 %v334, %v334
      %v562 = vpack.c.b16 %v335, %v335
      %v563 = vpack.c.b16 %v336, %v336
      %v564 = vpack.c.b16 %v337, %v337
      %v565 = vpack.c.b16 %v338, %v338
      %v566 = vpack.c.b16 %v339, %v339
      %v567 = vpack.c.b16 %v340, %v340
      %v568 = vpack.c.b16 %v341, %v341
      %v569 = vpack.c.b16 %v342, %v342
      %v570 = vpack.c.b16 %v343, %v343
      %v571 = vpack.c.b16 %v344, %v344
      %v572 = vpack.c.b16 %v345, %v345
      %v573 = vpack.c.b16 %v346, %v346
      %v574 = vpack.c.b16 %v347, %v347
      %v576 = vshll.u32 %v559, 16
      %v578 = vrot.slane %v576, 4
      %v580 = vshll.u32 %v560, 16
      %v582 = vrot.slane %v580, 4
      %v584 = vshll.u32 %v561, 16
      %v586 = vrot.slane %v584, 4
      %v588 = vshll.u32 %v562, 16
      %v590 = vrot.slane %v588, 4
      %v592 = vshll.u32 %v563, 16
      %v594 = vrot.slane %v592, 4
      %v596 = vshll.u32 %v564, 16
      %v598 = vrot.slane %v596, 4
      %v600 = vshll.u32 %v565, 16
      %v602 = vrot.slane %v600, 4
      %v604 = vshll.u32 %v566, 16
      %v606 = vrot.slane %v604, 4
      %v608 = vshll.u32 %v567, 16
      %v610 = vrot.slane %v608, 4
      %v612 = vshll.u32 %v568, 16
      %v614 = vrot.slane %v612, 4
      %v616 = vshll.u32 %v569, 16
      %v618 = vrot.slane %v616, 4
      %v620 = vshll.u32 %v570, 16
      %v622 = vrot.slane %v620, 4
      %v624 = vshll.u32 %v571, 16
      %v626 = vrot.slane %v624, 4
      %v628 = vshll.u32 %v572, 16
      %v630 = vrot.slane %v628, 4
      %v632 = vshll.u32 %v573, 16
      %v634 = vrot.slane %v632, 4
      %v636 = vshll.u32 %v574, 16
      %v638 = vrot.slane %v636, 4
      %vm655 = vcmask 1047552
      %vm656 = vsmask.f32 7424
      %vm657 = vmand %vm655, %vm656
      %v658 = vsel %vm657, %v512, %v578
      %v659 = vsel %vm657, %v514, %v582
      %v660 = vsel %vm657, %v516, %v586
      %v661 = vsel %vm657, %v518, %v590
      %v662 = vsel %vm657, %v520, %v594
      %v663 = vsel %vm657, %v522, %v598
      %v664 = vsel %vm657, %v524, %v602
      %v665 = vsel %vm657, %v526, %v606
      %v666 = vsel %vm657, %v528, %v610
      %v667 = vsel %vm657, %v530, %v614
      %v668 = vsel %vm657, %v532, %v618
      %v669 = vsel %vm657, %v534, %v622
      %v670 = vsel %vm657, %v536, %v626
      %v671 = vsel %vm657, %v538, %v630
      %v672 = vsel %vm657, %v540, %v634
      %v673 = vsel %vm657, %v542, %v638
      %v690 = vld [vmem:[%s1] sm:$0xf]
      %v691 = vld [vmem:[%s1 + $0x4] sm:$0xf]
      %v692 = vld [vmem:[%s1 + $0x8] sm:$0xf]
      %v693 = vld [vmem:[%s1 + $0xc] sm:$0xf]
      %v694 = vld [vmem:[%s1 + $0x10] sm:$0xf]
      %v695 = vld [vmem:[%s1 + $0x14] sm:$0xf]
      %v696 = vld [vmem:[%s1 + $0x18] sm:$0xf]
      %v697 = vld [vmem:[%s1 + $0x1c] sm:$0xf]
      %v698 = vld [vmem:[%s1 + $0x20] sm:$0xf]
      %v699 = vld [vmem:[%s1 + $0x24] sm:$0xf]
      %v700 = vld [vmem:[%s1 + $0x28] sm:$0xf]
      %v701 = vld [vmem:[%s1 + $0x2c] sm:$0xf]
      %v702 = vld [vmem:[%s1 + $0x30] sm:$0xf]
      %v703 = vld [vmem:[%s1 + $0x34] sm:$0xf]
      %v704 = vld [vmem:[%s1 + $0x38] sm:$0xf]
      %v705 = vld [vmem:[%s1 + $0x3c] sm:$0xf]
      %v706 = vld [vmem:[%s1 + $0x40] sm:$0xf]
      %v707 = vld [vmem:[%s1 + $0x44] sm:$0xf]
      %v708 = vld [vmem:[%s1 + $0x48] sm:$0xf]
      %v709 = vld [vmem:[%s1 + $0x4c] sm:$0xf]
      %v710 = vld [vmem:[%s1 + $0x50] sm:$0xf]
      %v711 = vld [vmem:[%s1 + $0x54] sm:$0xf]
      %v712 = vld [vmem:[%s1 + $0x58] sm:$0xf]
      %v713 = vld [vmem:[%s1 + $0x5c] sm:$0xf]
      %v714 = vld [vmem:[%s1 + $0x60] sm:$0xf]
      %v715 = vld [vmem:[%s1 + $0x64] sm:$0xf]
      %v716 = vld [vmem:[%s1 + $0x68] sm:$0xf]
      %v717 = vld [vmem:[%s1 + $0x6c] sm:$0xf]
      %v718 = vld [vmem:[%s1 + $0x70] sm:$0xf]
      %v719 = vld [vmem:[%s1 + $0x74] sm:$0xf]
      %v720 = vld [vmem:[%s1 + $0x78] sm:$0xf]
      %v721 = vld [vmem:[%s1 + $0x7c] sm:$0xf]
      %v722 = vld [vmem:[%s1 + $0x80] sm:$0xf]
      %v723 = vld [vmem:[%s1 + $0x84] sm:$0xf]
      %v724 = vld [vmem:[%s1 + $0x88] sm:$0xf]
      %v725 = vld [vmem:[%s1 + $0x8c] sm:$0xf]
      %v726 = vld [vmem:[%s1 + $0x90] sm:$0xf]
      %v727 = vld [vmem:[%s1 + $0x94] sm:$0xf]
      %v728 = vld [vmem:[%s1 + $0x98] sm:$0xf]
      %v729 = vld [vmem:[%s1 + $0x9c] sm:$0xf]
      %v730 = vld [vmem:[%s1 + $0xa0] sm:$0xf]
      %v731 = vld [vmem:[%s1 + $0xa4] sm:$0xf]
      %v732 = vld [vmem:[%s1 + $0xa8] sm:$0xf]
      %v733 = vld [vmem:[%s1 + $0xac] sm:$0xf]
      %v734 = vld [vmem:[%s1 + $0xb0] sm:$0xf]
      %v735 = vld [vmem:[%s1 + $0xb4] sm:$0xf]
      %v736 = vld [vmem:[%s1 + $0xb8] sm:$0xf]
      %v737 = vld [vmem:[%s1 + $0xbc] sm:$0xf]
      %v786 = vunpack.c.l.b16 %v690
      %v787 = vunpack.c.l.b16 %v691
      %v788 = vunpack.c.l.b16 %v692
      %v789 = vunpack.c.l.b16 %v693
      %v790 = vunpack.c.l.b16 %v694
      %v791 = vunpack.c.l.b16 %v695
      %v792 = vunpack.c.l.b16 %v696
      %v793 = vunpack.c.l.b16 %v697
      %v794 = vunpack.c.l.b16 %v698
      %v795 = vunpack.c.l.b16 %v699
      %v796 = vunpack.c.l.b16 %v700
      %v797 = vunpack.c.l.b16 %v701
      %v798 = vunpack.c.l.b16 %v702
      %v799 = vunpack.c.l.b16 %v703
      %v800 = vunpack.c.l.b16 %v704
      %v801 = vunpack.c.l.b16 %v705
      %v802 = vunpack.c.l.b16 %v706
      %v803 = vunpack.c.l.b16 %v707
      %v804 = vunpack.c.l.b16 %v708
      %v805 = vunpack.c.l.b16 %v709
      %v806 = vunpack.c.l.b16 %v710
      %v807 = vunpack.c.l.b16 %v711
      %v808 = vunpack.c.l.b16 %v712
      %v809 = vunpack.c.l.b16 %v713
      %v810 = vunpack.c.l.b16 %v714
      %v811 = vunpack.c.l.b16 %v715
      %v812 = vunpack.c.l.b16 %v716
      %v813 = vunpack.c.l.b16 %v717
      %v814 = vunpack.c.l.b16 %v718
      %v815 = vunpack.c.l.b16 %v719
      %v816 = vunpack.c.l.b16 %v720
      %v817 = vunpack.c.l.b16 %v721
      %v818 = vunpack.c.l.b16 %v722
      %v819 = vunpack.c.l.b16 %v723
      %v820 = vunpack.c.l.b16 %v724
      %v821 = vunpack.c.l.b16 %v725
      %v822 = vunpack.c.l.b16 %v726
      %v823 = vunpack.c.l.b16 %v727
      %v824 = vunpack.c.l.b16 %v728
      %v825 = vunpack.c.l.b16 %v729
      %v826 = vunpack.c.l.b16 %v730
      %v827 = vunpack.c.l.b16 %v731
      %v828 = vunpack.c.l.b16 %v732
      %v829 = vunpack.c.l.b16 %v733
      %v830 = vunpack.c.l.b16 %v734
      %v831 = vunpack.c.l.b16 %v735
      %v832 = vunpack.c.l.b16 %v736
      %v833 = vunpack.c.l.b16 %v737
      %v834 = vpack.c.b16 %v787, %v786
      %v835 = vpack.c.b16 %v789, %v788
      %v836 = vpack.c.b16 %v791, %v790
      %v837 = vpack.c.b16 %v793, %v792
      %v838 = vpack.c.b16 %v795, %v794
      %v839 = vpack.c.b16 %v797, %v796
      %v840 = vpack.c.b16 %v799, %v798
      %v841 = vpack.c.b16 %v801, %v800
      %v842 = vpack.c.b16 %v803, %v802
      %v843 = vpack.c.b16 %v805, %v804
      %v844 = vpack.c.b16 %v807, %v806
      %v845 = vpack.c.b16 %v809, %v808
      %v846 = vpack.c.b16 %v811, %v810
      %v847 = vpack.c.b16 %v813, %v812
      %v848 = vpack.c.b16 %v815, %v814
      %v849 = vpack.c.b16 %v817, %v816
      %v850 = vpack.c.b16 %v819, %v818
      %v851 = vpack.c.b16 %v821, %v820
      %v852 = vpack.c.b16 %v823, %v822
      %v853 = vpack.c.b16 %v825, %v824
      %v854 = vpack.c.b16 %v827, %v826
      %v855 = vpack.c.b16 %v829, %v828
      %v856 = vpack.c.b16 %v831, %v830
      %v857 = vpack.c.b16 %v833, %v832
      %882 = vmatprep.subr.bf16.mxu0 0
      %883 = vmatpush1.bf16.msra.mxu0 %v834
      %884 = vmatprep.subr.bf16.mxu0 0
      %885 = vmatpush1.bf16.msra.mxu0 %v835
      %886 = vmatprep.subr.bf16.mxu0 0
      %887 = vmatpush1.bf16.msra.mxu0 %v836
      %888 = vmatprep.subr.bf16.mxu0 0
      %889 = vmatpush1.bf16.msra.mxu0 %v837
      %890 = vmatprep.subr.bf16.mxu0 0
      %891 = vmatpush1.bf16.msra.mxu0 %v838
      %892 = vmatprep.subr.bf16.mxu0 0
      %893 = vmatpush1.bf16.msra.mxu0 %v839
      %894 = vmatprep.subr.bf16.mxu0 0
      %895 = vmatpush1.bf16.msra.mxu0 %v840
      %896 = vmatprep.subr.bf16.mxu0 0
      %897 = vmatpush1.bf16.msra.mxu0 %v841
      %898 = vmatprep.subr.bf16.mxu0 0
      %899 = vmatpush1.bf16.msra.mxu0 %v842
      %900 = vmatprep.subr.bf16.mxu0 0
      %901 = vmatpush1.bf16.msra.mxu0 %v843
      %902 = vmatprep.subr.bf16.mxu0 0
      %903 = vmatpush1.bf16.msra.mxu0 %v844
      %904 = vmatprep.subr.bf16.mxu0 0
      %905 = vmatpush1.bf16.msra.mxu0 %v845
      %906 = vmatprep.subr.bf16.mxu0 0
      %907 = vmatpush1.bf16.msra.mxu0 %v846
      %908 = vmatprep.subr.bf16.mxu0 0
      %909 = vmatpush1.bf16.msra.mxu0 %v847
      %910 = vmatprep.subr.bf16.mxu0 0
      %911 = vmatpush1.bf16.msra.mxu0 %v848
      %912 = vmatprep.subr.bf16.mxu0 0
      %913 = vmatpush1.bf16.msra.mxu0 %v849
      %914 = vmatprep.mubr.bf16.mxu0 %v348
      %915 = vmatmul.mubr.bf16.gmra.mrb[0].mxu0 %v495
      %v916 = vpop.f32.mrb[0].mxu0
      %v917 = vadd.f32 0.0, %v916
      %v918 = vpop.f32.mrb[0].mxu0
      %v919 = vpop.f32.mrb[0].mxu0
      %v920 = vadd.f32 0.0, %v919
      %v921 = vpop.f32.mrb[0].mxu0
      %922 = vmatprep.mubr.bf16.mxu0 %v349
      %923 = vmatmul.mubr.bf16.gmra.mrb[0].mxu0 %v496
      %v924 = vpop.f32.mrb[0].mxu0
      %v925 = vadd.f32 0.0, %v924
      %v926 = vpop.f32.mrb[0].mxu0
      %v927 = vpop.f32.mrb[0].mxu0
      %v928 = vadd.f32 0.0, %v927
      %v929 = vpop.f32.mrb[0].mxu0
      %930 = vmatprep.mubr.bf16.mxu0 %v350
      %931 = vmatmul.mubr.bf16.gmra.mrb[0].mxu0 %v497
      %v932 = vpop.f32.mrb[0].mxu0
      %v933 = vadd.f32 0.0, %v932
      %v934 = vpop.f32.mrb[0].mxu0
      %v935 = vpop.f32.mrb[0].mxu0
      %v936 = vadd.f32 0.0, %v935
      %v937 = vpop.f32.mrb[0].mxu0
      %938 = vmatprep.mubr.bf16.mxu0 %v351
      %939 = vmatmul.mubr.bf16.gmra.mrb[0].mxu0 %v498
      %v940 = vpop.f32.mrb[0].mxu0
      %v941 = vadd.f32 0.0, %v940
      %v942 = vpop.f32.mrb[0].mxu0
      %v943 = vpop.f32.mrb[0].mxu0
      %v944 = vadd.f32 0.0, %v943
      %v945 = vpop.f32.mrb[0].mxu0
      %946 = vmatprep.mubr.bf16.mxu0 %v352
      %947 = vmatmul.mubr.bf16.gmra.mrb[0].mxu0 %v499
      %v948 = vpop.f32.mrb[0].mxu0
      %v949 = vadd.f32 0.0, %v948
      %v950 = vpop.f32.mrb[0].mxu0
      %v951 = vpop.f32.mrb[0].mxu0
      %v952 = vadd.f32 0.0, %v951
      %v953 = vpop.f32.mrb[0].mxu0
      %954 = vmatprep.mubr.bf16.mxu0 %v353
      %955 = vmatmul.mubr.bf16.gmra.mrb[0].mxu0 %v500
      %v956 = vpop.f32.mrb[0].mxu0
      %v957 = vadd.f32 0.0, %v956
      %v958 = vpop.f32.mrb[0].mxu0
      %v959 = vpop.f32.mrb[0].mxu0
      %v960 = vadd.f32 0.0, %v959
      %v961 = vpop.f32.mrb[0].mxu0
      %962 = vmatprep.mubr.bf16.mxu0 %v354
      %963 = vmatmul.mubr.bf16.gmra.mrb[0].mxu0 %v501
      %v964 = vpop.f32.mrb[0].mxu0
      %v965 = vadd.f32 0.0, %v964
      %v966 = vpop.f32.mrb[0].mxu0
      %v967 = vpop.f32.mrb[0].mxu0
      %v968 = vadd.f32 0.0, %v967
      %v969 = vpop.f32.mrb[0].mxu0
      %970 = vmatprep.mubr.bf16.mxu0 %v355
      %971 = vmatmul.mubr.bf16.gmra.mrb[0].mxu0 %v502
      %v972 = vpop.f32.mrb[0].mxu0
      %v973 = vadd.f32 0.0, %v972
      %v974 = vpop.f32.mrb[0].mxu0
      %v975 = vpop.f32.mrb[0].mxu0
      %v976 = vadd.f32 0.0, %v975
      %v977 = vpop.f32.mrb[0].mxu0
      %978 = vmatprep.mubr.bf16.mxu0 %v356
      %979 = vmatmul.mubr.bf16.gmra.mrb[0].mxu0 %v503
      %v980 = vpop.f32.mrb[0].mxu0
      %v981 = vadd.f32 0.0, %v980
      %v982 = vpop.f32.mrb[0].mxu0
      %v983 = vpop.f32.mrb[0].mxu0
      %v984 = vadd.f32 0.0, %v983
      %v985 = vpop.f32.mrb[0].mxu0
      %986 = vmatprep.mubr.bf16.mxu0 %v357
      %987 = vmatmul.mubr.bf16.gmra.mrb[0].mxu0 %v504
      %v988 = vpop.f32.mrb[0].mxu0
      %v989 = vadd.f32 0.0, %v988
      %v990 = vpop.f32.mrb[0].mxu0
      %v991 = vpop.f32.mrb[0].mxu0
      %v992 = vadd.f32 0.0, %v991
      %v993 = vpop.f32.mrb[0].mxu0
      %994 = vmatprep.mubr.bf16.mxu0 %v358
      %995 = vmatmul.mubr.bf16.gmra.mrb[0].mxu0 %v505
      %v996 = vpop.f32.mrb[0].mxu0
      %v997 = vadd.f32 0.0, %v996
      %v998 = vpop.f32.mrb[0].mxu0
      %v999 = vpop.f32.mrb[0].mxu0
      %v1000 = vadd.f32 0.0, %v999
      %v1001 = vpop.f32.mrb[0].mxu0
      %1002 = vmatprep.mubr.bf16.mxu0 %v359
      %1003 = vmatmul.mubr.bf16.gmra.mrb[0].mxu0 %v506
      %v1004 = vpop.f32.mrb[0].mxu0
      %v1005 = vadd.f32 0.0, %v1004
      %v1006 = vpop.f32.mrb[0].mxu0
      %v1007 = vpop.f32.mrb[0].mxu0
      %v1008 = vadd.f32 0.0, %v1007
      %v1009 = vpop.f32.mrb[0].mxu0
      %1010 = vmatprep.mubr.bf16.mxu0 %v360
      %1011 = vmatmul.mubr.bf16.gmra.mrb[0].mxu0 %v507
      %v1012 = vpop.f32.mrb[0].mxu0
      %v1013 = vadd.f32 0.0, %v1012
      %v1014 = vpop.f32.mrb[0].mxu0
      %v1015 = vpop.f32.mrb[0].mxu0
      %v1016 = vadd.f32 0.0, %v1015
      %v1017 = vpop.f32.mrb[0].mxu0
      %1018 = vmatprep.mubr.bf16.mxu0 %v361
      %1019 = vmatmul.mubr.bf16.gmra.mrb[0].mxu0 %v508
      %v1020 = vpop.f32.mrb[0].mxu0
      %v1021 = vadd.f32 0.0, %v1020
      %v1022 = vpop.f32.mrb[0].mxu0
      %v1023 = vpop.f32.mrb[0].mxu0
      %v1024 = vadd.f32 0.0, %v1023
      %v1025 = vpop.f32.mrb[0].mxu0
      %1026 = vmatprep.mubr.bf16.mxu0 %v362
      %1027 = vmatmul.mubr.bf16.gmra.mrb[0].mxu0 %v509
      %v1028 = vpop.f32.mrb[0].mxu0
      %v1029 = vadd.f32 0.0, %v1028
      %v1030 = vpop.f32.mrb[0].mxu0
      %v1031 = vpop.f32.mrb[0].mxu0
      %v1032 = vadd.f32 0.0, %v1031
      %v1033 = vpop.f32.mrb[0].mxu0
      %1034 = vmatprep.mubr.bf16.mxu0 %v363
      %1035 = vmatmul.mubr.bf16.gmra.mrb[0].mxu0 %v510
      %v1036 = vpop.f32.mrb[0].mxu0
      %v1037 = vpop.f32.mrb[0].mxu0
      %v1038 = vpop.f32.mrb[0].mxu0
      %v1039 = vpop.f32.mrb[0].mxu0
      %1040 = vdwg.mxu0
      %1041 = vmatprep.subr.bf16.mxu0 0
      %1042 = vmatpush1.bf16.msra.mxu0 %v850
      %1043 = vmatprep.subr.bf16.mxu0 0
      %1044 = vmatpush1.bf16.msra.mxu0 %v851
      %1045 = vmatprep.subr.bf16.mxu0 0
      %1046 = vmatpush1.bf16.msra.mxu0 %v852
      %1047 = vmatprep.subr.bf16.mxu0 0
      %1048 = vmatpush1.bf16.msra.mxu0 %v853
      %1049 = vmatprep.subr.bf16.mxu0 0
      %1050 = vmatpush1.bf16.msra.mxu0 %v854
      %1051 = vmatprep.subr.bf16.mxu0 0
      %1052 = vmatpush1.bf16.msra.mxu0 %v855
      %1053 = vmatprep.subr.bf16.mxu0 0
      %1054 = vmatpush1.bf16.msra.mxu0 %v856
      %1055 = vmatprep.subr.bf16.mxu0 0
      %1056 = vmatpush1.bf16.msra.mxu0 %v857
      %1057 = vmatprep.subr.bf16.mxu0 0
      %1058 = vmatpush1.bf16.msra.mxu0 0
      %1059 = vmatprep.subr.bf16.mxu0 0
      %1060 = vmatpush1.bf16.msra.mxu0 0
      %1061 = vmatprep.subr.bf16.mxu0 0
      %1062 = vmatpush1.bf16.msra.mxu0 0
      %1063 = vmatprep.subr.bf16.mxu0 0
      %1064 = vmatpush1.bf16.msra.mxu0 0
      %1065 = vmatprep.subr.bf16.mxu0 0
      %1066 = vmatpush1.bf16.msra.mxu0 0
      %1067 = vmatprep.subr.bf16.mxu0 0
      %1068 = vmatpush1.bf16.msra.mxu0 0
      %1069 = vmatprep.subr.bf16.mxu0 0
      %1070 = vmatpush1.bf16.msra.mxu0 0
      %1071 = vmatprep.subr.bf16.mxu0 0
      %1072 = vmatpush1.bf16.msra.mxu0 0
      %1073 = vmatprep.mubr.bf16.mxu0 0
      %1074 = vmatmul.mubr.bf16.gmra.mrb[0].mxu0 %v658
      %v1075 = vpop.f32.mrb[0].mxu0
      %v1076 = vadd.f32 %v917, %v1075
      %v1077 = vpop.f32.mrb[0].mxu0
      %v1078 = vpop.f32.mrb[0].mxu0
      %v1079 = vadd.f32 %v920, %v1078
      %v1080 = vpop.f32.mrb[0].mxu0
      %1081 = vmatprep.mubr.bf16.mxu0 0
      %1082 = vmatmul.mubr.bf16.gmra.mrb[0].mxu0 %v659
      %v1083 = vpop.f32.mrb[0].mxu0
      %v1084 = vadd.f32 %v925, %v1083
      %v1085 = vpop.f32.mrb[0].mxu0
      %v1086 = vpop.f32.mrb[0].mxu0
      %v1087 = vadd.f32 %v928, %v1086
      %v1088 = vpop.f32.mrb[0].mxu0
      %1089 = vmatprep.mubr.bf16.mxu0 0
      %1090 = vmatmul.mubr.bf16.gmra.mrb[0].mxu0 %v660
      %v1091 = vpop.f32.mrb[0].mxu0
      %v1092 = vadd.f32 %v933, %v1091
      %v1093 = vpop.f32.mrb[0].mxu0
      %v1094 = vpop.f32.mrb[0].mxu0
      %v1095 = vadd.f32 %v936, %v1094
      %v1096 = vpop.f32.mrb[0].mxu0
      %1097 = vmatprep.mubr.bf16.mxu0 0
      %1098 = vmatmul.mubr.bf16.gmra.mrb[0].mxu0 %v661
      %v1099 = vpop.f32.mrb[0].mxu0
      %v1100 = vadd.f32 %v941, %v1099
      %v1101 = vpop.f32.mrb[0].mxu0
      %v1102 = vpop.f32.mrb[0].mxu0
      %v1103 = vadd.f32 %v944, %v1102
      %v1104 = vpop.f32.mrb[0].mxu0
      %1105 = vmatprep.mubr.bf16.mxu0 0
      %1106 = vmatmul.mubr.bf16.gmra.mrb[0].mxu0 %v662
      %v1107 = vpop.f32.mrb[0].mxu0
      %v1108 = vadd.f32 %v949, %v1107
      %v1109 = vpop.f32.mrb[0].mxu0
      %v1110 = vpop.f32.mrb[0].mxu0
      %v1111 = vadd.f32 %v952, %v1110
      %v1112 = vpop.f32.mrb[0].mxu0
      %1113 = vmatprep.mubr.bf16.mxu0 0
      %1114 = vmatmul.mubr.bf16.gmra.mrb[0].mxu0 %v663
      %v1115 = vpop.f32.mrb[0].mxu0
      %v1116 = vadd.f32 %v957, %v1115
      %v1117 = vpop.f32.mrb[0].mxu0
      %v1118 = vpop.f32.mrb[0].mxu0
      %v1119 = vadd.f32 %v960, %v1118
      %v1120 = vpop.f32.mrb[0].mxu0
      %1121 = vmatprep.mubr.bf16.mxu0 0
      %1122 = vmatmul.mubr.bf16.gmra.mrb[0].mxu0 %v664
      %v1123 = vpop.f32.mrb[0].mxu0
      %v1124 = vadd.f32 %v965, %v1123
      %v1125 = vpop.f32.mrb[0].mxu0
      %v1126 = vpop.f32.mrb[0].mxu0
      %v1127 = vadd.f32 %v968, %v1126
      %v1128 = vpop.f32.mrb[0].mxu0
      %1129 = vmatprep.mubr.bf16.mxu0 0
      %1130 = vmatmul.mubr.bf16.gmra.mrb[0].mxu0 %v665
      %v1131 = vpop.f32.mrb[0].mxu0
      %v1132 = vadd.f32 %v973, %v1131
      %v1133 = vpop.f32.mrb[0].mxu0
      %v1134 = vpop.f32.mrb[0].mxu0
      %v1135 = vadd.f32 %v976, %v1134
      %v1136 = vpop.f32.mrb[0].mxu0
      %1137 = vmatprep.mubr.bf16.mxu0 0
      %1138 = vmatmul.mubr.bf16.gmra.mrb[0].mxu0 %v666
      %v1139 = vpop.f32.mrb[0].mxu0
      %v1140 = vadd.f32 %v981, %v1139
      %v1141 = vpop.f32.mrb[0].mxu0
      %v1142 = vpop.f32.mrb[0].mxu0
      %v1143 = vadd.f32 %v984, %v1142
      %v1144 = vpop.f32.mrb[0].mxu0
      %1145 = vmatprep.mubr.bf16.mxu0 0
      %1146 = vmatmul.mubr.bf16.gmra.mrb[0].mxu0 %v667
      %v1147 = vpop.f32.mrb[0].mxu0
      %v1148 = vadd.f32 %v989, %v1147
      %v1149 = vpop.f32.mrb[0].mxu0
      %v1150 = vpop.f32.mrb[0].mxu0
      %v1151 = vadd.f32 %v992, %v1150
      %v1152 = vpop.f32.mrb[0].mxu0
      %1153 = vmatprep.mubr.bf16.mxu0 0
      %1154 = vmatmul.mubr.bf16.gmra.mrb[0].mxu0 %v668
      %v1155 = vpop.f32.mrb[0].mxu0
      %v1156 = vadd.f32 %v997, %v1155
      %v1157 = vpop.f32.mrb[0].mxu0
      %v1158 = vpop.f32.mrb[0].mxu0
      %v1159 = vadd.f32 %v1000, %v1158
      %v1160 = vpop.f32.mrb[0].mxu0
      %1161 = vmatprep.mubr.bf16.mxu0 0
      %1162 = vmatmul.mubr.bf16.gmra.mrb[0].mxu0 %v669
      %v1163 = vpop.f32.mrb[0].mxu0
      %v1164 = vadd.f32 %v1005, %v1163
      %v1165 = vpop.f32.mrb[0].mxu0
      %v1166 = vpop.f32.mrb[0].mxu0
      %v1167 = vadd.f32 %v1008, %v1166
      %v1168 = vpop.f32.mrb[0].mxu0
      %1169 = vmatprep.mubr.bf16.mxu0 0
      %1170 = vmatmul.mubr.bf16.gmra.mrb[0].mxu0 %v670
      %v1171 = vpop.f32.mrb[0].mxu0
      %v1172 = vadd.f32 %v1013, %v1171
      %v1173 = vpop.f32.mrb[0].mxu0
      %v1174 = vpop.f32.mrb[0].mxu0
      %v1175 = vadd.f32 %v1016, %v1174
      %v1176 = vpop.f32.mrb[0].mxu0
      %1177 = vmatprep.mubr.bf16.mxu0 0
      %1178 = vmatmul.mubr.bf16.gmra.mrb[0].mxu0 %v671
      %v1179 = vpop.f32.mrb[0].mxu0
      %v1180 = vadd.f32 %v1021, %v1179
      %v1181 = vpop.f32.mrb[0].mxu0
      %v1182 = vpop.f32.mrb[0].mxu0
      %v1183 = vadd.f32 %v1024, %v1182
      %v1184 = vpop.f32.mrb[0].mxu0
      %1185 = vmatprep.mubr.bf16.mxu0 0
      %1186 = vmatmul.mubr.bf16.gmra.mrb[0].mxu0 %v672
      %v1187 = vpop.f32.mrb[0].mxu0
      %v1188 = vadd.f32 %v1029, %v1187
      %v1189 = vpop.f32.mrb[0].mxu0
      %v1190 = vpop.f32.mrb[0].mxu0
      %v1191 = vadd.f32 %v1032, %v1190
      %v1192 = vpop.f32.mrb[0].mxu0
      %1193 = vmatprep.mubr.bf16.mxu0 0
      %1194 = vmatmul.mubr.bf16.gmra.mrb[0].mxu0 %v673
      %v1195 = vpop.f32.mrb[0].mxu0
      %v1196 = vpop.f32.mrb[0].mxu0
      %v1197 = vpop.f32.mrb[0].mxu0
      %v1198 = vpop.f32.mrb[0].mxu0
      %1199 = vdwg.mxu0
      %s1200 = scalar_lea.vmem %s1, 192
      %v1201 = vld [vmem:[%s1200] sm:$0xf]
      %v1202 = vld [vmem:[%s1200 + $0x4] sm:$0xf]
      %v1203 = vld [vmem:[%s1200 + $0x8] sm:$0xf]
      %v1204 = vld [vmem:[%s1200 + $0xc] sm:$0xf]
      %v1205 = vld [vmem:[%s1200 + $0x10] sm:$0xf]
      %v1206 = vld [vmem:[%s1200 + $0x14] sm:$0xf]
      %v1207 = vld [vmem:[%s1200 + $0x18] sm:$0xf]
      %v1208 = vld [vmem:[%s1200 + $0x1c] sm:$0xf]
      %v1209 = vld [vmem:[%s1200 + $0x20] sm:$0xf]
      %v1210 = vld [vmem:[%s1200 + $0x24] sm:$0xf]
      %v1211 = vld [vmem:[%s1200 + $0x28] sm:$0xf]
      %v1212 = vld [vmem:[%s1200 + $0x2c] sm:$0xf]
      %v1213 = vld [vmem:[%s1200 + $0x30] sm:$0xf]
      %v1214 = vld [vmem:[%s1200 + $0x34] sm:$0xf]
      %v1215 = vld [vmem:[%s1200 + $0x38] sm:$0xf]
      %v1216 = vld [vmem:[%s1200 + $0x3c] sm:$0xf]
      %v1217 = vld [vmem:[%s1200 + $0x40] sm:$0xf]
      %v1218 = vld [vmem:[%s1200 + $0x44] sm:$0xf]
      %v1219 = vld [vmem:[%s1200 + $0x48] sm:$0xf]
      %v1220 = vld [vmem:[%s1200 + $0x4c] sm:$0xf]
      %v1221 = vld [vmem:[%s1200 + $0x50] sm:$0xf]
      %v1222 = vld [vmem:[%s1200 + $0x54] sm:$0xf]
      %v1223 = vld [vmem:[%s1200 + $0x58] sm:$0xf]
      %v1224 = vld [vmem:[%s1200 + $0x5c] sm:$0xf]
      %v1225 = vld [vmem:[%s1200 + $0x60] sm:$0xf]
      %v1226 = vld [vmem:[%s1200 + $0x64] sm:$0xf]
      %v1227 = vld [vmem:[%s1200 + $0x68] sm:$0xf]
      %v1228 = vld [vmem:[%s1200 + $0x6c] sm:$0xf]
      %v1229 = vld [vmem:[%s1200 + $0x70] sm:$0xf]
      %v1230 = vld [vmem:[%s1200 + $0x74] sm:$0xf]
      %v1231 = vld [vmem:[%s1200 + $0x78] sm:$0xf]
      %v1232 = vld [vmem:[%s1200 + $0x7c] sm:$0xf]
      %v1233 = vld [vmem:[%s1200 + $0x80] sm:$0xf]
      %v1234 = vld [vmem:[%s1200 + $0x84] sm:$0xf]
      %v1235 = vld [vmem:[%s1200 + $0x88] sm:$0xf]
      %v1236 = vld [vmem:[%s1200 + $0x8c] sm:$0xf]
      %v1237 = vld [vmem:[%s1200 + $0x90] sm:$0xf]
      %v1238 = vld [vmem:[%s1200 + $0x94] sm:$0xf]
      %v1239 = vld [vmem:[%s1200 + $0x98] sm:$0xf]
      %v1240 = vld [vmem:[%s1200 + $0x9c] sm:$0xf]
      %v1241 = vld [vmem:[%s1200 + $0xa0] sm:$0xf]
      %v1242 = vld [vmem:[%s1200 + $0xa4] sm:$0xf]
      %v1243 = vld [vmem:[%s1200 + $0xa8] sm:$0xf]
      %v1244 = vld [vmem:[%s1200 + $0xac] sm:$0xf]
      %v1245 = vld [vmem:[%s1200 + $0xb0] sm:$0xf]
      %v1246 = vld [vmem:[%s1200 + $0xb4] sm:$0xf]
      %v1247 = vld [vmem:[%s1200 + $0xb8] sm:$0xf]
      %v1248 = vld [vmem:[%s1200 + $0xbc] sm:$0xf]
      %v1297 = vunpack.c.l.b16 %v1201
      %v1298 = vunpack.c.l.b16 %v1202
      %v1299 = vunpack.c.l.b16 %v1203
      %v1300 = vunpack.c.l.b16 %v1204
      %v1301 = vunpack.c.l.b16 %v1205
      %v1302 = vunpack.c.l.b16 %v1206
      %v1303 = vunpack.c.l.b16 %v1207
      %v1304 = vunpack.c.l.b16 %v1208
      %v1305 = vunpack.c.l.b16 %v1209
      %v1306 = vunpack.c.l.b16 %v1210
      %v1307 = vunpack.c.l.b16 %v1211
      %v1308 = vunpack.c.l.b16 %v1212
      %v1309 = vunpack.c.l.b16 %v1213
      %v1310 = vunpack.c.l.b16 %v1214
      %v1311 = vunpack.c.l.b16 %v1215
      %v1312 = vunpack.c.l.b16 %v1216
      %v1313 = vunpack.c.l.b16 %v1217
      %v1314 = vunpack.c.l.b16 %v1218
      %v1315 = vunpack.c.l.b16 %v1219
      %v1316 = vunpack.c.l.b16 %v1220
      %v1317 = vunpack.c.l.b16 %v1221
      %v1318 = vunpack.c.l.b16 %v1222
      %v1319 = vunpack.c.l.b16 %v1223
      %v1320 = vunpack.c.l.b16 %v1224
      %v1321 = vunpack.c.l.b16 %v1225
      %v1322 = vunpack.c.l.b16 %v1226
      %v1323 = vunpack.c.l.b16 %v1227
      %v1324 = vunpack.c.l.b16 %v1228
      %v1325 = vunpack.c.l.b16 %v1229
      %v1326 = vunpack.c.l.b16 %v1230
      %v1327 = vunpack.c.l.b16 %v1231
      %v1328 = vunpack.c.l.b16 %v1232
      %v1329 = vunpack.c.l.b16 %v1233
      %v1330 = vunpack.c.l.b16 %v1234
      %v1331 = vunpack.c.l.b16 %v1235
      %v1332 = vunpack.c.l.b16 %v1236
      %v1333 = vunpack.c.l.b16 %v1237
      %v1334 = vunpack.c.l.b16 %v1238
      %v1335 = vunpack.c.l.b16 %v1239
      %v1336 = vunpack.c.l.b16 %v1240
      %v1337 = vunpack.c.l.b16 %v1241
      %v1338 = vunpack.c.l.b16 %v1242
      %v1339 = vunpack.c.l.b16 %v1243
      %v1340 = vunpack.c.l.b16 %v1244
      %v1341 = vunpack.c.l.b16 %v1245
      %v1342 = vunpack.c.l.b16 %v1246
      %v1343 = vunpack.c.l.b16 %v1247
      %v1344 = vunpack.c.l.b16 %v1248
      %v1345 = vpack.c.b16 %v1298, %v1297
      %v1346 = vpack.c.b16 %v1300, %v1299
      %v1347 = vpack.c.b16 %v1302, %v1301
      %v1348 = vpack.c.b16 %v1304, %v1303
      %v1349 = vpack.c.b16 %v1306, %v1305
      %v1350 = vpack.c.b16 %v1308, %v1307
      %v1351 = vpack.c.b16 %v1310, %v1309
      %v1352 = vpack.c.b16 %v1312, %v1311
      %v1353 = vpack.c.b16 %v1314, %v1313
      %v1354 = vpack.c.b16 %v1316, %v1315
      %v1355 = vpack.c.b16 %v1318, %v1317
      %v1356 = vpack.c.b16 %v1320, %v1319
      %v1357 = vpack.c.b16 %v1322, %v1321
      %v1358 = vpack.c.b16 %v1324, %v1323
      %v1359 = vpack.c.b16 %v1326, %v1325
      %v1360 = vpack.c.b16 %v1328, %v1327
      %v1361 = vpack.c.b16 %v1330, %v1329
      %v1362 = vpack.c.b16 %v1332, %v1331
      %v1363 = vpack.c.b16 %v1334, %v1333
      %v1364 = vpack.c.b16 %v1336, %v1335
      %v1365 = vpack.c.b16 %v1338, %v1337
      %v1366 = vpack.c.b16 %v1340, %v1339
      %v1367 = vpack.c.b16 %v1342, %v1341
      %v1368 = vpack.c.b16 %v1344, %v1343
      %1393 = vmatprep.subr.bf16.mxu0 0
      %1394 = vmatpush1.bf16.msra.mxu0 %v1345
      %1395 = vmatprep.subr.bf16.mxu0 0
      %1396 = vmatpush1.bf16.msra.mxu0 %v1346
      %1397 = vmatprep.subr.bf16.mxu0 0
      %1398 = vmatpush1.bf16.msra.mxu0 %v1347
      %1399 = vmatprep.subr.bf16.mxu0 0
      %1400 = vmatpush1.bf16.msra.mxu0 %v1348
      %1401 = vmatprep.subr.bf16.mxu0 0
      %1402 = vmatpush1.bf16.msra.mxu0 %v1349
      %1403 = vmatprep.subr.bf16.mxu0 0
      %1404 = vmatpush1.bf16.msra.mxu0 %v1350
      %1405 = vmatprep.subr.bf16.mxu0 0
      %1406 = vmatpush1.bf16.msra.mxu0 %v1351
      %1407 = vmatprep.subr.bf16.mxu0 0
      %1408 = vmatpush1.bf16.msra.mxu0 %v1352
      %1409 = vmatprep.subr.bf16.mxu0 0
      %1410 = vmatpush1.bf16.msra.mxu0 %v1353
      %1411 = vmatprep.subr.bf16.mxu0 0
      %1412 = vmatpush1.bf16.msra.mxu0 %v1354
      %1413 = vmatprep.subr.bf16.mxu0 0
      %1414 = vmatpush1.bf16.msra.mxu0 %v1355
      %1415 = vmatprep.subr.bf16.mxu0 0
      %1416 = vmatpush1.bf16.msra.mxu0 %v1356
      %1417 = vmatprep.subr.bf16.mxu0 0
      %1418 = vmatpush1.bf16.msra.mxu0 %v1357
      %1419 = vmatprep.subr.bf16.mxu0 0
      %1420 = vmatpush1.bf16.msra.mxu0 %v1358
      %1421 = vmatprep.subr.bf16.mxu0 0
      %1422 = vmatpush1.bf16.msra.mxu0 %v1359
      %1423 = vmatprep.subr.bf16.mxu0 0
      %1424 = vmatpush1.bf16.msra.mxu0 %v1360
      %1425 = vmatprep.mubr.bf16.mxu0 %v348
      %1426 = vmatmul.mubr.bf16.gmra.mrb[0].mxu0 %v495
      %v1427 = vpop.f32.mrb[0].mxu0
      %v1428 = vadd.f32 0.0, %v1427
      %v1429 = vpop.f32.mrb[0].mxu0
      %v1430 = vpop.f32.mrb[0].mxu0
      %v1431 = vadd.f32 0.0, %v1430
      %v1432 = vpop.f32.mrb[0].mxu0
      %1433 = vmatprep.mubr.bf16.mxu0 %v349
      %1434 = vmatmul.mubr.bf16.gmra.mrb[0].mxu0 %v496
      %v1435 = vpop.f32.mrb[0].mxu0
      %v1436 = vadd.f32 0.0, %v1435
      %v1437 = vpop.f32.mrb[0].mxu0
      %v1438 = vpop.f32.mrb[0].mxu0
      %v1439 = vadd.f32 0.0, %v1438
      %v1440 = vpop.f32.mrb[0].mxu0
      %1441 = vmatprep.mubr.bf16.mxu0 %v350
      %1442 = vmatmul.mubr.bf16.gmra.mrb[0].mxu0 %v497
      %v1443 = vpop.f32.mrb[0].mxu0
      %v1444 = vadd.f32 0.0, %v1443
      %v1445 = vpop.f32.mrb[0].mxu0
      %v1446 = vpop.f32.mrb[0].mxu0
      %v1447 = vadd.f32 0.0, %v1446
      %v1448 = vpop.f32.mrb[0].mxu0
      %1449 = vmatprep.mubr.bf16.mxu0 %v351
      %1450 = vmatmul.mubr.bf16.gmra.mrb[0].mxu0 %v498
      %v1451 = vpop.f32.mrb[0].mxu0
      %v1452 = vadd.f32 0.0, %v1451
      %v1453 = vpop.f32.mrb[0].mxu0
      %v1454 = vpop.f32.mrb[0].mxu0
      %v1455 = vadd.f32 0.0, %v1454
      %v1456 = vpop.f32.mrb[0].mxu0
      %1457 = vmatprep.mubr.bf16.mxu0 %v352
      %1458 = vmatmul.mubr.bf16.gmra.mrb[0].mxu0 %v499
      %v1459 = vpop.f32.mrb[0].mxu0
      %v1460 = vadd.f32 0.0, %v1459
      %v1461 = vpop.f32.mrb[0].mxu0
      %v1462 = vpop.f32.mrb[0].mxu0
      %v1463 = vadd.f32 0.0, %v1462
      %v1464 = vpop.f32.mrb[0].mxu0
      %1465 = vmatprep.mubr.bf16.mxu0 %v353
      %1466 = vmatmul.mubr.bf16.gmra.mrb[0].mxu0 %v500
      %v1467 = vpop.f32.mrb[0].mxu0
      %v1468 = vadd.f32 0.0, %v1467
      %v1469 = vpop.f32.mrb[0].mxu0
      %v1470 = vpop.f32.mrb[0].mxu0
      %v1471 = vadd.f32 0.0, %v1470
      %v1472 = vpop.f32.mrb[0].mxu0
      %1473 = vmatprep.mubr.bf16.mxu0 %v354
      %1474 = vmatmul.mubr.bf16.gmra.mrb[0].mxu0 %v501
      %v1475 = vpop.f32.mrb[0].mxu0
      %v1476 = vadd.f32 0.0, %v1475
      %v1477 = vpop.f32.mrb[0].mxu0
      %v1478 = vpop.f32.mrb[0].mxu0
      %v1479 = vadd.f32 0.0, %v1478
      %v1480 = vpop.f32.mrb[0].mxu0
      %1481 = vmatprep.mubr.bf16.mxu0 %v355
      %1482 = vmatmul.mubr.bf16.gmra.mrb[0].mxu0 %v502
      %v1483 = vpop.f32.mrb[0].mxu0
      %v1484 = vadd.f32 0.0, %v1483
      %v1485 = vpop.f32.mrb[0].mxu0
      %v1486 = vpop.f32.mrb[0].mxu0
      %v1487 = vadd.f32 0.0, %v1486
      %v1488 = vpop.f32.mrb[0].mxu0
      %1489 = vmatprep.mubr.bf16.mxu0 %v356
      %1490 = vmatmul.mubr.bf16.gmra.mrb[0].mxu0 %v503
      %v1491 = vpop.f32.mrb[0].mxu0
      %v1492 = vadd.f32 0.0, %v1491
      %v1493 = vpop.f32.mrb[0].mxu0
      %v1494 = vpop.f32.mrb[0].mxu0
      %v1495 = vadd.f32 0.0, %v1494
      %v1496 = vpop.f32.mrb[0].mxu0
      %1497 = vmatprep.mubr.bf16.mxu0 %v357
      %1498 = vmatmul.mubr.bf16.gmra.mrb[0].mxu0 %v504
      %v1499 = vpop.f32.mrb[0].mxu0
      %v1500 = vadd.f32 0.0, %v1499
      %v1501 = vpop.f32.mrb[0].mxu0
      %v1502 = vpop.f32.mrb[0].mxu0
      %v1503 = vadd.f32 0.0, %v1502
      %v1504 = vpop.f32.mrb[0].mxu0
      %1505 = vmatprep.mubr.bf16.mxu0 %v358
      %1506 = vmatmul.mubr.bf16.gmra.mrb[0].mxu0 %v505
      %v1507 = vpop.f32.mrb[0].mxu0
      %v1508 = vadd.f32 0.0, %v1507
      %v1509 = vpop.f32.mrb[0].mxu0
      %v1510 = vpop.f32.mrb[0].mxu0
      %v1511 = vadd.f32 0.0, %v1510
      %v1512 = vpop.f32.mrb[0].mxu0
      %1513 = vmatprep.mubr.bf16.mxu0 %v359
      %1514 = vmatmul.mubr.bf16.gmra.mrb[0].mxu0 %v506
      %v1515 = vpop.f32.mrb[0].mxu0
      %v1516 = vadd.f32 0.0, %v1515
      %v1517 = vpop.f32.mrb[0].mxu0
      %v1518 = vpop.f32.mrb[0].mxu0
      %v1519 = vadd.f32 0.0, %v1518
      %v1520 = vpop.f32.mrb[0].mxu0
      %1521 = vmatprep.mubr.bf16.mxu0 %v360
      %1522 = vmatmul.mubr.bf16.gmra.mrb[0].mxu0 %v507
      %v1523 = vpop.f32.mrb[0].mxu0
      %v1524 = vadd.f32 0.0, %v1523
      %v1525 = vpop.f32.mrb[0].mxu0
      %v1526 = vpop.f32.mrb[0].mxu0
      %v1527 = vadd.f32 0.0, %v1526
      %v1528 = vpop.f32.mrb[0].mxu0
      %1529 = vmatprep.mubr.bf16.mxu0 %v361
      %1530 = vmatmul.mubr.bf16.gmra.mrb[0].mxu0 %v508
      %v1531 = vpop.f32.mrb[0].mxu0
      %v1532 = vadd.f32 0.0, %v1531
      %v1533 = vpop.f32.mrb[0].mxu0
      %v1534 = vpop.f32.mrb[0].mxu0
      %v1535 = vadd.f32 0.0, %v1534
      %v1536 = vpop.f32.mrb[0].mxu0
      %1537 = vmatprep.mubr.bf16.mxu0 %v362
      %1538 = vmatmul.mubr.bf16.gmra.mrb[0].mxu0 %v509
      %v1539 = vpop.f32.mrb[0].mxu0
      %v1540 = vadd.f32 0.0, %v1539
      %v1541 = vpop.f32.mrb[0].mxu0
      %v1542 = vpop.f32.mrb[0].mxu0
      %v1543 = vadd.f32 0.0, %v1542
      %v1544 = vpop.f32.mrb[0].mxu0
      %1545 = vmatprep.mubr.bf16.mxu0 %v363
      %1546 = vmatmul.mubr.bf16.gmra.mrb[0].mxu0 %v510
      %v1547 = vpop.f32.mrb[0].mxu0
      %v1548 = vadd.f32 0.0, %v1547
      %v1549 = vpop.f32.mrb[0].mxu0
      %v1550 = vpop.f32.mrb[0].mxu0
      %v1551 = vadd.f32 0.0, %v1550
      %v1552 = vpop.f32.mrb[0].mxu0
      %1553 = vdwg.mxu0
      %1554 = vmatprep.subr.bf16.mxu0 0
      %1555 = vmatpush1.bf16.msra.mxu0 %v1361
      %1556 = vmatprep.subr.bf16.mxu0 0
      %1557 = vmatpush1.bf16.msra.mxu0 %v1362
      %1558 = vmatprep.subr.bf16.mxu0 0
      %1559 = vmatpush1.bf16.msra.mxu0 %v1363
      %1560 = vmatprep.subr.bf16.mxu0 0
      %1561 = vmatpush1.bf16.msra.mxu0 %v1364
      %1562 = vmatprep.subr.bf16.mxu0 0
      %1563 = vmatpush1.bf16.msra.mxu0 %v1365
      %1564 = vmatprep.subr.bf16.mxu0 0
      %1565 = vmatpush1.bf16.msra.mxu0 %v1366
      %1566 = vmatprep.subr.bf16.mxu0 0
      %1567 = vmatpush1.bf16.msra.mxu0 %v1367
      %1568 = vmatprep.subr.bf16.mxu0 0
      %1569 = vmatpush1.bf16.msra.mxu0 %v1368
      %1570 = vmatprep.subr.bf16.mxu0 0
      %1571 = vmatpush1.bf16.msra.mxu0 0
      %1572 = vmatprep.subr.bf16.mxu0 0
      %1573 = vmatpush1.bf16.msra.mxu0 0
      %1574 = vmatprep.subr.bf16.mxu0 0
      %1575 = vmatpush1.bf16.msra.mxu0 0
      %1576 = vmatprep.subr.bf16.mxu0 0
      %1577 = vmatpush1.bf16.msra.mxu0 0
      %1578 = vmatprep.subr.bf16.mxu0 0
      %1579 = vmatpush1.bf16.msra.mxu0 0
      %1580 = vmatprep.subr.bf16.mxu0 0
      %1581 = vmatpush1.bf16.msra.mxu0 0
      %1582 = vmatprep.subr.bf16.mxu0 0
      %1583 = vmatpush1.bf16.msra.mxu0 0
      %1584 = vmatprep.subr.bf16.mxu0 0
      %1585 = vmatpush1.bf16.msra.mxu0 0
      %1586 = vmatprep.mubr.bf16.mxu0 0
      %1587 = vmatmul.mubr.bf16.gmra.mrb[0].mxu0 %v658
      %v1588 = vpop.f32.mrb[0].mxu0
      %v1589 = vadd.f32 %v1428, %v1588
      %v1590 = vpop.f32.mrb[0].mxu0
      %v1591 = vpop.f32.mrb[0].mxu0
      %v1592 = vadd.f32 %v1431, %v1591
      %v1593 = vpop.f32.mrb[0].mxu0
      %1594 = vmatprep.mubr.bf16.mxu0 0
      %1595 = vmatmul.mubr.bf16.gmra.mrb[0].mxu0 %v659
      %v1596 = vpop.f32.mrb[0].mxu0
      %v1597 = vadd.f32 %v1436, %v1596
      %v1598 = vpop.f32.mrb[0].mxu0
      %v1599 = vpop.f32.mrb[0].mxu0
      %v1600 = vadd.f32 %v1439, %v1599
      %v1601 = vpop.f32.mrb[0].mxu0
      %1602 = vmatprep.mubr.bf16.mxu0 0
      %1603 = vmatmul.mubr.bf16.gmra.mrb[0].mxu0 %v660
      %v1604 = vpop.f32.mrb[0].mxu0
      %v1605 = vadd.f32 %v1444, %v1604
      %v1606 = vpop.f32.mrb[0].mxu0
      %v1607 = vpop.f32.mrb[0].mxu0
      %v1608 = vadd.f32 %v1447, %v1607
      %v1609 = vpop.f32.mrb[0].mxu0
      %1610 = vmatprep.mubr.bf16.mxu0 0
      %1611 = vmatmul.mubr.bf16.gmra.mrb[0].mxu0 %v661
      %v1612 = vpop.f32.mrb[0].mxu0
      %v1613 = vadd.f32 %v1452, %v1612
      %v1614 = vpop.f32.mrb[0].mxu0
      %v1615 = vpop.f32.mrb[0].mxu0
      %v1616 = vadd.f32 %v1455, %v1615
      %v1617 = vpop.f32.mrb[0].mxu0
      %1618 = vmatprep.mubr.bf16.mxu0 0
      %1619 = vmatmul.mubr.bf16.gmra.mrb[0].mxu0 %v662
      %v1620 = vpop.f32.mrb[0].mxu0
      %v1621 = vadd.f32 %v1460, %v1620
      %v1622 = vpop.f32.mrb[0].mxu0
      %v1623 = vpop.f32.mrb[0].mxu0
      %v1624 = vadd.f32 %v1463, %v1623
      %v1625 = vpop.f32.mrb[0].mxu0
      %1626 = vmatprep.mubr.bf16.mxu0 0
      %1627 = vmatmul.mubr.bf16.gmra.mrb[0].mxu0 %v663
      %v1628 = vpop.f32.mrb[0].mxu0
      %v1629 = vadd.f32 %v1468, %v1628
      %v1630 = vpop.f32.mrb[0].mxu0
      %v1631 = vpop.f32.mrb[0].mxu0
      %v1632 = vadd.f32 %v1471, %v1631
      %v1633 = vpop.f32.mrb[0].mxu0
      %1634 = vmatprep.mubr.bf16.mxu0 0
      %1635 = vmatmul.mubr.bf16.gmra.mrb[0].mxu0 %v664
      %v1636 = vpop.f32.mrb[0].mxu0
      %v1637 = vadd.f32 %v1476, %v1636
      %v1638 = vpop.f32.mrb[0].mxu0
      %v1639 = vpop.f32.mrb[0].mxu0
      %v1640 = vadd.f32 %v1479, %v1639
      %v1641 = vpop.f32.mrb[0].mxu0
      %1642 = vmatprep.mubr.bf16.mxu0 0
      %1643 = vmatmul.mubr.bf16.gmra.mrb[0].mxu0 %v665
      %v1644 = vpop.f32.mrb[0].mxu0
      %v1645 = vadd.f32 %v1484, %v1644
      %v1646 = vpop.f32.mrb[0].mxu0
      %v1647 = vpop.f32.mrb[0].mxu0
      %v1648 = vadd.f32 %v1487, %v1647
      %v1649 = vpop.f32.mrb[0].mxu0
      %1650 = vmatprep.mubr.bf16.mxu0 0
      %1651 = vmatmul.mubr.bf16.gmra.mrb[0].mxu0 %v666
      %v1652 = vpop.f32.mrb[0].mxu0
      %v1653 = vadd.f32 %v1492, %v1652
      %v1654 = vpop.f32.mrb[0].mxu0
      %v1655 = vpop.f32.mrb[0].mxu0
      %v1656 = vadd.f32 %v1495, %v1655
      %v1657 = vpop.f32.mrb[0].mxu0
      %1658 = vmatprep.mubr.bf16.mxu0 0
      %1659 = vmatmul.mubr.bf16.gmra.mrb[0].mxu0 %v667
      %v1660 = vpop.f32.mrb[0].mxu0
      %v1661 = vadd.f32 %v1500, %v1660
      %v1662 = vpop.f32.mrb[0].mxu0
      %v1663 = vpop.f32.mrb[0].mxu0
      %v1664 = vadd.f32 %v1503, %v1663
      %v1665 = vpop.f32.mrb[0].mxu0
      %1666 = vmatprep.mubr.bf16.mxu0 0
      %1667 = vmatmul.mubr.bf16.gmra.mrb[0].mxu0 %v668
      %v1668 = vpop.f32.mrb[0].mxu0
      %v1669 = vadd.f32 %v1508, %v1668
      %v1670 = vpop.f32.mrb[0].mxu0
      %v1671 = vpop.f32.mrb[0].mxu0
      %v1672 = vadd.f32 %v1511, %v1671
      %v1673 = vpop.f32.mrb[0].mxu0
      %1674 = vmatprep.mubr.bf16.mxu0 0
      %1675 = vmatmul.mubr.bf16.gmra.mrb[0].mxu0 %v669
      %v1676 = vpop.f32.mrb[0].mxu0
      %v1677 = vadd.f32 %v1516, %v1676
      %v1678 = vpop.f32.mrb[0].mxu0
      %v1679 = vpop.f32.mrb[0].mxu0
      %v1680 = vadd.f32 %v1519, %v1679
      %v1681 = vpop.f32.mrb[0].mxu0
      %1682 = vmatprep.mubr.bf16.mxu0 0
      %1683 = vmatmul.mubr.bf16.gmra.mrb[0].mxu0 %v670
      %v1684 = vpop.f32.mrb[0].mxu0
      %v1685 = vadd.f32 %v1524, %v1684
      %v1686 = vpop.f32.mrb[0].mxu0
      %v1687 = vpop.f32.mrb[0].mxu0
      %v1688 = vadd.f32 %v1527, %v1687
      %v1689 = vpop.f32.mrb[0].mxu0
      %1690 = vmatprep.mubr.bf16.mxu0 0
      %1691 = vmatmul.mubr.bf16.gmra.mrb[0].mxu0 %v671
      %v1692 = vpop.f32.mrb[0].mxu0
      %v1693 = vadd.f32 %v1532, %v1692
      %v1694 = vpop.f32.mrb[0].mxu0
      %v1695 = vpop.f32.mrb[0].mxu0
      %v1696 = vadd.f32 %v1535, %v1695
      %v1697 = vpop.f32.mrb[0].mxu0
      %1698 = vmatprep.mubr.bf16.mxu0 0
      %1699 = vmatmul.mubr.bf16.gmra.mrb[0].mxu0 %v672
      %v1700 = vpop.f32.mrb[0].mxu0
      %v1701 = vadd.f32 %v1540, %v1700
      %v1702 = vpop.f32.mrb[0].mxu0
      %v1703 = vpop.f32.mrb[0].mxu0
      %v1704 = vadd.f32 %v1543, %v1703
      %v1705 = vpop.f32.mrb[0].mxu0
      %1706 = vmatprep.mubr.bf16.mxu0 0
      %1707 = vmatmul.mubr.bf16.gmra.mrb[0].mxu0 %v673
      %v1708 = vpop.f32.mrb[0].mxu0
      %v1709 = vadd.f32 %v1548, %v1708
      %v1710 = vpop.f32.mrb[0].mxu0
      %v1711 = vpop.f32.mrb[0].mxu0
      %v1712 = vadd.f32 %v1551, %v1711
      %v1713 = vpop.f32.mrb[0].mxu0
      %1714 = vdwg.mxu0
      %s1715 = scalar_lea.vmem %s1, 384
      %v1716 = vld [vmem:[%s1715] sm:$0xf]
      %v1717 = vld [vmem:[%s1715 + $0x4] sm:$0xf]
      %v1718 = vld [vmem:[%s1715 + $0x8] sm:$0xf]
      %v1719 = vld [vmem:[%s1715 + $0xc] sm:$0xf]
      %v1720 = vld [vmem:[%s1715 + $0x10] sm:$0xf]
      %v1721 = vld [vmem:[%s1715 + $0x14] sm:$0xf]
      %v1722 = vld [vmem:[%s1715 + $0x18] sm:$0xf]
      %v1723 = vld [vmem:[%s1715 + $0x1c] sm:$0xf]
      %v1724 = vld [vmem:[%s1715 + $0x20] sm:$0xf]
      %v1725 = vld [vmem:[%s1715 + $0x24] sm:$0xf]
      %v1726 = vld [vmem:[%s1715 + $0x28] sm:$0xf]
      %v1727 = vld [vmem:[%s1715 + $0x2c] sm:$0xf]
      %v1728 = vld [vmem:[%s1715 + $0x30] sm:$0xf]
      %v1729 = vld [vmem:[%s1715 + $0x34] sm:$0xf]
      %v1730 = vld [vmem:[%s1715 + $0x38] sm:$0xf]
      %v1731 = vld [vmem:[%s1715 + $0x3c] sm:$0xf]
      %v1732 = vld [vmem:[%s1715 + $0x40] sm:$0xf]
      %v1733 = vld [vmem:[%s1715 + $0x44] sm:$0xf]
      %v1734 = vld [vmem:[%s1715 + $0x48] sm:$0xf]
      %v1735 = vld [vmem:[%s1715 + $0x4c] sm:$0xf]
      %v1736 = vld [vmem:[%s1715 + $0x50] sm:$0xf]
      %v1737 = vld [vmem:[%s1715 + $0x54] sm:$0xf]
      %v1738 = vld [vmem:[%s1715 + $0x58] sm:$0xf]
      %v1739 = vld [vmem:[%s1715 + $0x5c] sm:$0xf]
      %v1740 = vld [vmem:[%s1715 + $0x60] sm:$0xf]
      %v1741 = vld [vmem:[%s1715 + $0x64] sm:$0xf]
      %v1742 = vld [vmem:[%s1715 + $0x68] sm:$0xf]
      %v1743 = vld [vmem:[%s1715 + $0x6c] sm:$0xf]
      %v1744 = vld [vmem:[%s1715 + $0x70] sm:$0xf]
      %v1745 = vld [vmem:[%s1715 + $0x74] sm:$0xf]
      %v1746 = vld [vmem:[%s1715 + $0x78] sm:$0xf]
      %v1747 = vld [vmem:[%s1715 + $0x7c] sm:$0xf]
      %v1748 = vld [vmem:[%s1715 + $0x80] sm:$0xf]
      %v1749 = vld [vmem:[%s1715 + $0x84] sm:$0xf]
      %v1750 = vld [vmem:[%s1715 + $0x88] sm:$0xf]
      %v1751 = vld [vmem:[%s1715 + $0x8c] sm:$0xf]
      %v1752 = vld [vmem:[%s1715 + $0x90] sm:$0xf]
      %v1753 = vld [vmem:[%s1715 + $0x94] sm:$0xf]
      %v1754 = vld [vmem:[%s1715 + $0x98] sm:$0xf]
      %v1755 = vld [vmem:[%s1715 + $0x9c] sm:$0xf]
      %v1756 = vld [vmem:[%s1715 + $0xa0] sm:$0xf]
      %v1757 = vld [vmem:[%s1715 + $0xa4] sm:$0xf]
      %v1758 = vld [vmem:[%s1715 + $0xa8] sm:$0xf]
      %v1759 = vld [vmem:[%s1715 + $0xac] sm:$0xf]
      %v1760 = vld [vmem:[%s1715 + $0xb0] sm:$0xf]
      %v1761 = vld [vmem:[%s1715 + $0xb4] sm:$0xf]
      %v1762 = vld [vmem:[%s1715 + $0xb8] sm:$0xf]
      %v1763 = vld [vmem:[%s1715 + $0xbc] sm:$0xf]
      %v1812 = vunpack.c.l.b16 %v1716
      %v1813 = vunpack.c.l.b16 %v1717
      %v1814 = vunpack.c.l.b16 %v1718
      %v1815 = vunpack.c.l.b16 %v1719
      %v1816 = vunpack.c.l.b16 %v1720
      %v1817 = vunpack.c.l.b16 %v1721
      %v1818 = vunpack.c.l.b16 %v1722
      %v1819 = vunpack.c.l.b16 %v1723
      %v1820 = vunpack.c.l.b16 %v1724
      %v1821 = vunpack.c.l.b16 %v1725
      %v1822 = vunpack.c.l.b16 %v1726
      %v1823 = vunpack.c.l.b16 %v1727
      %v1824 = vunpack.c.l.b16 %v1728
      %v1825 = vunpack.c.l.b16 %v1729
      %v1826 = vunpack.c.l.b16 %v1730
      %v1827 = vunpack.c.l.b16 %v1731
      %v1828 = vunpack.c.l.b16 %v1732
      %v1829 = vunpack.c.l.b16 %v1733
      %v1830 = vunpack.c.l.b16 %v1734
      %v1831 = vunpack.c.l.b16 %v1735
      %v1832 = vunpack.c.l.b16 %v1736
      %v1833 = vunpack.c.l.b16 %v1737
      %v1834 = vunpack.c.l.b16 %v1738
      %v1835 = vunpack.c.l.b16 %v1739
      %v1836 = vunpack.c.l.b16 %v1740
      %v1837 = vunpack.c.l.b16 %v1741
      %v1838 = vunpack.c.l.b16 %v1742
      %v1839 = vunpack.c.l.b16 %v1743
      %v1840 = vunpack.c.l.b16 %v1744
      %v1841 = vunpack.c.l.b16 %v1745
      %v1842 = vunpack.c.l.b16 %v1746
      %v1843 = vunpack.c.l.b16 %v1747
      %v1844 = vunpack.c.l.b16 %v1748
      %v1845 = vunpack.c.l.b16 %v1749
      %v1846 = vunpack.c.l.b16 %v1750
      %v1847 = vunpack.c.l.b16 %v1751
      %v1848 = vunpack.c.l.b16 %v1752
      %v1849 = vunpack.c.l.b16 %v1753
      %v1850 = vunpack.c.l.b16 %v1754
      %v1851 = vunpack.c.l.b16 %v1755
      %v1852 = vunpack.c.l.b16 %v1756
      %v1853 = vunpack.c.l.b16 %v1757
      %v1854 = vunpack.c.l.b16 %v1758
      %v1855 = vunpack.c.l.b16 %v1759
      %v1856 = vunpack.c.l.b16 %v1760
      %v1857 = vunpack.c.l.b16 %v1761
      %v1858 = vunpack.c.l.b16 %v1762
      %v1859 = vunpack.c.l.b16 %v1763
      %v1860 = vpack.c.b16 %v1813, %v1812
      %v1861 = vpack.c.b16 %v1815, %v1814
      %v1862 = vpack.c.b16 %v1817, %v1816
      %v1863 = vpack.c.b16 %v1819, %v1818
      %v1864 = vpack.c.b16 %v1821, %v1820
      %v1865 = vpack.c.b16 %v1823, %v1822
      %v1866 = vpack.c.b16 %v1825, %v1824
      %v1867 = vpack.c.b16 %v1827, %v1826
      %v1868 = vpack.c.b16 %v1829, %v1828
      %v1869 = vpack.c.b16 %v1831, %v1830
      %v1870 = vpack.c.b16 %v1833, %v1832
      %v1871 = vpack.c.b16 %v1835, %v1834
      %v1872 = vpack.c.b16 %v1837, %v1836
      %v1873 = vpack.c.b16 %v1839, %v1838
      %v1874 = vpack.c.b16 %v1841, %v1840
      %v1875 = vpack.c.b16 %v1843, %v1842
      %v1876 = vpack.c.b16 %v1845, %v1844
      %v1877 = vpack.c.b16 %v1847, %v1846
      %v1878 = vpack.c.b16 %v1849, %v1848
      %v1879 = vpack.c.b16 %v1851, %v1850
      %v1880 = vpack.c.b16 %v1853, %v1852
      %v1881 = vpack.c.b16 %v1855, %v1854
      %v1882 = vpack.c.b16 %v1857, %v1856
      %v1883 = vpack.c.b16 %v1859, %v1858
      %1908 = vmatprep.subr.bf16.mxu0 0
      %1909 = vmatpush1.bf16.msra.mxu0 %v1860
      %1910 = vmatprep.subr.bf16.mxu0 0
      %1911 = vmatpush1.bf16.msra.mxu0 %v1861
      %1912 = vmatprep.subr.bf16.mxu0 0
      %1913 = vmatpush1.bf16.msra.mxu0 %v1862
      %1914 = vmatprep.subr.bf16.mxu0 0
      %1915 = vmatpush1.bf16.msra.mxu0 %v1863
      %1916 = vmatprep.subr.bf16.mxu0 0
      %1917 = vmatpush1.bf16.msra.mxu0 %v1864
      %1918 = vmatprep.subr.bf16.mxu0 0
      %1919 = vmatpush1.bf16.msra.mxu0 %v1865
      %1920 = vmatprep.subr.bf16.mxu0 0
      %1921 = vmatpush1.bf16.msra.mxu0 %v1866
      %1922 = vmatprep.subr.bf16.mxu0 0
      %1923 = vmatpush1.bf16.msra.mxu0 %v1867
      %1924 = vmatprep.subr.bf16.mxu0 0
      %1925 = vmatpush1.bf16.msra.mxu0 %v1868
      %1926 = vmatprep.subr.bf16.mxu0 0
      %1927 = vmatpush1.bf16.msra.mxu0 %v1869
      %1928 = vmatprep.subr.bf16.mxu0 0
      %1929 = vmatpush1.bf16.msra.mxu0 %v1870
      %1930 = vmatprep.subr.bf16.mxu0 0
      %1931 = vmatpush1.bf16.msra.mxu0 %v1871
      %1932 = vmatprep.subr.bf16.mxu0 0
      %1933 = vmatpush1.bf16.msra.mxu0 %v1872
      %1934 = vmatprep.subr.bf16.mxu0 0
      %1935 = vmatpush1.bf16.msra.mxu0 %v1873
      %1936 = vmatprep.subr.bf16.mxu0 0
      %1937 = vmatpush1.bf16.msra.mxu0 %v1874
      %1938 = vmatprep.subr.bf16.mxu0 0
      %1939 = vmatpush1.bf16.msra.mxu0 %v1875
      %1940 = vmatprep.mubr.bf16.mxu0 %v348
      %1941 = vmatmul.mubr.bf16.gmra.mrb[0].mxu0 %v495
      %v1942 = vpop.f32.mrb[0].mxu0
      %v1943 = vpop.f32.mrb[0].mxu0
      %v1944 = vpop.f32.mrb[0].mxu0
      %v1945 = vpop.f32.mrb[0].mxu0
      %1946 = vmatprep.mubr.bf16.mxu0 %v349
      %1947 = vmatmul.mubr.bf16.gmra.mrb[0].mxu0 %v496
      %v1948 = vpop.f32.mrb[0].mxu0
      %v1949 = vadd.f32 0.0, %v1948
      %v1950 = vpop.f32.mrb[0].mxu0
      %v1951 = vpop.f32.mrb[0].mxu0
      %v1952 = vadd.f32 0.0, %v1951
      %v1953 = vpop.f32.mrb[0].mxu0
      %1954 = vmatprep.mubr.bf16.mxu0 %v350
      %1955 = vmatmul.mubr.bf16.gmra.mrb[0].mxu0 %v497
      %v1956 = vpop.f32.mrb[0].mxu0
      %v1957 = vadd.f32 0.0, %v1956
      %v1958 = vpop.f32.mrb[0].mxu0
      %v1959 = vpop.f32.mrb[0].mxu0
      %v1960 = vadd.f32 0.0, %v1959
      %v1961 = vpop.f32.mrb[0].mxu0
      %1962 = vmatprep.mubr.bf16.mxu0 %v351
      %1963 = vmatmul.mubr.bf16.gmra.mrb[0].mxu0 %v498
      %v1964 = vpop.f32.mrb[0].mxu0
      %v1965 = vadd.f32 0.0, %v1964
      %v1966 = vpop.f32.mrb[0].mxu0
      %v1967 = vpop.f32.mrb[0].mxu0
      %v1968 = vadd.f32 0.0, %v1967
      %v1969 = vpop.f32.mrb[0].mxu0
      %1970 = vmatprep.mubr.bf16.mxu0 %v352
      %1971 = vmatmul.mubr.bf16.gmra.mrb[0].mxu0 %v499
      %v1972 = vpop.f32.mrb[0].mxu0
      %v1973 = vadd.f32 0.0, %v1972
      %v1974 = vpop.f32.mrb[0].mxu0
      %v1975 = vpop.f32.mrb[0].mxu0
      %v1976 = vadd.f32 0.0, %v1975
      %v1977 = vpop.f32.mrb[0].mxu0
      %1978 = vmatprep.mubr.bf16.mxu0 %v353
      %1979 = vmatmul.mubr.bf16.gmra.mrb[0].mxu0 %v500
      %v1980 = vpop.f32.mrb[0].mxu0
      %v1981 = vadd.f32 0.0, %v1980
      %v1982 = vpop.f32.mrb[0].mxu0
      %v1983 = vpop.f32.mrb[0].mxu0
      %v1984 = vadd.f32 0.0, %v1983
      %v1985 = vpop.f32.mrb[0].mxu0
      %1986 = vmatprep.mubr.bf16.mxu0 %v354
      %1987 = vmatmul.mubr.bf16.gmra.mrb[0].mxu0 %v501
      %v1988 = vpop.f32.mrb[0].mxu0
      %v1989 = vadd.f32 0.0, %v1988
      %v1990 = vpop.f32.mrb[0].mxu0
      %v1991 = vpop.f32.mrb[0].mxu0
      %v1992 = vadd.f32 0.0, %v1991
      %v1993 = vpop.f32.mrb[0].mxu0
      %1994 = vmatprep.mubr.bf16.mxu0 %v355
      %1995 = vmatmul.mubr.bf16.gmra.mrb[0].mxu0 %v502
      %v1996 = vpop.f32.mrb[0].mxu0
      %v1997 = vadd.f32 0.0, %v1996
      %v1998 = vpop.f32.mrb[0].mxu0
      %v1999 = vpop.f32.mrb[0].mxu0
      %v2000 = vadd.f32 0.0, %v1999
      %v2001 = vpop.f32.mrb[0].mxu0
      %2002 = vmatprep.mubr.bf16.mxu0 %v356
      %2003 = vmatmul.mubr.bf16.gmra.mrb[0].mxu0 %v503
      %v2004 = vpop.f32.mrb[0].mxu0
      %v2005 = vadd.f32 0.0, %v2004
      %v2006 = vpop.f32.mrb[0].mxu0
      %v2007 = vpop.f32.mrb[0].mxu0
      %v2008 = vadd.f32 0.0, %v2007
      %v2009 = vpop.f32.mrb[0].mxu0
      %2010 = vmatprep.mubr.bf16.mxu0 %v357
      %2011 = vmatmul.mubr.bf16.gmra.mrb[0].mxu0 %v504
      %v2012 = vpop.f32.mrb[0].mxu0
      %v2013 = vadd.f32 0.0, %v2012
      %v2014 = vpop.f32.mrb[0].mxu0
      %v2015 = vpop.f32.mrb[0].mxu0
      %v2016 = vadd.f32 0.0, %v2015
      %v2017 = vpop.f32.mrb[0].mxu0
      %2018 = vmatprep.mubr.bf16.mxu0 %v358
      %2019 = vmatmul.mubr.bf16.gmra.mrb[0].mxu0 %v505
      %v2020 = vpop.f32.mrb[0].mxu0
      %v2021 = vadd.f32 0.0, %v2020
      %v2022 = vpop.f32.mrb[0].mxu0
      %v2023 = vpop.f32.mrb[0].mxu0
      %v2024 = vadd.f32 0.0, %v2023
      %v2025 = vpop.f32.mrb[0].mxu0
      %2026 = vmatprep.mubr.bf16.mxu0 %v359
      %2027 = vmatmul.mubr.bf16.gmra.mrb[0].mxu0 %v506
      %v2028 = vpop.f32.mrb[0].mxu0
      %v2029 = vadd.f32 0.0, %v2028
      %v2030 = vpop.f32.mrb[0].mxu0
      %v2031 = vpop.f32.mrb[0].mxu0
      %v2032 = vadd.f32 0.0, %v2031
      %v2033 = vpop.f32.mrb[0].mxu0
      %2034 = vmatprep.mubr.bf16.mxu0 %v360
      %2035 = vmatmul.mubr.bf16.gmra.mrb[0].mxu0 %v507
      %v2036 = vpop.f32.mrb[0].mxu0
      %v2037 = vadd.f32 0.0, %v2036
      %v2038 = vpop.f32.mrb[0].mxu0
      %v2039 = vpop.f32.mrb[0].mxu0
      %v2040 = vadd.f32 0.0, %v2039
      %v2041 = vpop.f32.mrb[0].mxu0
      %2042 = vmatprep.mubr.bf16.mxu0 %v361
      %2043 = vmatmul.mubr.bf16.gmra.mrb[0].mxu0 %v508
      %v2044 = vpop.f32.mrb[0].mxu0
      %v2045 = vadd.f32 0.0, %v2044
      %v2046 = vpop.f32.mrb[0].mxu0
      %v2047 = vpop.f32.mrb[0].mxu0
      %v2048 = vadd.f32 0.0, %v2047
      %v2049 = vpop.f32.mrb[0].mxu0
      %2050 = vmatprep.mubr.bf16.mxu0 %v362
      %2051 = vmatmul.mubr.bf16.gmra.mrb[0].mxu0 %v509
      %v2052 = vpop.f32.mrb[0].mxu0
      %v2053 = vadd.f32 0.0, %v2052
      %v2054 = vpop.f32.mrb[0].mxu0
      %v2055 = vpop.f32.mrb[0].mxu0
      %v2056 = vadd.f32 0.0, %v2055
      %v2057 = vpop.f32.mrb[0].mxu0
      %2058 = vmatprep.mubr.bf16.mxu0 %v363
      %2059 = vmatmul.mubr.bf16.gmra.mrb[0].mxu0 %v510
      %v2060 = vpop.f32.mrb[0].mxu0
      %v2061 = vadd.f32 0.0, %v2060
      %v2062 = vpop.f32.mrb[0].mxu0
      %v2063 = vpop.f32.mrb[0].mxu0
      %v2064 = vadd.f32 0.0, %v2063
      %v2065 = vpop.f32.mrb[0].mxu0
      %2066 = vdwg.mxu0
      %2067 = vmatprep.subr.bf16.mxu0 0
      %2068 = vmatpush1.bf16.msra.mxu0 %v1876
      %2069 = vmatprep.subr.bf16.mxu0 0
      %2070 = vmatpush1.bf16.msra.mxu0 %v1877
      %2071 = vmatprep.subr.bf16.mxu0 0
      %2072 = vmatpush1.bf16.msra.mxu0 %v1878
      %2073 = vmatprep.subr.bf16.mxu0 0
      %2074 = vmatpush1.bf16.msra.mxu0 %v1879
      %2075 = vmatprep.subr.bf16.mxu0 0
      %2076 = vmatpush1.bf16.msra.mxu0 %v1880
      %2077 = vmatprep.subr.bf16.mxu0 0
      %2078 = vmatpush1.bf16.msra.mxu0 %v1881
      %2079 = vmatprep.subr.bf16.mxu0 0
      %2080 = vmatpush1.bf16.msra.mxu0 %v1882
      %2081 = vmatprep.subr.bf16.mxu0 0
      %2082 = vmatpush1.bf16.msra.mxu0 %v1883
      %2083 = vmatprep.subr.bf16.mxu0 0
      %2084 = vmatpush1.bf16.msra.mxu0 0
      %2085 = vmatprep.subr.bf16.mxu0 0
      %2086 = vmatpush1.bf16.msra.mxu0 0
      %2087 = vmatprep.subr.bf16.mxu0 0
      %2088 = vmatpush1.bf16.msra.mxu0 0
      %2089 = vmatprep.subr.bf16.mxu0 0
      %2090 = vmatpush1.bf16.msra.mxu0 0
      %2091 = vmatprep.subr.bf16.mxu0 0
      %2092 = vmatpush1.bf16.msra.mxu0 0
      %2093 = vmatprep.subr.bf16.mxu0 0
      %2094 = vmatpush1.bf16.msra.mxu0 0
      %2095 = vmatprep.subr.bf16.mxu0 0
      %2096 = vmatpush1.bf16.msra.mxu0 0
      %2097 = vmatprep.subr.bf16.mxu0 0
      %2098 = vmatpush1.bf16.msra.mxu0 0
      %2099 = vmatprep.mubr.bf16.mxu0 0
      %2100 = vmatmul.mubr.bf16.gmra.mrb[0].mxu0 %v658
      %v2101 = vpop.f32.mrb[0].mxu0
      %v2102 = vpop.f32.mrb[0].mxu0
      %v2103 = vpop.f32.mrb[0].mxu0
      %v2104 = vpop.f32.mrb[0].mxu0
      %2105 = vmatprep.mubr.bf16.mxu0 0
      %2106 = vmatmul.mubr.bf16.gmra.mrb[0].mxu0 %v659
      %v2107 = vpop.f32.mrb[0].mxu0
      %v2108 = vadd.f32 %v1949, %v2107
      %v2109 = vpop.f32.mrb[0].mxu0
      %v2110 = vpop.f32.mrb[0].mxu0
      %v2111 = vadd.f32 %v1952, %v2110
      %v2112 = vpop.f32.mrb[0].mxu0
      %2113 = vmatprep.mubr.bf16.mxu0 0
      %2114 = vmatmul.mubr.bf16.gmra.mrb[0].mxu0 %v660
      %v2115 = vpop.f32.mrb[0].mxu0
      %v2116 = vadd.f32 %v1957, %v2115
      %v2117 = vpop.f32.mrb[0].mxu0
      %v2118 = vpop.f32.mrb[0].mxu0
      %v2119 = vadd.f32 %v1960, %v2118
      %v2120 = vpop.f32.mrb[0].mxu0
      %2121 = vmatprep.mubr.bf16.mxu0 0
      %2122 = vmatmul.mubr.bf16.gmra.mrb[0].mxu0 %v661
      %v2123 = vpop.f32.mrb[0].mxu0
      %v2124 = vadd.f32 %v1965, %v2123
      %v2125 = vpop.f32.mrb[0].mxu0
      %v2126 = vpop.f32.mrb[0].mxu0
      %v2127 = vadd.f32 %v1968, %v2126
      %v2128 = vpop.f32.mrb[0].mxu0
      %2129 = vmatprep.mubr.bf16.mxu0 0
      %2130 = vmatmul.mubr.bf16.gmra.mrb[0].mxu0 %v662
      %v2131 = vpop.f32.mrb[0].mxu0
      %v2132 = vadd.f32 %v1973, %v2131
      %v2133 = vpop.f32.mrb[0].mxu0
      %v2134 = vpop.f32.mrb[0].mxu0
      %v2135 = vadd.f32 %v1976, %v2134
      %v2136 = vpop.f32.mrb[0].mxu0
      %2137 = vmatprep.mubr.bf16.mxu0 0
      %2138 = vmatmul.mubr.bf16.gmra.mrb[0].mxu0 %v663
      %v2139 = vpop.f32.mrb[0].mxu0
      %v2140 = vadd.f32 %v1981, %v2139
      %v2141 = vpop.f32.mrb[0].mxu0
      %v2142 = vpop.f32.mrb[0].mxu0
      %v2143 = vadd.f32 %v1984, %v2142
      %v2144 = vpop.f32.mrb[0].mxu0
      %2145 = vmatprep.mubr.bf16.mxu0 0
      %2146 = vmatmul.mubr.bf16.gmra.mrb[0].mxu0 %v664
      %v2147 = vpop.f32.mrb[0].mxu0
      %v2148 = vadd.f32 %v1989, %v2147
      %v2149 = vpop.f32.mrb[0].mxu0
      %v2150 = vpop.f32.mrb[0].mxu0
      %v2151 = vadd.f32 %v1992, %v2150
      %v2152 = vpop.f32.mrb[0].mxu0
      %2153 = vmatprep.mubr.bf16.mxu0 0
      %2154 = vmatmul.mubr.bf16.gmra.mrb[0].mxu0 %v665
      %v2155 = vpop.f32.mrb[0].mxu0
      %v2156 = vadd.f32 %v1997, %v2155
      %v2157 = vpop.f32.mrb[0].mxu0
      %v2158 = vpop.f32.mrb[0].mxu0
      %v2159 = vadd.f32 %v2000, %v2158
      %v2160 = vpop.f32.mrb[0].mxu0
      %2161 = vmatprep.mubr.bf16.mxu0 0
      %2162 = vmatmul.mubr.bf16.gmra.mrb[0].mxu0 %v666
      %v2163 = vpop.f32.mrb[0].mxu0
      %v2164 = vadd.f32 %v2005, %v2163
      %v2165 = vpop.f32.mrb[0].mxu0
      %v2166 = vpop.f32.mrb[0].mxu0
      %v2167 = vadd.f32 %v2008, %v2166
      %v2168 = vpop.f32.mrb[0].mxu0
      %2169 = vmatprep.mubr.bf16.mxu0 0
      %2170 = vmatmul.mubr.bf16.gmra.mrb[0].mxu0 %v667
      %v2171 = vpop.f32.mrb[0].mxu0
      %v2172 = vadd.f32 %v2013, %v2171
      %v2173 = vpop.f32.mrb[0].mxu0
      %v2174 = vpop.f32.mrb[0].mxu0
      %v2175 = vadd.f32 %v2016, %v2174
      %v2176 = vpop.f32.mrb[0].mxu0
      %2177 = vmatprep.mubr.bf16.mxu0 0
      %2178 = vmatmul.mubr.bf16.gmra.mrb[0].mxu0 %v668
      %v2179 = vpop.f32.mrb[0].mxu0
      %v2180 = vadd.f32 %v2021, %v2179
      %v2181 = vpop.f32.mrb[0].mxu0
      %v2182 = vpop.f32.mrb[0].mxu0
      %v2183 = vadd.f32 %v2024, %v2182
      %v2184 = vpop.f32.mrb[0].mxu0
      %2185 = vmatprep.mubr.bf16.mxu0 0
      %2186 = vmatmul.mubr.bf16.gmra.mrb[0].mxu0 %v669
      %v2187 = vpop.f32.mrb[0].mxu0
      %v2188 = vadd.f32 %v2029, %v2187
      %v2189 = vpop.f32.mrb[0].mxu0
      %v2190 = vpop.f32.mrb[0].mxu0
      %v2191 = vadd.f32 %v2032, %v2190
      %v2192 = vpop.f32.mrb[0].mxu0
      %2193 = vmatprep.mubr.bf16.mxu0 0
      %2194 = vmatmul.mubr.bf16.gmra.mrb[0].mxu0 %v670
      %v2195 = vpop.f32.mrb[0].mxu0
      %v2196 = vadd.f32 %v2037, %v2195
      %v2197 = vpop.f32.mrb[0].mxu0
      %v2198 = vpop.f32.mrb[0].mxu0
      %v2199 = vadd.f32 %v2040, %v2198
      %v2200 = vpop.f32.mrb[0].mxu0
      %2201 = vmatprep.mubr.bf16.mxu0 0
      %2202 = vmatmul.mubr.bf16.gmra.mrb[0].mxu0 %v671
      %v2203 = vpop.f32.mrb[0].mxu0
      %v2204 = vadd.f32 %v2045, %v2203
      %v2205 = vpop.f32.mrb[0].mxu0
      %v2206 = vpop.f32.mrb[0].mxu0
      %v2207 = vadd.f32 %v2048, %v2206
      %v2208 = vpop.f32.mrb[0].mxu0
      %2209 = vmatprep.mubr.bf16.mxu0 0
      %2210 = vmatmul.mubr.bf16.gmra.mrb[0].mxu0 %v672
      %v2211 = vpop.f32.mrb[0].mxu0
      %v2212 = vadd.f32 %v2053, %v2211
      %v2213 = vpop.f32.mrb[0].mxu0
      %v2214 = vpop.f32.mrb[0].mxu0
      %v2215 = vadd.f32 %v2056, %v2214
      %v2216 = vpop.f32.mrb[0].mxu0
      %2217 = vmatprep.mubr.bf16.mxu0 0
      %2218 = vmatmul.mubr.bf16.gmra.mrb[0].mxu0 %v673
      %v2219 = vpop.f32.mrb[0].mxu0
      %v2220 = vadd.f32 %v2061, %v2219
      %v2221 = vpop.f32.mrb[0].mxu0
      %v2222 = vpop.f32.mrb[0].mxu0
      %v2223 = vadd.f32 %v2064, %v2222
      %v2224 = vpop.f32.mrb[0].mxu0
      %2225 = vdwg.mxu0
      %v2226 = vadd.f32 %v1084, %v1589
      %v2227 = vadd.f32 %v1087, %v1592
      %v2228 = vadd.f32 %v1076, %v1597
      %v2229 = vadd.f32 %v1079, %v1600
      %v2230 = vadd.f32 %v1084, %v1605
      %v2231 = vadd.f32 %v1087, %v1608
      %v2232 = vadd.f32 %v1092, %v1613
      %v2233 = vadd.f32 %v1095, %v1616
      %v2234 = vadd.f32 %v1100, %v1621
      %v2235 = vadd.f32 %v1103, %v1624
      %v2236 = vadd.f32 %v1108, %v1629
      %v2237 = vadd.f32 %v1111, %v1632
      %v2238 = vadd.f32 %v1116, %v1637
      %v2239 = vadd.f32 %v1119, %v1640
      %v2240 = vadd.f32 %v1124, %v1645
      %v2241 = vadd.f32 %v1127, %v1648
      %v2242 = vadd.f32 %v1132, %v1653
      %v2243 = vadd.f32 %v1135, %v1656
      %v2244 = vadd.f32 %v1140, %v1661
      %v2245 = vadd.f32 %v1143, %v1664
      %v2246 = vadd.f32 %v1148, %v1669
      %v2247 = vadd.f32 %v1151, %v1672
      %v2248 = vadd.f32 %v1156, %v1677
      %v2249 = vadd.f32 %v1159, %v1680
      %v2250 = vadd.f32 %v1164, %v1685
      %v2251 = vadd.f32 %v1167, %v1688
      %v2252 = vadd.f32 %v1172, %v1693
      %v2253 = vadd.f32 %v1175, %v1696
      %v2254 = vadd.f32 %v1180, %v1701
      %v2255 = vadd.f32 %v1183, %v1704
      %v2256 = vadd.f32 %v1188, %v1709
      %v2257 = vadd.f32 %v1191, %v1712
      %v2258 = vadd.f32 %v2226, %v2108
      %v2259 = vadd.f32 %v2227, %v2111
      %v2260 = vadd.f32 %v2228, %v2116
      %v2261 = vadd.f32 %v2229, %v2119
      %v2262 = vadd.f32 %v2230, %v2124
      %v2263 = vadd.f32 %v2231, %v2127
      %v2264 = vadd.f32 %v2232, %v2132
      %v2265 = vadd.f32 %v2233, %v2135
      %v2266 = vadd.f32 %v2234, %v2140
      %v2267 = vadd.f32 %v2235, %v2143
      %v2268 = vadd.f32 %v2236, %v2148
      %v2269 = vadd.f32 %v2237, %v2151
      %v2270 = vadd.f32 %v2238, %v2156
      %v2271 = vadd.f32 %v2239, %v2159
      %v2272 = vadd.f32 %v2240, %v2164
      %v2273 = vadd.f32 %v2241, %v2167
      %v2274 = vadd.f32 %v2242, %v2172
      %v2275 = vadd.f32 %v2243, %v2175
      %v2276 = vadd.f32 %v2244, %v2180
      %v2277 = vadd.f32 %v2245, %v2183
      %v2278 = vadd.f32 %v2246, %v2188
      %v2279 = vadd.f32 %v2247, %v2191
      %v2280 = vadd.f32 %v2248, %v2196
      %v2281 = vadd.f32 %v2249, %v2199
      %v2282 = vadd.f32 %v2250, %v2204
      %v2283 = vadd.f32 %v2251, %v2207
      %v2284 = vadd.f32 %v2252, %v2212
      %v2285 = vadd.f32 %v2253, %v2215
      %v2286 = vadd.f32 %v2254, %v2220
      %v2287 = vadd.f32 %v2255, %v2223
      %v2288 = vadd.f32 %v2256, %v2212
      %v2289 = vadd.f32 %v2257, %v2215
      %v2290 = vadd.f32 %v2258, %v2259
      %v2291 = vadd.f32 %v2290, %v2260
      %v2292 = vadd.f32 %v2291, %v2261
      %v2293 = vadd.f32 %v2292, %v2262
      %v2294 = vadd.f32 %v2293, %v2263
      %v2295 = vadd.f32 %v2294, %v2264
      %v2296 = vadd.f32 %v2295, %v2265
      %v2297 = vadd.f32 %v2296, %v2266
      %v2298 = vadd.f32 %v2297, %v2267
      %v2299 = vadd.f32 %v2298, %v2268
      %v2300 = vadd.f32 %v2299, %v2269
      %v2301 = vadd.f32 %v2300, %v2270
      %v2302 = vadd.f32 %v2301, %v2271
      %v2303 = vadd.f32 %v2302, %v2272
      %v2304 = vadd.f32 %v2303, %v2273
      %v2305 = vadd.f32 %v2304, %v2274
      %v2306 = vadd.f32 %v2305, %v2275
      %v2307 = vadd.f32 %v2306, %v2276
      %v2308 = vadd.f32 %v2307, %v2277
      %v2309 = vadd.f32 %v2308, %v2278
      %v2310 = vadd.f32 %v2309, %v2279
      %v2311 = vadd.f32 %v2310, %v2280
      %v2312 = vadd.f32 %v2311, %v2281
      %v2313 = vadd.f32 %v2312, %v2282
      %v2314 = vadd.f32 %v2313, %v2283
      %v2315 = vadd.f32 %v2314, %v2284
      %v2316 = vadd.f32 %v2315, %v2285
      %v2317 = vadd.f32 %v2316, %v2286
      %v2318 = vadd.f32 %v2317, %v2287
      %v2319 = vadd.f32 %v2318, %v2288
      %v2320 = vadd.f32 %v2319, %v2289
      %v2321 = vrot.slane %v2320, 4
      %v2322 = vadd.f32 %v2320, %v2321
      %v2323 = vrot.slane %v2322, 2
      %v2324 = vadd.f32 %v2322, %v2323
      %v2325 = vrot.slane %v2324, 1
      %v2326 = vadd.f32 %v2324, %v2325
      %v2327 = vmul.f32 %v2326, 0.00390625
      %v2328 = vmul.f32 %v2258, %v2258
      %v2329 = vmul.f32 %v2259, %v2259
      %v2330 = vmul.f32 %v2260, %v2260
      %v2331 = vmul.f32 %v2261, %v2261
      %v2332 = vmul.f32 %v2262, %v2262
      %v2333 = vmul.f32 %v2263, %v2263
      %v2334 = vmul.f32 %v2264, %v2264
      %v2335 = vmul.f32 %v2265, %v2265
      %v2336 = vmul.f32 %v2266, %v2266
      %v2337 = vmul.f32 %v2267, %v2267
      %v2338 = vmul.f32 %v2268, %v2268
      %v2339 = vmul.f32 %v2269, %v2269
      %v2340 = vmul.f32 %v2270, %v2270
      %v2341 = vmul.f32 %v2271, %v2271
      %v2342 = vmul.f32 %v2272, %v2272
      %v2343 = vmul.f32 %v2273, %v2273
      %v2344 = vmul.f32 %v2274, %v2274
      %v2345 = vmul.f32 %v2275, %v2275
      %v2346 = vmul.f32 %v2276, %v2276
      %v2347 = vmul.f32 %v2277, %v2277
      %v2348 = vmul.f32 %v2278, %v2278
      %v2349 = vmul.f32 %v2279, %v2279
      %v2350 = vmul.f32 %v2280, %v2280
      %v2351 = vmul.f32 %v2281, %v2281
      %v2352 = vmul.f32 %v2282, %v2282
      %v2353 = vmul.f32 %v2283, %v2283
      %v2354 = vmul.f32 %v2284, %v2284
      %v2355 = vmul.f32 %v2285, %v2285
      %v2356 = vmul.f32 %v2286, %v2286
      %v2357 = vmul.f32 %v2287, %v2287
      %v2358 = vmul.f32 %v2288, %v2288
      %v2359 = vmul.f32 %v2289, %v2289
      %v2360 = vadd.f32 %v2328, %v2329
      %v2361 = vadd.f32 %v2360, %v2330
      %v2362 = vadd.f32 %v2361, %v2331
      %v2363 = vadd.f32 %v2362, %v2332
      %v2364 = vadd.f32 %v2363, %v2333
      %v2365 = vadd.f32 %v2364, %v2334
      %v2366 = vadd.f32 %v2365, %v2335
      %v2367 = vadd.f32 %v2366, %v2336
      %v2368 = vadd.f32 %v2367, %v2337
      %v2369 = vadd.f32 %v2368, %v2338
      %v2370 = vadd.f32 %v2369, %v2339
      %v2371 = vadd.f32 %v2370, %v2340
      %v2372 = vadd.f32 %v2371, %v2341
      %v2373 = vadd.f32 %v2372, %v2342
      %v2374 = vadd.f32 %v2373, %v2343
      %v2375 = vadd.f32 %v2374, %v2344
      %v2376 = vadd.f32 %v2375, %v2345
      %v2377 = vadd.f32 %v2376, %v2346
      %v2378 = vadd.f32 %v2377, %v2347
      %v2379 = vadd.f32 %v2378, %v2348
      %v2380 = vadd.f32 %v2379, %v2349
      %v2381 = vadd.f32 %v2380, %v2350
      %v2382 = vadd.f32 %v2381, %v2351
      %v2383 = vadd.f32 %v2382, %v2352
      %v2384 = vadd.f32 %v2383, %v2353
      %v2385 = vadd.f32 %v2384, %v2354
      %v2386 = vadd.f32 %v2385, %v2355
      %v2387 = vadd.f32 %v2386, %v2356
      %v2388 = vadd.f32 %v2387, %v2357
      %v2389 = vadd.f32 %v2388, %v2358
      %v2390 = vadd.f32 %v2389, %v2359
      %v2391 = vrot.slane %v2390, 4
      %v2392 = vadd.f32 %v2390, %v2391
      %v2393 = vrot.slane %v2392, 2
      %v2394 = vadd.f32 %v2392, %v2393
      %v2395 = vrot.slane %v2394, 1
      %v2396 = vadd.f32 %v2394, %v2395
      %v2397 = vmul.f32 %v2396, 0.00390625
      %v2398 = vmul.f32 %v2327, %v2327
      %v2399 = vsub.f32 %v2397, %v2398
      %v2400 = vadd.f32 %v2399, 1e-05
      %v2401 = vrsqrt.pop %v2400
      %v2402 = vsub.f32 %v2258, %v2327
      %v2403 = vsub.f32 %v2259, %v2327
      %v2404 = vsub.f32 %v2260, %v2327
      %v2405 = vsub.f32 %v2261, %v2327
      %v2406 = vsub.f32 %v2262, %v2327
      %v2407 = vsub.f32 %v2263, %v2327
      %v2408 = vsub.f32 %v2264, %v2327
      %v2409 = vsub.f32 %v2265, %v2327
      %v2410 = vsub.f32 %v2266, %v2327
      %v2411 = vsub.f32 %v2267, %v2327
      %v2412 = vsub.f32 %v2268, %v2327
      %v2413 = vsub.f32 %v2269, %v2327
      %v2414 = vsub.f32 %v2270, %v2327
      %v2415 = vsub.f32 %v2271, %v2327
      %v2416 = vsub.f32 %v2272, %v2327
      %v2417 = vsub.f32 %v2273, %v2327
      %v2418 = vsub.f32 %v2274, %v2327
      %v2419 = vsub.f32 %v2275, %v2327
      %v2420 = vsub.f32 %v2276, %v2327
      %v2421 = vsub.f32 %v2277, %v2327
      %v2422 = vsub.f32 %v2278, %v2327
      %v2423 = vsub.f32 %v2279, %v2327
      %v2424 = vsub.f32 %v2280, %v2327
      %v2425 = vsub.f32 %v2281, %v2327
      %v2426 = vsub.f32 %v2282, %v2327
      %v2427 = vsub.f32 %v2283, %v2327
      %v2428 = vsub.f32 %v2284, %v2327
      %v2429 = vsub.f32 %v2285, %v2327
      %v2430 = vsub.f32 %v2286, %v2327
      %v2431 = vsub.f32 %v2287, %v2327
      %v2432 = vsub.f32 %v2288, %v2327
      %v2433 = vsub.f32 %v2289, %v2327
      %v2434 = vmul.f32 %v2402, %v2401
      %v2435 = vmul.f32 %v2403, %v2401
      %v2436 = vmul.f32 %v2404, %v2401
      %v2437 = vmul.f32 %v2405, %v2401
      %v2438 = vmul.f32 %v2406, %v2401
      %v2439 = vmul.f32 %v2407, %v2401
      %v2440 = vmul.f32 %v2408, %v2401
      %v2441 = vmul.f32 %v2409, %v2401
      %v2442 = vmul.f32 %v2410, %v2401
      %v2443 = vmul.f32 %v2411, %v2401
      %v2444 = vmul.f32 %v2412, %v2401
      %v2445 = vmul.f32 %v2413, %v2401
      %v2446 = vmul.f32 %v2414, %v2401
      %v2447 = vmul.f32 %v2415, %v2401
      %v2448 = vmul.f32 %v2416, %v2401
      %v2449 = vmul.f32 %v2417, %v2401
      %v2450 = vmul.f32 %v2418, %v2401
      %v2451 = vmul.f32 %v2419, %v2401
      %v2452 = vmul.f32 %v2420, %v2401
      %v2453 = vmul.f32 %v2421, %v2401
      %v2454 = vmul.f32 %v2422, %v2401
      %v2455 = vmul.f32 %v2423, %v2401
      %v2456 = vmul.f32 %v2424, %v2401
      %v2457 = vmul.f32 %v2425, %v2401
      %v2458 = vmul.f32 %v2426, %v2401
      %v2459 = vmul.f32 %v2427, %v2401
      %v2460 = vmul.f32 %v2428, %v2401
      %v2461 = vmul.f32 %v2429, %v2401
      %v2462 = vmul.f32 %v2430, %v2401
      %v2463 = vmul.f32 %v2431, %v2401
      %v2464 = vmul.f32 %v2432, %v2401
      %v2465 = vmul.f32 %v2433, %v2401
      %v2466 = vmax.f32 %v2434, 0.0
      %v2467 = vmax.f32 %v2435, 0.0
      %v2468 = vmax.f32 %v2436, 0.0
      %v2469 = vmax.f32 %v2437, 0.0
      %v2470 = vmax.f32 %v2438, 0.0
      %v2471 = vmax.f32 %v2439, 0.0
      %v2472 = vmax.f32 %v2440, 0.0
      %v2473 = vmax.f32 %v2441, 0.0
      %v2474 = vmax.f32 %v2442, 0.0
      %v2475 = vmax.f32 %v2443, 0.0
      %v2476 = vmax.f32 %v2444, 0.0
      %v2477 = vmax.f32 %v2445, 0.0
      %v2478 = vmax.f32 %v2446, 0.0
      %v2479 = vmax.f32 %v2447, 0.0
      %v2480 = vmax.f32 %v2448, 0.0
      %v2481 = vmax.f32 %v2449, 0.0
      %v2482 = vmax.f32 %v2450, 0.0
      %v2483 = vmax.f32 %v2451, 0.0
      %v2484 = vmax.f32 %v2452, 0.0
      %v2485 = vmax.f32 %v2453, 0.0
      %v2486 = vmax.f32 %v2454, 0.0
      %v2487 = vmax.f32 %v2455, 0.0
      %v2488 = vmax.f32 %v2456, 0.0
      %v2489 = vmax.f32 %v2457, 0.0
      %v2490 = vmax.f32 %v2458, 0.0
      %v2491 = vmax.f32 %v2459, 0.0
      %v2492 = vmax.f32 %v2460, 0.0
      %v2493 = vmax.f32 %v2461, 0.0
      %v2494 = vmax.f32 %v2462, 0.0
      %v2495 = vmax.f32 %v2463, 0.0
      %v2496 = vmax.f32 %v2464, 0.0
      %v2497 = vmax.f32 %v2465, 0.0
      %v2498 = vpack.c.bf16 %v2467, %v2466
      %v2499 = vpack.c.bf16 %v2469, %v2468
      %v2500 = vpack.c.bf16 %v2471, %v2470
      %v2501 = vpack.c.bf16 %v2473, %v2472
      %v2502 = vpack.c.bf16 %v2475, %v2474
      %v2503 = vpack.c.bf16 %v2477, %v2476
      %v2504 = vpack.c.bf16 %v2479, %v2478
      %v2505 = vpack.c.bf16 %v2481, %v2480
      %v2506 = vpack.c.bf16 %v2483, %v2482
      %v2507 = vpack.c.bf16 %v2485, %v2484
      %v2508 = vpack.c.bf16 %v2487, %v2486
      %v2509 = vpack.c.bf16 %v2489, %v2488
      %v2510 = vpack.c.bf16 %v2491, %v2490
      %v2511 = vpack.c.bf16 %v2493, %v2492
      %v2512 = vpack.c.bf16 %v2495, %v2494
      %v2513 = vpack.c.bf16 %v2497, %v2496
      %v2515 = vshrl.u32 %v2498, 16
      %v2518 = vshrl.u32 %v2499, 16
      %v2521 = vshrl.u32 %v2500, 16
      %v2524 = vshrl.u32 %v2501, 16
      %v2527 = vshrl.u32 %v2502, 16
      %v2530 = vshrl.u32 %v2503, 16
      %v2533 = vshrl.u32 %v2504, 16
      %v2536 = vshrl.u32 %v2505, 16
      %v2539 = vshrl.u32 %v2506, 16
      %v2542 = vshrl.u32 %v2507, 16
      %v2545 = vshrl.u32 %v2508, 16
      %v2548 = vshrl.u32 %v2509, 16
      %v2551 = vshrl.u32 %v2510, 16
      %v2554 = vshrl.u32 %v2511, 16
      %v2557 = vshrl.u32 %v2512, 16
      %v2560 = vshrl.u32 %v2513, 16
      %v2578 = vrot.slane %v2515, 7
      %v2579 = vshll.u32 %v2498, 16
      %v2581 = vor.u32 %v2578, %v2579
      %v2582 = vrot.slane %v2518, 7
      %v2583 = vshll.u32 %v2499, 16
      %v2585 = vor.u32 %v2582, %v2583
      %v2586 = vrot.slane %v2521, 7
      %v2587 = vshll.u32 %v2500, 16
      %v2589 = vor.u32 %v2586, %v2587
      %v2590 = vrot.slane %v2524, 7
      %v2591 = vshll.u32 %v2501, 16
      %v2593 = vor.u32 %v2590, %v2591
      %v2594 = vrot.slane %v2527, 7
      %v2595 = vshll.u32 %v2502, 16
      %v2597 = vor.u32 %v2594, %v2595
      %v2598 = vrot.slane %v2530, 7
      %v2599 = vshll.u32 %v2503, 16
      %v2601 = vor.u32 %v2598, %v2599
      %v2602 = vrot.slane %v2533, 7
      %v2603 = vshll.u32 %v2504, 16
      %v2605 = vor.u32 %v2602, %v2603
      %v2606 = vrot.slane %v2536, 7
      %v2607 = vshll.u32 %v2505, 16
      %v2609 = vor.u32 %v2606, %v2607
      %v2610 = vrot.slane %v2539, 7
      %v2611 = vshll.u32 %v2506, 16
      %v2613 = vor.u32 %v2610, %v2611
      %v2614 = vrot.slane %v2542, 7
      %v2615 = vshll.u32 %v2507, 16
      %v2617 = vor.u32 %v2614, %v2615
      %v2618 = vrot.slane %v2545, 7
      %v2619 = vshll.u32 %v2508, 16
      %v2621 = vor.u32 %v2618, %v2619
      %v2622 = vrot.slane %v2548, 7
      %v2623 = vshll.u32 %v2509, 16
      %v2625 = vor.u32 %v2622, %v2623
      %v2626 = vrot.slane %v2551, 7
      %v2627 = vshll.u32 %v2510, 16
      %v2629 = vor.u32 %v2626, %v2627
      %v2630 = vrot.slane %v2554, 7
      %v2631 = vshll.u32 %v2511, 16
      %v2633 = vor.u32 %v2630, %v2631
      %v2634 = vrot.slane %v2557, 7
      %v2635 = vshll.u32 %v2512, 16
      %v2637 = vor.u32 %v2634, %v2635
      %v2638 = vrot.slane %v2560, 7
      %v2639 = vshll.u32 %v2513, 16
      %v2641 = vor.u32 %v2638, %v2639
      %v2658 = vsel %vm494, %v2515, %v2581
      %v2659 = vsel %vm494, %v2518, %v2585
      %v2660 = vsel %vm494, %v2521, %v2589
      %v2661 = vsel %vm494, %v2524, %v2593
      %v2662 = vsel %vm494, %v2527, %v2597
      %v2663 = vsel %vm494, %v2530, %v2601
      %v2664 = vsel %vm494, %v2533, %v2605
      %v2665 = vsel %vm494, %v2536, %v2609
      %v2666 = vsel %vm494, %v2539, %v2613
      %v2667 = vsel %vm494, %v2542, %v2617
      %v2668 = vsel %vm494, %v2545, %v2621
      %v2669 = vsel %vm494, %v2548, %v2625
      %v2670 = vsel %vm494, %v2551, %v2629
      %v2671 = vsel %vm494, %v2554, %v2633
      %v2672 = vsel %vm494, %v2557, %v2637
      %v2673 = vsel %vm494, %v2560, %v2641
      %v2674 = vrot.slane %v2579, 1
      %v2675 = vor.u32 %v2515, %v2674
      %v2676 = vrot.slane %v2583, 1
      %v2677 = vor.u32 %v2518, %v2676
      %v2678 = vrot.slane %v2587, 1
      %v2679 = vor.u32 %v2521, %v2678
      %v2680 = vrot.slane %v2591, 1
      %v2681 = vor.u32 %v2524, %v2680
      %v2682 = vrot.slane %v2595, 1
      %v2683 = vor.u32 %v2527, %v2682
      %v2684 = vrot.slane %v2599, 1
      %v2685 = vor.u32 %v2530, %v2684
      %v2686 = vrot.slane %v2603, 1
      %v2687 = vor.u32 %v2533, %v2686
      %v2688 = vrot.slane %v2607, 1
      %v2689 = vor.u32 %v2536, %v2688
      %v2690 = vrot.slane %v2611, 1
      %v2691 = vor.u32 %v2539, %v2690
      %v2692 = vrot.slane %v2615, 1
      %v2693 = vor.u32 %v2542, %v2692
      %v2694 = vrot.slane %v2619, 1
      %v2695 = vor.u32 %v2545, %v2694
      %v2696 = vrot.slane %v2623, 1
      %v2697 = vor.u32 %v2548, %v2696
      %v2698 = vrot.slane %v2627, 1
      %v2699 = vor.u32 %v2551, %v2698
      %v2700 = vrot.slane %v2631, 1
      %v2701 = vor.u32 %v2554, %v2700
      %v2702 = vrot.slane %v2635, 1
      %v2703 = vor.u32 %v2557, %v2702
      %v2704 = vrot.slane %v2639, 1
      %v2705 = vor.u32 %v2560, %v2704
      %v2738 = vsel %vm657, %v2675, %v2579
      %v2739 = vsel %vm657, %v2677, %v2583
      %v2740 = vsel %vm657, %v2679, %v2587
      %v2741 = vsel %vm657, %v2681, %v2591
      %v2742 = vsel %vm657, %v2683, %v2595
      %v2743 = vsel %vm657, %v2685, %v2599
      %v2744 = vsel %vm657, %v2687, %v2603
      %v2745 = vsel %vm657, %v2689, %v2607
      %v2746 = vsel %vm657, %v2691, %v2611
      %v2747 = vsel %vm657, %v2693, %v2615
      %v2748 = vsel %vm657, %v2695, %v2619
      %v2749 = vsel %vm657, %v2697, %v2623
      %v2750 = vsel %vm657, %v2699, %v2627
      %v2751 = vsel %vm657, %v2701, %v2631
      %v2752 = vsel %vm657, %v2703, %v2635
      %v2753 = vsel %vm657, %v2705, %v2639
      %v2754 = vld [vmem:[%s2] sm:$0xf]
      %v2755 = vld [vmem:[%s2 + $0x4] sm:$0xf]
      %v2756 = vld [vmem:[%s2 + $0x8] sm:$0xf]
      %v2757 = vld [vmem:[%s2 + $0xc] sm:$0xf]
      %v2758 = vld [vmem:[%s2 + $0x10] sm:$0xf]
      %v2759 = vld [vmem:[%s2 + $0x14] sm:$0xf]
      %v2760 = vld [vmem:[%s2 + $0x18] sm:$0xf]
      %v2761 = vld [vmem:[%s2 + $0x1c] sm:$0xf]
      %v2762 = vld [vmem:[%s2 + $0x20] sm:$0xf]
      %v2763 = vld [vmem:[%s2 + $0x24] sm:$0xf]
      %v2764 = vld [vmem:[%s2 + $0x28] sm:$0xf]
      %v2765 = vld [vmem:[%s2 + $0x2c] sm:$0xf]
      %v2766 = vld [vmem:[%s2 + $0x30] sm:$0xf]
      %v2767 = vld [vmem:[%s2 + $0x34] sm:$0xf]
      %v2768 = vld [vmem:[%s2 + $0x38] sm:$0xf]
      %v2769 = vld [vmem:[%s2 + $0x3c] sm:$0xf]
      %v2770 = vld [vmem:[%s2 + $0x40] sm:$0xf]
      %v2771 = vld [vmem:[%s2 + $0x44] sm:$0xf]
      %v2772 = vld [vmem:[%s2 + $0x48] sm:$0xf]
      %v2773 = vld [vmem:[%s2 + $0x4c] sm:$0xf]
      %v2774 = vld [vmem:[%s2 + $0x50] sm:$0xf]
      %v2775 = vld [vmem:[%s2 + $0x54] sm:$0xf]
      %v2776 = vld [vmem:[%s2 + $0x58] sm:$0xf]
      %v2777 = vld [vmem:[%s2 + $0x5c] sm:$0xf]
      %v2778 = vld [vmem:[%s2 + $0x60] sm:$0xf]
      %v2779 = vld [vmem:[%s2 + $0x64] sm:$0xf]
      %v2780 = vld [vmem:[%s2 + $0x68] sm:$0xf]
      %v2781 = vld [vmem:[%s2 + $0x6c] sm:$0xf]
      %v2782 = vld [vmem:[%s2 + $0x70] sm:$0xf]
      %v2783 = vld [vmem:[%s2 + $0x74] sm:$0xf]
      %v2784 = vld [vmem:[%s2 + $0x78] sm:$0xf]
      %v2785 = vld [vmem:[%s2 + $0x7c] sm:$0xf]
      %v2786 = vld [vmem:[%s2 + $0x80] sm:$0xf]
      %v2787 = vld [vmem:[%s2 + $0x84] sm:$0xf]
      %v2788 = vld [vmem:[%s2 + $0x88] sm:$0xf]
      %v2789 = vld [vmem:[%s2 + $0x8c] sm:$0xf]
      %v2790 = vld [vmem:[%s2 + $0x90] sm:$0xf]
      %v2791 = vld [vmem:[%s2 + $0x94] sm:$0xf]
      %v2792 = vld [vmem:[%s2 + $0x98] sm:$0xf]
      %v2793 = vld [vmem:[%s2 + $0x9c] sm:$0xf]
      %v2794 = vld [vmem:[%s2 + $0xa0] sm:$0xf]
      %v2795 = vld [vmem:[%s2 + $0xa4] sm:$0xf]
      %v2796 = vld [vmem:[%s2 + $0xa8] sm:$0xf]
      %v2797 = vld [vmem:[%s2 + $0xac] sm:$0xf]
      %v2798 = vld [vmem:[%s2 + $0xb0] sm:$0xf]
      %v2799 = vld [vmem:[%s2 + $0xb4] sm:$0xf]
      %v2800 = vld [vmem:[%s2 + $0xb8] sm:$0xf]
      %v2801 = vld [vmem:[%s2 + $0xbc] sm:$0xf]
      %v2850 = vunpack.c.l.b16 %v2754
      %v2851 = vunpack.c.l.b16 %v2755
      %v2852 = vunpack.c.l.b16 %v2756
      %v2853 = vunpack.c.l.b16 %v2757
      %v2854 = vunpack.c.l.b16 %v2758
      %v2855 = vunpack.c.l.b16 %v2759
      %v2856 = vunpack.c.l.b16 %v2760
      %v2857 = vunpack.c.l.b16 %v2761
      %v2858 = vunpack.c.l.b16 %v2762
      %v2859 = vunpack.c.l.b16 %v2763
      %v2860 = vunpack.c.l.b16 %v2764
      %v2861 = vunpack.c.l.b16 %v2765
      %v2862 = vunpack.c.l.b16 %v2766
      %v2863 = vunpack.c.l.b16 %v2767
      %v2864 = vunpack.c.l.b16 %v2768
      %v2865 = vunpack.c.l.b16 %v2769
      %v2866 = vunpack.c.l.b16 %v2770
      %v2867 = vunpack.c.l.b16 %v2771
      %v2868 = vunpack.c.l.b16 %v2772
      %v2869 = vunpack.c.l.b16 %v2773
      %v2870 = vunpack.c.l.b16 %v2774
      %v2871 = vunpack.c.l.b16 %v2775
      %v2872 = vunpack.c.l.b16 %v2776
      %v2873 = vunpack.c.l.b16 %v2777
      %v2874 = vunpack.c.l.b16 %v2778
      %v2875 = vunpack.c.l.b16 %v2779
      %v2876 = vunpack.c.l.b16 %v2780
      %v2877 = vunpack.c.l.b16 %v2781
      %v2878 = vunpack.c.l.b16 %v2782
      %v2879 = vunpack.c.l.b16 %v2783
      %v2880 = vunpack.c.l.b16 %v2784
      %v2881 = vunpack.c.l.b16 %v2785
      %v2882 = vunpack.c.l.b16 %v2786
      %v2883 = vunpack.c.l.b16 %v2787
      %v2884 = vunpack.c.l.b16 %v2788
      %v2885 = vunpack.c.l.b16 %v2789
      %v2886 = vunpack.c.l.b16 %v2790
      %v2887 = vunpack.c.l.b16 %v2791
      %v2888 = vunpack.c.l.b16 %v2792
      %v2889 = vunpack.c.l.b16 %v2793
      %v2890 = vunpack.c.l.b16 %v2794
      %v2891 = vunpack.c.l.b16 %v2795
      %v2892 = vunpack.c.l.b16 %v2796
      %v2893 = vunpack.c.l.b16 %v2797
      %v2894 = vunpack.c.l.b16 %v2798
      %v2895 = vunpack.c.l.b16 %v2799
      %v2896 = vunpack.c.l.b16 %v2800
      %v2897 = vunpack.c.l.b16 %v2801
      %v2898 = vpack.c.b16 %v2851, %v2850
      %v2899 = vpack.c.b16 %v2853, %v2852
      %v2900 = vpack.c.b16 %v2855, %v2854
      %v2901 = vpack.c.b16 %v2857, %v2856
      %v2902 = vpack.c.b16 %v2859, %v2858
      %v2903 = vpack.c.b16 %v2861, %v2860
      %v2904 = vpack.c.b16 %v2863, %v2862
      %v2905 = vpack.c.b16 %v2865, %v2864
      %v2906 = vpack.c.b16 %v2867, %v2866
      %v2907 = vpack.c.b16 %v2869, %v2868
      %v2908 = vpack.c.b16 %v2871, %v2870
      %v2909 = vpack.c.b16 %v2873, %v2872
      %v2910 = vpack.c.b16 %v2875, %v2874
      %v2911 = vpack.c.b16 %v2877, %v2876
      %v2912 = vpack.c.b16 %v2879, %v2878
      %v2913 = vpack.c.b16 %v2881, %v2880
      %v2914 = vpack.c.b16 %v2883, %v2882
      %v2915 = vpack.c.b16 %v2885, %v2884
      %v2916 = vpack.c.b16 %v2887, %v2886
      %v2917 = vpack.c.b16 %v2889, %v2888
      %v2918 = vpack.c.b16 %v2891, %v2890
      %v2919 = vpack.c.b16 %v2893, %v2892
      %v2920 = vpack.c.b16 %v2895, %v2894
      %v2921 = vpack.c.b16 %v2897, %v2896
      %2946 = vmatprep.subr.bf16.mxu0 0
      %2947 = vmatpush1.bf16.msra.mxu0 %v2898
      %2948 = vmatprep.subr.bf16.mxu0 0
      %2949 = vmatpush1.bf16.msra.mxu0 %v2899
      %2950 = vmatprep.subr.bf16.mxu0 0
      %2951 = vmatpush1.bf16.msra.mxu0 %v2900
      %2952 = vmatprep.subr.bf16.mxu0 0
      %2953 = vmatpush1.bf16.msra.mxu0 %v2901
      %2954 = vmatprep.subr.bf16.mxu0 0
      %2955 = vmatpush1.bf16.msra.mxu0 %v2902
      %2956 = vmatprep.subr.bf16.mxu0 0
      %2957 = vmatpush1.bf16.msra.mxu0 %v2903
      %2958 = vmatprep.subr.bf16.mxu0 0
      %2959 = vmatpush1.bf16.msra.mxu0 %v2904
      %2960 = vmatprep.subr.bf16.mxu0 0
      %2961 = vmatpush1.bf16.msra.mxu0 %v2905
      %2962 = vmatprep.subr.bf16.mxu0 0
      %2963 = vmatpush1.bf16.msra.mxu0 %v2906
      %2964 = vmatprep.subr.bf16.mxu0 0
      %2965 = vmatpush1.bf16.msra.mxu0 %v2907
      %2966 = vmatprep.subr.bf16.mxu0 0
      %2967 = vmatpush1.bf16.msra.mxu0 %v2908
      %2968 = vmatprep.subr.bf16.mxu0 0
      %2969 = vmatpush1.bf16.msra.mxu0 %v2909
      %2970 = vmatprep.subr.bf16.mxu0 0
      %2971 = vmatpush1.bf16.msra.mxu0 %v2910
      %2972 = vmatprep.subr.bf16.mxu0 0
      %2973 = vmatpush1.bf16.msra.mxu0 %v2911
      %2974 = vmatprep.subr.bf16.mxu0 0
      %2975 = vmatpush1.bf16.msra.mxu0 %v2912
      %2976 = vmatprep.subr.bf16.mxu0 0
      %2977 = vmatpush1.bf16.msra.mxu0 %v2913
      %2978 = vmatprep.mubr.bf16.mxu0 %v2498
      %2979 = vmatmul.mubr.bf16.gmra.mrb[0].mxu0 %v2658
      %v2980 = vpop.f32.mrb[0].mxu0
      %v2981 = vadd.f32 0.0, %v2980
      %v2982 = vpop.f32.mrb[0].mxu0
      %v2983 = vpop.f32.mrb[0].mxu0
      %v2984 = vadd.f32 0.0, %v2983
      %v2985 = vpop.f32.mrb[0].mxu0
      %2986 = vmatprep.mubr.bf16.mxu0 %v2499
      %2987 = vmatmul.mubr.bf16.gmra.mrb[0].mxu0 %v2659
      %v2988 = vpop.f32.mrb[0].mxu0
      %v2989 = vadd.f32 0.0, %v2988
      %v2990 = vpop.f32.mrb[0].mxu0
      %v2991 = vpop.f32.mrb[0].mxu0
      %v2992 = vadd.f32 0.0, %v2991
      %v2993 = vpop.f32.mrb[0].mxu0
      %2994 = vmatprep.mubr.bf16.mxu0 %v2500
      %2995 = vmatmul.mubr.bf16.gmra.mrb[0].mxu0 %v2660
      %v2996 = vpop.f32.mrb[0].mxu0
      %v2997 = vadd.f32 0.0, %v2996
      %v2998 = vpop.f32.mrb[0].mxu0
      %v2999 = vpop.f32.mrb[0].mxu0
      %v3000 = vadd.f32 0.0, %v2999
      %v3001 = vpop.f32.mrb[0].mxu0
      %3002 = vmatprep.mubr.bf16.mxu0 %v2501
      %3003 = vmatmul.mubr.bf16.gmra.mrb[0].mxu0 %v2661
      %v3004 = vpop.f32.mrb[0].mxu0
      %v3005 = vadd.f32 0.0, %v3004
      %v3006 = vpop.f32.mrb[0].mxu0
      %v3007 = vpop.f32.mrb[0].mxu0
      %v3008 = vadd.f32 0.0, %v3007
      %v3009 = vpop.f32.mrb[0].mxu0
      %3010 = vmatprep.mubr.bf16.mxu0 %v2502
      %3011 = vmatmul.mubr.bf16.gmra.mrb[0].mxu0 %v2662
      %v3012 = vpop.f32.mrb[0].mxu0
      %v3013 = vadd.f32 0.0, %v3012
      %v3014 = vpop.f32.mrb[0].mxu0
      %v3015 = vpop.f32.mrb[0].mxu0
      %v3016 = vadd.f32 0.0, %v3015
      %v3017 = vpop.f32.mrb[0].mxu0
      %3018 = vmatprep.mubr.bf16.mxu0 %v2503
      %3019 = vmatmul.mubr.bf16.gmra.mrb[0].mxu0 %v2663
      %v3020 = vpop.f32.mrb[0].mxu0
      %v3021 = vadd.f32 0.0, %v3020
      %v3022 = vpop.f32.mrb[0].mxu0
      %v3023 = vpop.f32.mrb[0].mxu0
      %v3024 = vadd.f32 0.0, %v3023
      %v3025 = vpop.f32.mrb[0].mxu0
      %3026 = vmatprep.mubr.bf16.mxu0 %v2504
      %3027 = vmatmul.mubr.bf16.gmra.mrb[0].mxu0 %v2664
      %v3028 = vpop.f32.mrb[0].mxu0
      %v3029 = vadd.f32 0.0, %v3028
      %v3030 = vpop.f32.mrb[0].mxu0
      %v3031 = vpop.f32.mrb[0].mxu0
      %v3032 = vadd.f32 0.0, %v3031
      %v3033 = vpop.f32.mrb[0].mxu0
      %3034 = vmatprep.mubr.bf16.mxu0 %v2505
      %3035 = vmatmul.mubr.bf16.gmra.mrb[0].mxu0 %v2665
      %v3036 = vpop.f32.mrb[0].mxu0
      %v3037 = vadd.f32 0.0, %v3036
      %v3038 = vpop.f32.mrb[0].mxu0
      %v3039 = vpop.f32.mrb[0].mxu0
      %v3040 = vadd.f32 0.0, %v3039
      %v3041 = vpop.f32.mrb[0].mxu0
      %3042 = vmatprep.mubr.bf16.mxu0 %v2506
      %3043 = vmatmul.mubr.bf16.gmra.mrb[0].mxu0 %v2666
      %v3044 = vpop.f32.mrb[0].mxu0
      %v3045 = vadd.f32 0.0, %v3044
      %v3046 = vpop.f32.mrb[0].mxu0
      %v3047 = vpop.f32.mrb[0].mxu0
      %v3048 = vadd.f32 0.0, %v3047
      %v3049 = vpop.f32.mrb[0].mxu0
      %3050 = vmatprep.mubr.bf16.mxu0 %v2507
      %3051 = vmatmul.mubr.bf16.gmra.mrb[0].mxu0 %v2667
      %v3052 = vpop.f32.mrb[0].mxu0
      %v3053 = vadd.f32 0.0, %v3052
      %v3054 = vpop.f32.mrb[0].mxu0
      %v3055 = vpop.f32.mrb[0].mxu0
      %v3056 = vadd.f32 0.0, %v3055
      %v3057 = vpop.f32.mrb[0].mxu0
      %3058 = vmatprep.mubr.bf16.mxu0 %v2508
      %3059 = vmatmul.mubr.bf16.gmra.mrb[0].mxu0 %v2668
      %v3060 = vpop.f32.mrb[0].mxu0
      %v3061 = vadd.f32 0.0, %v3060
      %v3062 = vpop.f32.mrb[0].mxu0
      %v3063 = vpop.f32.mrb[0].mxu0
      %v3064 = vadd.f32 0.0, %v3063
      %v3065 = vpop.f32.mrb[0].mxu0
      %3066 = vmatprep.mubr.bf16.mxu0 %v2509
      %3067 = vmatmul.mubr.bf16.gmra.mrb[0].mxu0 %v2669
      %v3068 = vpop.f32.mrb[0].mxu0
      %v3069 = vadd.f32 0.0, %v3068
      %v3070 = vpop.f32.mrb[0].mxu0
      %v3071 = vpop.f32.mrb[0].mxu0
      %v3072 = vadd.f32 0.0, %v3071
      %v3073 = vpop.f32.mrb[0].mxu0
      %3074 = vmatprep.mubr.bf16.mxu0 %v2510
      %3075 = vmatmul.mubr.bf16.gmra.mrb[0].mxu0 %v2670
      %v3076 = vpop.f32.mrb[0].mxu0
      %v3077 = vadd.f32 0.0, %v3076
      %v3078 = vpop.f32.mrb[0].mxu0
      %v3079 = vpop.f32.mrb[0].mxu0
      %v3080 = vadd.f32 0.0, %v3079
      %v3081 = vpop.f32.mrb[0].mxu0
      %3082 = vmatprep.mubr.bf16.mxu0 %v2511
      %3083 = vmatmul.mubr.bf16.gmra.mrb[0].mxu0 %v2671
      %v3084 = vpop.f32.mrb[0].mxu0
      %v3085 = vadd.f32 0.0, %v3084
      %v3086 = vpop.f32.mrb[0].mxu0
      %v3087 = vpop.f32.mrb[0].mxu0
      %v3088 = vadd.f32 0.0, %v3087
      %v3089 = vpop.f32.mrb[0].mxu0
      %3090 = vmatprep.mubr.bf16.mxu0 %v2512
      %3091 = vmatmul.mubr.bf16.gmra.mrb[0].mxu0 %v2672
      %v3092 = vpop.f32.mrb[0].mxu0
      %v3093 = vadd.f32 0.0, %v3092
      %v3094 = vpop.f32.mrb[0].mxu0
      %v3095 = vpop.f32.mrb[0].mxu0
      %v3096 = vadd.f32 0.0, %v3095
      %v3097 = vpop.f32.mrb[0].mxu0
      %3098 = vmatprep.mubr.bf16.mxu0 %v2513
      %3099 = vmatmul.mubr.bf16.gmra.mrb[0].mxu0 %v2673
      %v3100 = vpop.f32.mrb[0].mxu0
      %v3101 = vpop.f32.mrb[0].mxu0
      %v3102 = vpop.f32.mrb[0].mxu0
      %v3103 = vpop.f32.mrb[0].mxu0
      %3104 = vdwg.mxu0
      %3105 = vmatprep.subr.bf16.mxu0 0
      %3106 = vmatpush1.bf16.msra.mxu0 %v2914
      %3107 = vmatprep.subr.bf16.mxu0 0
      %3108 = vmatpush1.bf16.msra.mxu0 %v2915
      %3109 = vmatprep.subr.bf16.mxu0 0
      %3110 = vmatpush1.bf16.msra.mxu0 %v2916
      %3111 = vmatprep.subr.bf16.mxu0 0
      %3112 = vmatpush1.bf16.msra.mxu0 %v2917
      %3113 = vmatprep.subr.bf16.mxu0 0
      %3114 = vmatpush1.bf16.msra.mxu0 %v2918
      %3115 = vmatprep.subr.bf16.mxu0 0
      %3116 = vmatpush1.bf16.msra.mxu0 %v2919
      %3117 = vmatprep.subr.bf16.mxu0 0
      %3118 = vmatpush1.bf16.msra.mxu0 %v2920
      %3119 = vmatprep.subr.bf16.mxu0 0
      %3120 = vmatpush1.bf16.msra.mxu0 %v2921
      %3121 = vmatprep.subr.bf16.mxu0 0
      %3122 = vmatpush1.bf16.msra.mxu0 0
      %3123 = vmatprep.subr.bf16.mxu0 0
      %3124 = vmatpush1.bf16.msra.mxu0 0
      %3125 = vmatprep.subr.bf16.mxu0 0
      %3126 = vmatpush1.bf16.msra.mxu0 0
      %3127 = vmatprep.subr.bf16.mxu0 0
      %3128 = vmatpush1.bf16.msra.mxu0 0
      %3129 = vmatprep.subr.bf16.mxu0 0
      %3130 = vmatpush1.bf16.msra.mxu0 0
      %3131 = vmatprep.subr.bf16.mxu0 0
      %3132 = vmatpush1.bf16.msra.mxu0 0
      %3133 = vmatprep.subr.bf16.mxu0 0
      %3134 = vmatpush1.bf16.msra.mxu0 0
      %3135 = vmatprep.subr.bf16.mxu0 0
      %3136 = vmatpush1.bf16.msra.mxu0 0
      %3137 = vmatprep.mubr.bf16.mxu0 0
      %3138 = vmatmul.mubr.bf16.gmra.mrb[0].mxu0 %v2738
      %v3139 = vpop.f32.mrb[0].mxu0
      %v3140 = vadd.f32 %v2981, %v3139
      %v3141 = vpop.f32.mrb[0].mxu0
      %v3142 = vpop.f32.mrb[0].mxu0
      %v3143 = vadd.f32 %v2984, %v3142
      %v3144 = vpop.f32.mrb[0].mxu0
      %3145 = vmatprep.mubr.bf16.mxu0 0
      %3146 = vmatmul.mubr.bf16.gmra.mrb[0].mxu0 %v2739
      %v3147 = vpop.f32.mrb[0].mxu0
      %v3148 = vadd.f32 %v2989, %v3147
      %v3149 = vpop.f32.mrb[0].mxu0
      %v3150 = vpop.f32.mrb[0].mxu0
      %v3151 = vadd.f32 %v2992, %v3150
      %v3152 = vpop.f32.mrb[0].mxu0
      %3153 = vmatprep.mubr.bf16.mxu0 0
      %3154 = vmatmul.mubr.bf16.gmra.mrb[0].mxu0 %v2740
      %v3155 = vpop.f32.mrb[0].mxu0
      %v3156 = vadd.f32 %v2997, %v3155
      %v3157 = vpop.f32.mrb[0].mxu0
      %v3158 = vpop.f32.mrb[0].mxu0
      %v3159 = vadd.f32 %v3000, %v3158
      %v3160 = vpop.f32.mrb[0].mxu0
      %3161 = vmatprep.mubr.bf16.mxu0 0
      %3162 = vmatmul.mubr.bf16.gmra.mrb[0].mxu0 %v2741
      %v3163 = vpop.f32.mrb[0].mxu0
      %v3164 = vadd.f32 %v3005, %v3163
      %v3165 = vpop.f32.mrb[0].mxu0
      %v3166 = vpop.f32.mrb[0].mxu0
      %v3167 = vadd.f32 %v3008, %v3166
      %v3168 = vpop.f32.mrb[0].mxu0
      %3169 = vmatprep.mubr.bf16.mxu0 0
      %3170 = vmatmul.mubr.bf16.gmra.mrb[0].mxu0 %v2742
      %v3171 = vpop.f32.mrb[0].mxu0
      %v3172 = vadd.f32 %v3013, %v3171
      %v3173 = vpop.f32.mrb[0].mxu0
      %v3174 = vpop.f32.mrb[0].mxu0
      %v3175 = vadd.f32 %v3016, %v3174
      %v3176 = vpop.f32.mrb[0].mxu0
      %3177 = vmatprep.mubr.bf16.mxu0 0
      %3178 = vmatmul.mubr.bf16.gmra.mrb[0].mxu0 %v2743
      %v3179 = vpop.f32.mrb[0].mxu0
      %v3180 = vadd.f32 %v3021, %v3179
      %v3181 = vpop.f32.mrb[0].mxu0
      %v3182 = vpop.f32.mrb[0].mxu0
      %v3183 = vadd.f32 %v3024, %v3182
      %v3184 = vpop.f32.mrb[0].mxu0
      %3185 = vmatprep.mubr.bf16.mxu0 0
      %3186 = vmatmul.mubr.bf16.gmra.mrb[0].mxu0 %v2744
      %v3187 = vpop.f32.mrb[0].mxu0
      %v3188 = vadd.f32 %v3029, %v3187
      %v3189 = vpop.f32.mrb[0].mxu0
      %v3190 = vpop.f32.mrb[0].mxu0
      %v3191 = vadd.f32 %v3032, %v3190
      %v3192 = vpop.f32.mrb[0].mxu0
      %3193 = vmatprep.mubr.bf16.mxu0 0
      %3194 = vmatmul.mubr.bf16.gmra.mrb[0].mxu0 %v2745
      %v3195 = vpop.f32.mrb[0].mxu0
      %v3196 = vadd.f32 %v3037, %v3195
      %v3197 = vpop.f32.mrb[0].mxu0
      %v3198 = vpop.f32.mrb[0].mxu0
      %v3199 = vadd.f32 %v3040, %v3198
      %v3200 = vpop.f32.mrb[0].mxu0
      %3201 = vmatprep.mubr.bf16.mxu0 0
      %3202 = vmatmul.mubr.bf16.gmra.mrb[0].mxu0 %v2746
      %v3203 = vpop.f32.mrb[0].mxu0
      %v3204 = vadd.f32 %v3045, %v3203
      %v3205 = vpop.f32.mrb[0].mxu0
      %v3206 = vpop.f32.mrb[0].mxu0
      %v3207 = vadd.f32 %v3048, %v3206
      %v3208 = vpop.f32.mrb[0].mxu0
      %3209 = vmatprep.mubr.bf16.mxu0 0
      %3210 = vmatmul.mubr.bf16.gmra.mrb[0].mxu0 %v2747
      %v3211 = vpop.f32.mrb[0].mxu0
      %v3212 = vadd.f32 %v3053, %v3211
      %v3213 = vpop.f32.mrb[0].mxu0
      %v3214 = vpop.f32.mrb[0].mxu0
      %v3215 = vadd.f32 %v3056, %v3214
      %v3216 = vpop.f32.mrb[0].mxu0
      %3217 = vmatprep.mubr.bf16.mxu0 0
      %3218 = vmatmul.mubr.bf16.gmra.mrb[0].mxu0 %v2748
      %v3219 = vpop.f32.mrb[0].mxu0
      %v3220 = vadd.f32 %v3061, %v3219
      %v3221 = vpop.f32.mrb[0].mxu0
      %v3222 = vpop.f32.mrb[0].mxu0
      %v3223 = vadd.f32 %v3064, %v3222
      %v3224 = vpop.f32.mrb[0].mxu0
      %3225 = vmatprep.mubr.bf16.mxu0 0
      %3226 = vmatmul.mubr.bf16.gmra.mrb[0].mxu0 %v2749
      %v3227 = vpop.f32.mrb[0].mxu0
      %v3228 = vadd.f32 %v3069, %v3227
      %v3229 = vpop.f32.mrb[0].mxu0
      %v3230 = vpop.f32.mrb[0].mxu0
      %v3231 = vadd.f32 %v3072, %v3230
      %v3232 = vpop.f32.mrb[0].mxu0
      %3233 = vmatprep.mubr.bf16.mxu0 0
      %3234 = vmatmul.mubr.bf16.gmra.mrb[0].mxu0 %v2750
      %v3235 = vpop.f32.mrb[0].mxu0
      %v3236 = vadd.f32 %v3077, %v3235
      %v3237 = vpop.f32.mrb[0].mxu0
      %v3238 = vpop.f32.mrb[0].mxu0
      %v3239 = vadd.f32 %v3080, %v3238
      %v3240 = vpop.f32.mrb[0].mxu0
      %3241 = vmatprep.mubr.bf16.mxu0 0
      %3242 = vmatmul.mubr.bf16.gmra.mrb[0].mxu0 %v2751
      %v3243 = vpop.f32.mrb[0].mxu0
      %v3244 = vadd.f32 %v3085, %v3243
      %v3245 = vpop.f32.mrb[0].mxu0
      %v3246 = vpop.f32.mrb[0].mxu0
      %v3247 = vadd.f32 %v3088, %v3246
      %v3248 = vpop.f32.mrb[0].mxu0
      %3249 = vmatprep.mubr.bf16.mxu0 0
      %3250 = vmatmul.mubr.bf16.gmra.mrb[0].mxu0 %v2752
      %v3251 = vpop.f32.mrb[0].mxu0
      %v3252 = vadd.f32 %v3093, %v3251
      %v3253 = vpop.f32.mrb[0].mxu0
      %v3254 = vpop.f32.mrb[0].mxu0
      %v3255 = vadd.f32 %v3096, %v3254
      %v3256 = vpop.f32.mrb[0].mxu0
      %3257 = vmatprep.mubr.bf16.mxu0 0
      %3258 = vmatmul.mubr.bf16.gmra.mrb[0].mxu0 %v2753
      %v3259 = vpop.f32.mrb[0].mxu0
      %v3260 = vpop.f32.mrb[0].mxu0
      %v3261 = vpop.f32.mrb[0].mxu0
      %v3262 = vpop.f32.mrb[0].mxu0
      %3263 = vdwg.mxu0
      %s3264 = scalar_lea.vmem %s2, 192
      %v3265 = vld [vmem:[%s3264] sm:$0xf]
      %v3266 = vld [vmem:[%s3264 + $0x4] sm:$0xf]
      %v3267 = vld [vmem:[%s3264 + $0x8] sm:$0xf]
      %v3268 = vld [vmem:[%s3264 + $0xc] sm:$0xf]
      %v3269 = vld [vmem:[%s3264 + $0x10] sm:$0xf]
      %v3270 = vld [vmem:[%s3264 + $0x14] sm:$0xf]
      %v3271 = vld [vmem:[%s3264 + $0x18] sm:$0xf]
      %v3272 = vld [vmem:[%s3264 + $0x1c] sm:$0xf]
      %v3273 = vld [vmem:[%s3264 + $0x20] sm:$0xf]
      %v3274 = vld [vmem:[%s3264 + $0x24] sm:$0xf]
      %v3275 = vld [vmem:[%s3264 + $0x28] sm:$0xf]
      %v3276 = vld [vmem:[%s3264 + $0x2c] sm:$0xf]
      %v3277 = vld [vmem:[%s3264 + $0x30] sm:$0xf]
      %v3278 = vld [vmem:[%s3264 + $0x34] sm:$0xf]
      %v3279 = vld [vmem:[%s3264 + $0x38] sm:$0xf]
      %v3280 = vld [vmem:[%s3264 + $0x3c] sm:$0xf]
      %v3281 = vld [vmem:[%s3264 + $0x40] sm:$0xf]
      %v3282 = vld [vmem:[%s3264 + $0x44] sm:$0xf]
      %v3283 = vld [vmem:[%s3264 + $0x48] sm:$0xf]
      %v3284 = vld [vmem:[%s3264 + $0x4c] sm:$0xf]
      %v3285 = vld [vmem:[%s3264 + $0x50] sm:$0xf]
      %v3286 = vld [vmem:[%s3264 + $0x54] sm:$0xf]
      %v3287 = vld [vmem:[%s3264 + $0x58] sm:$0xf]
      %v3288 = vld [vmem:[%s3264 + $0x5c] sm:$0xf]
      %v3289 = vld [vmem:[%s3264 + $0x60] sm:$0xf]
      %v3290 = vld [vmem:[%s3264 + $0x64] sm:$0xf]
      %v3291 = vld [vmem:[%s3264 + $0x68] sm:$0xf]
      %v3292 = vld [vmem:[%s3264 + $0x6c] sm:$0xf]
      %v3293 = vld [vmem:[%s3264 + $0x70] sm:$0xf]
      %v3294 = vld [vmem:[%s3264 + $0x74] sm:$0xf]
      %v3295 = vld [vmem:[%s3264 + $0x78] sm:$0xf]
      %v3296 = vld [vmem:[%s3264 + $0x7c] sm:$0xf]
      %v3297 = vld [vmem:[%s3264 + $0x80] sm:$0xf]
      %v3298 = vld [vmem:[%s3264 + $0x84] sm:$0xf]
      %v3299 = vld [vmem:[%s3264 + $0x88] sm:$0xf]
      %v3300 = vld [vmem:[%s3264 + $0x8c] sm:$0xf]
      %v3301 = vld [vmem:[%s3264 + $0x90] sm:$0xf]
      %v3302 = vld [vmem:[%s3264 + $0x94] sm:$0xf]
      %v3303 = vld [vmem:[%s3264 + $0x98] sm:$0xf]
      %v3304 = vld [vmem:[%s3264 + $0x9c] sm:$0xf]
      %v3305 = vld [vmem:[%s3264 + $0xa0] sm:$0xf]
      %v3306 = vld [vmem:[%s3264 + $0xa4] sm:$0xf]
      %v3307 = vld [vmem:[%s3264 + $0xa8] sm:$0xf]
      %v3308 = vld [vmem:[%s3264 + $0xac] sm:$0xf]
      %v3309 = vld [vmem:[%s3264 + $0xb0] sm:$0xf]
      %v3310 = vld [vmem:[%s3264 + $0xb4] sm:$0xf]
      %v3311 = vld [vmem:[%s3264 + $0xb8] sm:$0xf]
      %v3312 = vld [vmem:[%s3264 + $0xbc] sm:$0xf]
      %v3361 = vunpack.c.l.b16 %v3265
      %v3362 = vunpack.c.l.b16 %v3266
      %v3363 = vunpack.c.l.b16 %v3267
      %v3364 = vunpack.c.l.b16 %v3268
      %v3365 = vunpack.c.l.b16 %v3269
      %v3366 = vunpack.c.l.b16 %v3270
      %v3367 = vunpack.c.l.b16 %v3271
      %v3368 = vunpack.c.l.b16 %v3272
      %v3369 = vunpack.c.l.b16 %v3273
      %v3370 = vunpack.c.l.b16 %v3274
      %v3371 = vunpack.c.l.b16 %v3275
      %v3372 = vunpack.c.l.b16 %v3276
      %v3373 = vunpack.c.l.b16 %v3277
      %v3374 = vunpack.c.l.b16 %v3278
      %v3375 = vunpack.c.l.b16 %v3279
      %v3376 = vunpack.c.l.b16 %v3280
      %v3377 = vunpack.c.l.b16 %v3281
      %v3378 = vunpack.c.l.b16 %v3282
      %v3379 = vunpack.c.l.b16 %v3283
      %v3380 = vunpack.c.l.b16 %v3284
      %v3381 = vunpack.c.l.b16 %v3285
      %v3382 = vunpack.c.l.b16 %v3286
      %v3383 = vunpack.c.l.b16 %v3287
      %v3384 = vunpack.c.l.b16 %v3288
      %v3385 = vunpack.c.l.b16 %v3289
      %v3386 = vunpack.c.l.b16 %v3290
      %v3387 = vunpack.c.l.b16 %v3291
      %v3388 = vunpack.c.l.b16 %v3292
      %v3389 = vunpack.c.l.b16 %v3293
      %v3390 = vunpack.c.l.b16 %v3294
      %v3391 = vunpack.c.l.b16 %v3295
      %v3392 = vunpack.c.l.b16 %v3296
      %v3393 = vunpack.c.l.b16 %v3297
      %v3394 = vunpack.c.l.b16 %v3298
      %v3395 = vunpack.c.l.b16 %v3299
      %v3396 = vunpack.c.l.b16 %v3300
      %v3397 = vunpack.c.l.b16 %v3301
      %v3398 = vunpack.c.l.b16 %v3302
      %v3399 = vunpack.c.l.b16 %v3303
      %v3400 = vunpack.c.l.b16 %v3304
      %v3401 = vunpack.c.l.b16 %v3305
      %v3402 = vunpack.c.l.b16 %v3306
      %v3403 = vunpack.c.l.b16 %v3307
      %v3404 = vunpack.c.l.b16 %v3308
      %v3405 = vunpack.c.l.b16 %v3309
      %v3406 = vunpack.c.l.b16 %v3310
      %v3407 = vunpack.c.l.b16 %v3311
      %v3408 = vunpack.c.l.b16 %v3312
      %v3409 = vpack.c.b16 %v3362, %v3361
      %v3410 = vpack.c.b16 %v3364, %v3363
      %v3411 = vpack.c.b16 %v3366, %v3365
      %v3412 = vpack.c.b16 %v3368, %v3367
      %v3413 = vpack.c.b16 %v3370, %v3369
      %v3414 = vpack.c.b16 %v3372, %v3371
      %v3415 = vpack.c.b16 %v3374, %v3373
      %v3416 = vpack.c.b16 %v3376, %v3375
      %v3417 = vpack.c.b16 %v3378, %v3377
      %v3418 = vpack.c.b16 %v3380, %v3379
      %v3419 = vpack.c.b16 %v3382, %v3381
      %v3420 = vpack.c.b16 %v3384, %v3383
      %v3421 = vpack.c.b16 %v3386, %v3385
      %v3422 = vpack.c.b16 %v3388, %v3387
      %v3423 = vpack.c.b16 %v3390, %v3389
      %v3424 = vpack.c.b16 %v3392, %v3391
      %v3425 = vpack.c.b16 %v3394, %v3393
      %v3426 = vpack.c.b16 %v3396, %v3395
      %v3427 = vpack.c.b16 %v3398, %v3397
      %v3428 = vpack.c.b16 %v3400, %v3399
      %v3429 = vpack.c.b16 %v3402, %v3401
      %v3430 = vpack.c.b16 %v3404, %v3403
      %v3431 = vpack.c.b16 %v3406, %v3405
      %v3432 = vpack.c.b16 %v3408, %v3407
      %3457 = vmatprep.subr.bf16.mxu0 0
      %3458 = vmatpush1.bf16.msra.mxu0 %v3409
      %3459 = vmatprep.subr.bf16.mxu0 0
      %3460 = vmatpush1.bf16.msra.mxu0 %v3410
      %3461 = vmatprep.subr.bf16.mxu0 0
      %3462 = vmatpush1.bf16.msra.mxu0 %v3411
      %3463 = vmatprep.subr.bf16.mxu0 0
      %3464 = vmatpush1.bf16.msra.mxu0 %v3412
      %3465 = vmatprep.subr.bf16.mxu0 0
      %3466 = vmatpush1.bf16.msra.mxu0 %v3413
      %3467 = vmatprep.subr.bf16.mxu0 0
      %3468 = vmatpush1.bf16.msra.mxu0 %v3414
      %3469 = vmatprep.subr.bf16.mxu0 0
      %3470 = vmatpush1.bf16.msra.mxu0 %v3415
      %3471 = vmatprep.subr.bf16.mxu0 0
      %3472 = vmatpush1.bf16.msra.mxu0 %v3416
      %3473 = vmatprep.subr.bf16.mxu0 0
      %3474 = vmatpush1.bf16.msra.mxu0 %v3417
      %3475 = vmatprep.subr.bf16.mxu0 0
      %3476 = vmatpush1.bf16.msra.mxu0 %v3418
      %3477 = vmatprep.subr.bf16.mxu0 0
      %3478 = vmatpush1.bf16.msra.mxu0 %v3419
      %3479 = vmatprep.subr.bf16.mxu0 0
      %3480 = vmatpush1.bf16.msra.mxu0 %v3420
      %3481 = vmatprep.subr.bf16.mxu0 0
      %3482 = vmatpush1.bf16.msra.mxu0 %v3421
      %3483 = vmatprep.subr.bf16.mxu0 0
      %3484 = vmatpush1.bf16.msra.mxu0 %v3422
      %3485 = vmatprep.subr.bf16.mxu0 0
      %3486 = vmatpush1.bf16.msra.mxu0 %v3423
      %3487 = vmatprep.subr.bf16.mxu0 0
      %3488 = vmatpush1.bf16.msra.mxu0 %v3424
      %3489 = vmatprep.mubr.bf16.mxu0 %v2498
      %3490 = vmatmul.mubr.bf16.gmra.mrb[0].mxu0 %v2658
      %v3491 = vpop.f32.mrb[0].mxu0
      %v3492 = vadd.f32 0.0, %v3491
      %v3493 = vpop.f32.mrb[0].mxu0
      %v3494 = vpop.f32.mrb[0].mxu0
      %v3495 = vadd.f32 0.0, %v3494
      %v3496 = vpop.f32.mrb[0].mxu0
      %3497 = vmatprep.mubr.bf16.mxu0 %v2499
      %3498 = vmatmul.mubr.bf16.gmra.mrb[0].mxu0 %v2659
      %v3499 = vpop.f32.mrb[0].mxu0
      %v3500 = vadd.f32 0.0, %v3499
      %v3501 = vpop.f32.mrb[0].mxu0
      %v3502 = vpop.f32.mrb[0].mxu0
      %v3503 = vadd.f32 0.0, %v3502
      %v3504 = vpop.f32.mrb[0].mxu0
      %3505 = vmatprep.mubr.bf16.mxu0 %v2500
      %3506 = vmatmul.mubr.bf16.gmra.mrb[0].mxu0 %v2660
      %v3507 = vpop.f32.mrb[0].mxu0
      %v3508 = vadd.f32 0.0, %v3507
      %v3509 = vpop.f32.mrb[0].mxu0
      %v3510 = vpop.f32.mrb[0].mxu0
      %v3511 = vadd.f32 0.0, %v3510
      %v3512 = vpop.f32.mrb[0].mxu0
      %3513 = vmatprep.mubr.bf16.mxu0 %v2501
      %3514 = vmatmul.mubr.bf16.gmra.mrb[0].mxu0 %v2661
      %v3515 = vpop.f32.mrb[0].mxu0
      %v3516 = vadd.f32 0.0, %v3515
      %v3517 = vpop.f32.mrb[0].mxu0
      %v3518 = vpop.f32.mrb[0].mxu0
      %v3519 = vadd.f32 0.0, %v3518
      %v3520 = vpop.f32.mrb[0].mxu0
      %3521 = vmatprep.mubr.bf16.mxu0 %v2502
      %3522 = vmatmul.mubr.bf16.gmra.mrb[0].mxu0 %v2662
      %v3523 = vpop.f32.mrb[0].mxu0
      %v3524 = vadd.f32 0.0, %v3523
      %v3525 = vpop.f32.mrb[0].mxu0
      %v3526 = vpop.f32.mrb[0].mxu0
      %v3527 = vadd.f32 0.0, %v3526
      %v3528 = vpop.f32.mrb[0].mxu0
      %3529 = vmatprep.mubr.bf16.mxu0 %v2503
      %3530 = vmatmul.mubr.bf16.gmra.mrb[0].mxu0 %v2663
      %v3531 = vpop.f32.mrb[0].mxu0
      %v3532 = vadd.f32 0.0, %v3531
      %v3533 = vpop.f32.mrb[0].mxu0
      %v3534 = vpop.f32.mrb[0].mxu0
      %v3535 = vadd.f32 0.0, %v3534
      %v3536 = vpop.f32.mrb[0].mxu0
      %3537 = vmatprep.mubr.bf16.mxu0 %v2504
      %3538 = vmatmul.mubr.bf16.gmra.mrb[0].mxu0 %v2664
      %v3539 = vpop.f32.mrb[0].mxu0
      %v3540 = vadd.f32 0.0, %v3539
      %v3541 = vpop.f32.mrb[0].mxu0
      %v3542 = vpop.f32.mrb[0].mxu0
      %v3543 = vadd.f32 0.0, %v3542
      %v3544 = vpop.f32.mrb[0].mxu0
      %3545 = vmatprep.mubr.bf16.mxu0 %v2505
      %3546 = vmatmul.mubr.bf16.gmra.mrb[0].mxu0 %v2665
      %v3547 = vpop.f32.mrb[0].mxu0
      %v3548 = vadd.f32 0.0, %v3547
      %v3549 = vpop.f32.mrb[0].mxu0
      %v3550 = vpop.f32.mrb[0].mxu0
      %v3551 = vadd.f32 0.0, %v3550
      %v3552 = vpop.f32.mrb[0].mxu0
      %3553 = vmatprep.mubr.bf16.mxu0 %v2506
      %3554 = vmatmul.mubr.bf16.gmra.mrb[0].mxu0 %v2666
      %v3555 = vpop.f32.mrb[0].mxu0
      %v3556 = vadd.f32 0.0, %v3555
      %v3557 = vpop.f32.mrb[0].mxu0
      %v3558 = vpop.f32.mrb[0].mxu0
      %v3559 = vadd.f32 0.0, %v3558
      %v3560 = vpop.f32.mrb[0].mxu0
      %3561 = vmatprep.mubr.bf16.mxu0 %v2507
      %3562 = vmatmul.mubr.bf16.gmra.mrb[0].mxu0 %v2667
      %v3563 = vpop.f32.mrb[0].mxu0
      %v3564 = vadd.f32 0.0, %v3563
      %v3565 = vpop.f32.mrb[0].mxu0
      %v3566 = vpop.f32.mrb[0].mxu0
      %v3567 = vadd.f32 0.0, %v3566
      %v3568 = vpop.f32.mrb[0].mxu0
      %3569 = vmatprep.mubr.bf16.mxu0 %v2508
      %3570 = vmatmul.mubr.bf16.gmra.mrb[0].mxu0 %v2668
      %v3571 = vpop.f32.mrb[0].mxu0
      %v3572 = vadd.f32 0.0, %v3571
      %v3573 = vpop.f32.mrb[0].mxu0
      %v3574 = vpop.f32.mrb[0].mxu0
      %v3575 = vadd.f32 0.0, %v3574
      %v3576 = vpop.f32.mrb[0].mxu0
      %3577 = vmatprep.mubr.bf16.mxu0 %v2509
      %3578 = vmatmul.mubr.bf16.gmra.mrb[0].mxu0 %v2669
      %v3579 = vpop.f32.mrb[0].mxu0
      %v3580 = vadd.f32 0.0, %v3579
      %v3581 = vpop.f32.mrb[0].mxu0
      %v3582 = vpop.f32.mrb[0].mxu0
      %v3583 = vadd.f32 0.0, %v3582
      %v3584 = vpop.f32.mrb[0].mxu0
      %3585 = vmatprep.mubr.bf16.mxu0 %v2510
      %3586 = vmatmul.mubr.bf16.gmra.mrb[0].mxu0 %v2670
      %v3587 = vpop.f32.mrb[0].mxu0
      %v3588 = vadd.f32 0.0, %v3587
      %v3589 = vpop.f32.mrb[0].mxu0
      %v3590 = vpop.f32.mrb[0].mxu0
      %v3591 = vadd.f32 0.0, %v3590
      %v3592 = vpop.f32.mrb[0].mxu0
      %3593 = vmatprep.mubr.bf16.mxu0 %v2511
      %3594 = vmatmul.mubr.bf16.gmra.mrb[0].mxu0 %v2671
      %v3595 = vpop.f32.mrb[0].mxu0
      %v3596 = vadd.f32 0.0, %v3595
      %v3597 = vpop.f32.mrb[0].mxu0
      %v3598 = vpop.f32.mrb[0].mxu0
      %v3599 = vadd.f32 0.0, %v3598
      %v3600 = vpop.f32.mrb[0].mxu0
      %3601 = vmatprep.mubr.bf16.mxu0 %v2512
      %3602 = vmatmul.mubr.bf16.gmra.mrb[0].mxu0 %v2672
      %v3603 = vpop.f32.mrb[0].mxu0
      %v3604 = vadd.f32 0.0, %v3603
      %v3605 = vpop.f32.mrb[0].mxu0
      %v3606 = vpop.f32.mrb[0].mxu0
      %v3607 = vadd.f32 0.0, %v3606
      %v3608 = vpop.f32.mrb[0].mxu0
      %3609 = vmatprep.mubr.bf16.mxu0 %v2513
      %3610 = vmatmul.mubr.bf16.gmra.mrb[0].mxu0 %v2673
      %v3611 = vpop.f32.mrb[0].mxu0
      %v3612 = vadd.f32 0.0, %v3611
      %v3613 = vpop.f32.mrb[0].mxu0
      %v3614 = vpop.f32.mrb[0].mxu0
      %v3615 = vadd.f32 0.0, %v3614
      %v3616 = vpop.f32.mrb[0].mxu0
      %3617 = vdwg.mxu0
      %3618 = vmatprep.subr.bf16.mxu0 0
      %3619 = vmatpush1.bf16.msra.mxu0 %v3425
      %3620 = vmatprep.subr.bf16.mxu0 0
      %3621 = vmatpush1.bf16.msra.mxu0 %v3426
      %3622 = vmatprep.subr.bf16.mxu0 0
      %3623 = vmatpush1.bf16.msra.mxu0 %v3427
      %3624 = vmatprep.subr.bf16.mxu0 0
      %3625 = vmatpush1.bf16.msra.mxu0 %v3428
      %3626 = vmatprep.subr.bf16.mxu0 0
      %3627 = vmatpush1.bf16.msra.mxu0 %v3429
      %3628 = vmatprep.subr.bf16.mxu0 0
      %3629 = vmatpush1.bf16.msra.mxu0 %v3430
      %3630 = vmatprep.subr.bf16.mxu0 0
      %3631 = vmatpush1.bf16.msra.mxu0 %v3431
      %3632 = vmatprep.subr.bf16.mxu0 0
      %3633 = vmatpush1.bf16.msra.mxu0 %v3432
      %3634 = vmatprep.subr.bf16.mxu0 0
      %3635 = vmatpush1.bf16.msra.mxu0 0
      %3636 = vmatprep.subr.bf16.mxu0 0
      %3637 = vmatpush1.bf16.msra.mxu0 0
      %3638 = vmatprep.subr.bf16.mxu0 0
      %3639 = vmatpush1.bf16.msra.mxu0 0
      %3640 = vmatprep.subr.bf16.mxu0 0
      %3641 = vmatpush1.bf16.msra.mxu0 0
      %3642 = vmatprep.subr.bf16.mxu0 0
      %3643 = vmatpush1.bf16.msra.mxu0 0
      %3644 = vmatprep.subr.bf16.mxu0 0
      %3645 = vmatpush1.bf16.msra.mxu0 0
      %3646 = vmatprep.subr.bf16.mxu0 0
      %3647 = vmatpush1.bf16.msra.mxu0 0
      %3648 = vmatprep.subr.bf16.mxu0 0
      %3649 = vmatpush1.bf16.msra.mxu0 0
      %3650 = vmatprep.mubr.bf16.mxu0 0
      %3651 = vmatmul.mubr.bf16.gmra.mrb[0].mxu0 %v2738
      %v3652 = vpop.f32.mrb[0].mxu0
      %v3653 = vadd.f32 %v3492, %v3652
      %v3654 = vpop.f32.mrb[0].mxu0
      %v3655 = vpop.f32.mrb[0].mxu0
      %v3656 = vadd.f32 %v3495, %v3655
      %v3657 = vpop.f32.mrb[0].mxu0
      %3658 = vmatprep.mubr.bf16.mxu0 0
      %3659 = vmatmul.mubr.bf16.gmra.mrb[0].mxu0 %v2739
      %v3660 = vpop.f32.mrb[0].mxu0
      %v3661 = vadd.f32 %v3500, %v3660
      %v3662 = vpop.f32.mrb[0].mxu0
      %v3663 = vpop.f32.mrb[0].mxu0
      %v3664 = vadd.f32 %v3503, %v3663
      %v3665 = vpop.f32.mrb[0].mxu0
      %3666 = vmatprep.mubr.bf16.mxu0 0
      %3667 = vmatmul.mubr.bf16.gmra.mrb[0].mxu0 %v2740
      %v3668 = vpop.f32.mrb[0].mxu0
      %v3669 = vadd.f32 %v3508, %v3668
      %v3670 = vpop.f32.mrb[0].mxu0
      %v3671 = vpop.f32.mrb[0].mxu0
      %v3672 = vadd.f32 %v3511, %v3671
      %v3673 = vpop.f32.mrb[0].mxu0
      %3674 = vmatprep.mubr.bf16.mxu0 0
      %3675 = vmatmul.mubr.bf16.gmra.mrb[0].mxu0 %v2741
      %v3676 = vpop.f32.mrb[0].mxu0
      %v3677 = vadd.f32 %v3516, %v3676
      %v3678 = vpop.f32.mrb[0].mxu0
      %v3679 = vpop.f32.mrb[0].mxu0
      %v3680 = vadd.f32 %v3519, %v3679
      %v3681 = vpop.f32.mrb[0].mxu0
      %3682 = vmatprep.mubr.bf16.mxu0 0
      %3683 = vmatmul.mubr.bf16.gmra.mrb[0].mxu0 %v2742
      %v3684 = vpop.f32.mrb[0].mxu0
      %v3685 = vadd.f32 %v3524, %v3684
      %v3686 = vpop.f32.mrb[0].mxu0
      %v3687 = vpop.f32.mrb[0].mxu0
      %v3688 = vadd.f32 %v3527, %v3687
      %v3689 = vpop.f32.mrb[0].mxu0
      %3690 = vmatprep.mubr.bf16.mxu0 0
      %3691 = vmatmul.mubr.bf16.gmra.mrb[0].mxu0 %v2743
      %v3692 = vpop.f32.mrb[0].mxu0
      %v3693 = vadd.f32 %v3532, %v3692
      %v3694 = vpop.f32.mrb[0].mxu0
      %v3695 = vpop.f32.mrb[0].mxu0
      %v3696 = vadd.f32 %v3535, %v3695
      %v3697 = vpop.f32.mrb[0].mxu0
      %3698 = vmatprep.mubr.bf16.mxu0 0
      %3699 = vmatmul.mubr.bf16.gmra.mrb[0].mxu0 %v2744
      %v3700 = vpop.f32.mrb[0].mxu0
      %v3701 = vadd.f32 %v3540, %v3700
      %v3702 = vpop.f32.mrb[0].mxu0
      %v3703 = vpop.f32.mrb[0].mxu0
      %v3704 = vadd.f32 %v3543, %v3703
      %v3705 = vpop.f32.mrb[0].mxu0
      %3706 = vmatprep.mubr.bf16.mxu0 0
      %3707 = vmatmul.mubr.bf16.gmra.mrb[0].mxu0 %v2745
      %v3708 = vpop.f32.mrb[0].mxu0
      %v3709 = vadd.f32 %v3548, %v3708
      %v3710 = vpop.f32.mrb[0].mxu0
      %v3711 = vpop.f32.mrb[0].mxu0
      %v3712 = vadd.f32 %v3551, %v3711
      %v3713 = vpop.f32.mrb[0].mxu0
      %3714 = vmatprep.mubr.bf16.mxu0 0
      %3715 = vmatmul.mubr.bf16.gmra.mrb[0].mxu0 %v2746
      %v3716 = vpop.f32.mrb[0].mxu0
      %v3717 = vadd.f32 %v3556, %v3716
      %v3718 = vpop.f32.mrb[0].mxu0
      %v3719 = vpop.f32.mrb[0].mxu0
      %v3720 = vadd.f32 %v3559, %v3719
      %v3721 = vpop.f32.mrb[0].mxu0
      %3722 = vmatprep.mubr.bf16.mxu0 0
      %3723 = vmatmul.mubr.bf16.gmra.mrb[0].mxu0 %v2747
      %v3724 = vpop.f32.mrb[0].mxu0
      %v3725 = vadd.f32 %v3564, %v3724
      %v3726 = vpop.f32.mrb[0].mxu0
      %v3727 = vpop.f32.mrb[0].mxu0
      %v3728 = vadd.f32 %v3567, %v3727
      %v3729 = vpop.f32.mrb[0].mxu0
      %3730 = vmatprep.mubr.bf16.mxu0 0
      %3731 = vmatmul.mubr.bf16.gmra.mrb[0].mxu0 %v2748
      %v3732 = vpop.f32.mrb[0].mxu0
      %v3733 = vadd.f32 %v3572, %v3732
      %v3734 = vpop.f32.mrb[0].mxu0
      %v3735 = vpop.f32.mrb[0].mxu0
      %v3736 = vadd.f32 %v3575, %v3735
      %v3737 = vpop.f32.mrb[0].mxu0
      %3738 = vmatprep.mubr.bf16.mxu0 0
      %3739 = vmatmul.mubr.bf16.gmra.mrb[0].mxu0 %v2749
      %v3740 = vpop.f32.mrb[0].mxu0
      %v3741 = vadd.f32 %v3580, %v3740
      %v3742 = vpop.f32.mrb[0].mxu0
      %v3743 = vpop.f32.mrb[0].mxu0
      %v3744 = vadd.f32 %v3583, %v3743
      %v3745 = vpop.f32.mrb[0].mxu0
      %3746 = vmatprep.mubr.bf16.mxu0 0
      %3747 = vmatmul.mubr.bf16.gmra.mrb[0].mxu0 %v2750
      %v3748 = vpop.f32.mrb[0].mxu0
      %v3749 = vadd.f32 %v3588, %v3748
      %v3750 = vpop.f32.mrb[0].mxu0
      %v3751 = vpop.f32.mrb[0].mxu0
      %v3752 = vadd.f32 %v3591, %v3751
      %v3753 = vpop.f32.mrb[0].mxu0
      %3754 = vmatprep.mubr.bf16.mxu0 0
      %3755 = vmatmul.mubr.bf16.gmra.mrb[0].mxu0 %v2751
      %v3756 = vpop.f32.mrb[0].mxu0
      %v3757 = vadd.f32 %v3596, %v3756
      %v3758 = vpop.f32.mrb[0].mxu0
      %v3759 = vpop.f32.mrb[0].mxu0
      %v3760 = vadd.f32 %v3599, %v3759
      %v3761 = vpop.f32.mrb[0].mxu0
      %3762 = vmatprep.mubr.bf16.mxu0 0
      %3763 = vmatmul.mubr.bf16.gmra.mrb[0].mxu0 %v2752
      %v3764 = vpop.f32.mrb[0].mxu0
      %v3765 = vadd.f32 %v3604, %v3764
      %v3766 = vpop.f32.mrb[0].mxu0
      %v3767 = vpop.f32.mrb[0].mxu0
      %v3768 = vadd.f32 %v3607, %v3767
      %v3769 = vpop.f32.mrb[0].mxu0
      %3770 = vmatprep.mubr.bf16.mxu0 0
      %3771 = vmatmul.mubr.bf16.gmra.mrb[0].mxu0 %v2753
      %v3772 = vpop.f32.mrb[0].mxu0
      %v3773 = vadd.f32 %v3612, %v3772
      %v3774 = vpop.f32.mrb[0].mxu0
      %v3775 = vpop.f32.mrb[0].mxu0
      %v3776 = vadd.f32 %v3615, %v3775
      %v3777 = vpop.f32.mrb[0].mxu0
      %3778 = vdwg.mxu0
      %s3779 = scalar_lea.vmem %s2, 384
      %v3780 = vld [vmem:[%s3779] sm:$0xf]
      %v3781 = vld [vmem:[%s3779 + $0x4] sm:$0xf]
      %v3782 = vld [vmem:[%s3779 + $0x8] sm:$0xf]
      %v3783 = vld [vmem:[%s3779 + $0xc] sm:$0xf]
      %v3784 = vld [vmem:[%s3779 + $0x10] sm:$0xf]
      %v3785 = vld [vmem:[%s3779 + $0x14] sm:$0xf]
      %v3786 = vld [vmem:[%s3779 + $0x18] sm:$0xf]
      %v3787 = vld [vmem:[%s3779 + $0x1c] sm:$0xf]
      %v3788 = vld [vmem:[%s3779 + $0x20] sm:$0xf]
      %v3789 = vld [vmem:[%s3779 + $0x24] sm:$0xf]
      %v3790 = vld [vmem:[%s3779 + $0x28] sm:$0xf]
      %v3791 = vld [vmem:[%s3779 + $0x2c] sm:$0xf]
      %v3792 = vld [vmem:[%s3779 + $0x30] sm:$0xf]
      %v3793 = vld [vmem:[%s3779 + $0x34] sm:$0xf]
      %v3794 = vld [vmem:[%s3779 + $0x38] sm:$0xf]
      %v3795 = vld [vmem:[%s3779 + $0x3c] sm:$0xf]
      %v3796 = vld [vmem:[%s3779 + $0x40] sm:$0xf]
      %v3797 = vld [vmem:[%s3779 + $0x44] sm:$0xf]
      %v3798 = vld [vmem:[%s3779 + $0x48] sm:$0xf]
      %v3799 = vld [vmem:[%s3779 + $0x4c] sm:$0xf]
      %v3800 = vld [vmem:[%s3779 + $0x50] sm:$0xf]
      %v3801 = vld [vmem:[%s3779 + $0x54] sm:$0xf]
      %v3802 = vld [vmem:[%s3779 + $0x58] sm:$0xf]
      %v3803 = vld [vmem:[%s3779 + $0x5c] sm:$0xf]
      %v3804 = vld [vmem:[%s3779 + $0x60] sm:$0xf]
      %v3805 = vld [vmem:[%s3779 + $0x64] sm:$0xf]
      %v3806 = vld [vmem:[%s3779 + $0x68] sm:$0xf]
      %v3807 = vld [vmem:[%s3779 + $0x6c] sm:$0xf]
      %v3808 = vld [vmem:[%s3779 + $0x70] sm:$0xf]
      %v3809 = vld [vmem:[%s3779 + $0x74] sm:$0xf]
      %v3810 = vld [vmem:[%s3779 + $0x78] sm:$0xf]
      %v3811 = vld [vmem:[%s3779 + $0x7c] sm:$0xf]
      %v3812 = vld [vmem:[%s3779 + $0x80] sm:$0xf]
      %v3813 = vld [vmem:[%s3779 + $0x84] sm:$0xf]
      %v3814 = vld [vmem:[%s3779 + $0x88] sm:$0xf]
      %v3815 = vld [vmem:[%s3779 + $0x8c] sm:$0xf]
      %v3816 = vld [vmem:[%s3779 + $0x90] sm:$0xf]
      %v3817 = vld [vmem:[%s3779 + $0x94] sm:$0xf]
      %v3818 = vld [vmem:[%s3779 + $0x98] sm:$0xf]
      %v3819 = vld [vmem:[%s3779 + $0x9c] sm:$0xf]
      %v3820 = vld [vmem:[%s3779 + $0xa0] sm:$0xf]
      %v3821 = vld [vmem:[%s3779 + $0xa4] sm:$0xf]
      %v3822 = vld [vmem:[%s3779 + $0xa8] sm:$0xf]
      %v3823 = vld [vmem:[%s3779 + $0xac] sm:$0xf]
      %v3824 = vld [vmem:[%s3779 + $0xb0] sm:$0xf]
      %v3825 = vld [vmem:[%s3779 + $0xb4] sm:$0xf]
      %v3826 = vld [vmem:[%s3779 + $0xb8] sm:$0xf]
      %v3827 = vld [vmem:[%s3779 + $0xbc] sm:$0xf]
      %v3876 = vunpack.c.l.b16 %v3780
      %v3877 = vunpack.c.l.b16 %v3781
      %v3878 = vunpack.c.l.b16 %v3782
      %v3879 = vunpack.c.l.b16 %v3783
      %v3880 = vunpack.c.l.b16 %v3784
      %v3881 = vunpack.c.l.b16 %v3785
      %v3882 = vunpack.c.l.b16 %v3786
      %v3883 = vunpack.c.l.b16 %v3787
      %v3884 = vunpack.c.l.b16 %v3788
      %v3885 = vunpack.c.l.b16 %v3789
      %v3886 = vunpack.c.l.b16 %v3790
      %v3887 = vunpack.c.l.b16 %v3791
      %v3888 = vunpack.c.l.b16 %v3792
      %v3889 = vunpack.c.l.b16 %v3793
      %v3890 = vunpack.c.l.b16 %v3794
      %v3891 = vunpack.c.l.b16 %v3795
      %v3892 = vunpack.c.l.b16 %v3796
      %v3893 = vunpack.c.l.b16 %v3797
      %v3894 = vunpack.c.l.b16 %v3798
      %v3895 = vunpack.c.l.b16 %v3799
      %v3896 = vunpack.c.l.b16 %v3800
      %v3897 = vunpack.c.l.b16 %v3801
      %v3898 = vunpack.c.l.b16 %v3802
      %v3899 = vunpack.c.l.b16 %v3803
      %v3900 = vunpack.c.l.b16 %v3804
      %v3901 = vunpack.c.l.b16 %v3805
      %v3902 = vunpack.c.l.b16 %v3806
      %v3903 = vunpack.c.l.b16 %v3807
      %v3904 = vunpack.c.l.b16 %v3808
      %v3905 = vunpack.c.l.b16 %v3809
      %v3906 = vunpack.c.l.b16 %v3810
      %v3907 = vunpack.c.l.b16 %v3811
      %v3908 = vunpack.c.l.b16 %v3812
      %v3909 = vunpack.c.l.b16 %v3813
      %v3910 = vunpack.c.l.b16 %v3814
      %v3911 = vunpack.c.l.b16 %v3815
      %v3912 = vunpack.c.l.b16 %v3816
      %v3913 = vunpack.c.l.b16 %v3817
      %v3914 = vunpack.c.l.b16 %v3818
      %v3915 = vunpack.c.l.b16 %v3819
      %v3916 = vunpack.c.l.b16 %v3820
      %v3917 = vunpack.c.l.b16 %v3821
      %v3918 = vunpack.c.l.b16 %v3822
      %v3919 = vunpack.c.l.b16 %v3823
      %v3920 = vunpack.c.l.b16 %v3824
      %v3921 = vunpack.c.l.b16 %v3825
      %v3922 = vunpack.c.l.b16 %v3826
      %v3923 = vunpack.c.l.b16 %v3827
      %v3924 = vpack.c.b16 %v3877, %v3876
      %v3925 = vpack.c.b16 %v3879, %v3878
      %v3926 = vpack.c.b16 %v3881, %v3880
      %v3927 = vpack.c.b16 %v3883, %v3882
      %v3928 = vpack.c.b16 %v3885, %v3884
      %v3929 = vpack.c.b16 %v3887, %v3886
      %v3930 = vpack.c.b16 %v3889, %v3888
      %v3931 = vpack.c.b16 %v3891, %v3890
      %v3932 = vpack.c.b16 %v3893, %v3892
      %v3933 = vpack.c.b16 %v3895, %v3894
      %v3934 = vpack.c.b16 %v3897, %v3896
      %v3935 = vpack.c.b16 %v3899, %v3898
      %v3936 = vpack.c.b16 %v3901, %v3900
      %v3937 = vpack.c.b16 %v3903, %v3902
      %v3938 = vpack.c.b16 %v3905, %v3904
      %v3939 = vpack.c.b16 %v3907, %v3906
      %v3940 = vpack.c.b16 %v3909, %v3908
      %v3941 = vpack.c.b16 %v3911, %v3910
      %v3942 = vpack.c.b16 %v3913, %v3912
      %v3943 = vpack.c.b16 %v3915, %v3914
      %v3944 = vpack.c.b16 %v3917, %v3916
      %v3945 = vpack.c.b16 %v3919, %v3918
      %v3946 = vpack.c.b16 %v3921, %v3920
      %v3947 = vpack.c.b16 %v3923, %v3922
      %3972 = vmatprep.subr.bf16.mxu0 0
      %3973 = vmatpush1.bf16.msra.mxu0 %v3924
      %3974 = vmatprep.subr.bf16.mxu0 0
      %3975 = vmatpush1.bf16.msra.mxu0 %v3925
      %3976 = vmatprep.subr.bf16.mxu0 0
      %3977 = vmatpush1.bf16.msra.mxu0 %v3926
      %3978 = vmatprep.subr.bf16.mxu0 0
      %3979 = vmatpush1.bf16.msra.mxu0 %v3927
      %3980 = vmatprep.subr.bf16.mxu0 0
      %3981 = vmatpush1.bf16.msra.mxu0 %v3928
      %3982 = vmatprep.subr.bf16.mxu0 0
      %3983 = vmatpush1.bf16.msra.mxu0 %v3929
      %3984 = vmatprep.subr.bf16.mxu0 0
      %3985 = vmatpush1.bf16.msra.mxu0 %v3930
      %3986 = vmatprep.subr.bf16.mxu0 0
      %3987 = vmatpush1.bf16.msra.mxu0 %v3931
      %3988 = vmatprep.subr.bf16.mxu0 0
      %3989 = vmatpush1.bf16.msra.mxu0 %v3932
      %3990 = vmatprep.subr.bf16.mxu0 0
      %3991 = vmatpush1.bf16.msra.mxu0 %v3933
      %3992 = vmatprep.subr.bf16.mxu0 0
      %3993 = vmatpush1.bf16.msra.mxu0 %v3934
      %3994 = vmatprep.subr.bf16.mxu0 0
      %3995 = vmatpush1.bf16.msra.mxu0 %v3935
      %3996 = vmatprep.subr.bf16.mxu0 0
      %3997 = vmatpush1.bf16.msra.mxu0 %v3936
      %3998 = vmatprep.subr.bf16.mxu0 0
      %3999 = vmatpush1.bf16.msra.mxu0 %v3937
      %4000 = vmatprep.subr.bf16.mxu0 0
      %4001 = vmatpush1.bf16.msra.mxu0 %v3938
      %4002 = vmatprep.subr.bf16.mxu0 0
      %4003 = vmatpush1.bf16.msra.mxu0 %v3939
      %4004 = vmatprep.mubr.bf16.mxu0 %v2498
      %4005 = vmatmul.mubr.bf16.gmra.mrb[0].mxu0 %v2658
      %v4006 = vpop.f32.mrb[0].mxu0
      %v4007 = vpop.f32.mrb[0].mxu0
      %v4008 = vpop.f32.mrb[0].mxu0
      %v4009 = vpop.f32.mrb[0].mxu0
      %4010 = vmatprep.mubr.bf16.mxu0 %v2499
      %4011 = vmatmul.mubr.bf16.gmra.mrb[0].mxu0 %v2659
      %v4012 = vpop.f32.mrb[0].mxu0
      %v4013 = vadd.f32 0.0, %v4012
      %v4014 = vpop.f32.mrb[0].mxu0
      %v4015 = vpop.f32.mrb[0].mxu0
      %v4016 = vadd.f32 0.0, %v4015
      %v4017 = vpop.f32.mrb[0].mxu0
      %4018 = vmatprep.mubr.bf16.mxu0 %v2500
      %4019 = vmatmul.mubr.bf16.gmra.mrb[0].mxu0 %v2660
      %v4020 = vpop.f32.mrb[0].mxu0
      %v4021 = vadd.f32 0.0, %v4020
      %v4022 = vpop.f32.mrb[0].mxu0
      %v4023 = vpop.f32.mrb[0].mxu0
      %v4024 = vadd.f32 0.0, %v4023
      %v4025 = vpop.f32.mrb[0].mxu0
      %4026 = vmatprep.mubr.bf16.mxu0 %v2501
      %4027 = vmatmul.mubr.bf16.gmra.mrb[0].mxu0 %v2661
      %v4028 = vpop.f32.mrb[0].mxu0
      %v4029 = vadd.f32 0.0, %v4028
      %v4030 = vpop.f32.mrb[0].mxu0
      %v4031 = vpop.f32.mrb[0].mxu0
      %v4032 = vadd.f32 0.0, %v4031
      %v4033 = vpop.f32.mrb[0].mxu0
      %4034 = vmatprep.mubr.bf16.mxu0 %v2502
      %4035 = vmatmul.mubr.bf16.gmra.mrb[0].mxu0 %v2662
      %v4036 = vpop.f32.mrb[0].mxu0
      %v4037 = vadd.f32 0.0, %v4036
      %v4038 = vpop.f32.mrb[0].mxu0
      %v4039 = vpop.f32.mrb[0].mxu0
      %v4040 = vadd.f32 0.0, %v4039
      %v4041 = vpop.f32.mrb[0].mxu0
      %4042 = vmatprep.mubr.bf16.mxu0 %v2503
      %4043 = vmatmul.mubr.bf16.gmra.mrb[0].mxu0 %v2663
      %v4044 = vpop.f32.mrb[0].mxu0
      %v4045 = vadd.f32 0.0, %v4044
      %v4046 = vpop.f32.mrb[0].mxu0
      %v4047 = vpop.f32.mrb[0].mxu0
      %v4048 = vadd.f32 0.0, %v4047
      %v4049 = vpop.f32.mrb[0].mxu0
      %4050 = vmatprep.mubr.bf16.mxu0 %v2504
      %4051 = vmatmul.mubr.bf16.gmra.mrb[0].mxu0 %v2664
      %v4052 = vpop.f32.mrb[0].mxu0
      %v4053 = vadd.f32 0.0, %v4052
      %v4054 = vpop.f32.mrb[0].mxu0
      %v4055 = vpop.f32.mrb[0].mxu0
      %v4056 = vadd.f32 0.0, %v4055
      %v4057 = vpop.f32.mrb[0].mxu0
      %4058 = vmatprep.mubr.bf16.mxu0 %v2505
      %4059 = vmatmul.mubr.bf16.gmra.mrb[0].mxu0 %v2665
      %v4060 = vpop.f32.mrb[0].mxu0
      %v4061 = vadd.f32 0.0, %v4060
      %v4062 = vpop.f32.mrb[0].mxu0
      %v4063 = vpop.f32.mrb[0].mxu0
      %v4064 = vadd.f32 0.0, %v4063
      %v4065 = vpop.f32.mrb[0].mxu0
      %4066 = vmatprep.mubr.bf16.mxu0 %v2506
      %4067 = vmatmul.mubr.bf16.gmra.mrb[0].mxu0 %v2666
      %v4068 = vpop.f32.mrb[0].mxu0
      %v4069 = vadd.f32 0.0, %v4068
      %v4070 = vpop.f32.mrb[0].mxu0
      %v4071 = vpop.f32.mrb[0].mxu0
      %v4072 = vadd.f32 0.0, %v4071
      %v4073 = vpop.f32.mrb[0].mxu0
      %4074 = vmatprep.mubr.bf16.mxu0 %v2507
      %4075 = vmatmul.mubr.bf16.gmra.mrb[0].mxu0 %v2667
      %v4076 = vpop.f32.mrb[0].mxu0
      %v4077 = vadd.f32 0.0, %v4076
      %v4078 = vpop.f32.mrb[0].mxu0
      %v4079 = vpop.f32.mrb[0].mxu0
      %v4080 = vadd.f32 0.0, %v4079
      %v4081 = vpop.f32.mrb[0].mxu0
      %4082 = vmatprep.mubr.bf16.mxu0 %v2508
      %4083 = vmatmul.mubr.bf16.gmra.mrb[0].mxu0 %v2668
      %v4084 = vpop.f32.mrb[0].mxu0
      %v4085 = vadd.f32 0.0, %v4084
      %v4086 = vpop.f32.mrb[0].mxu0
      %v4087 = vpop.f32.mrb[0].mxu0
      %v4088 = vadd.f32 0.0, %v4087
      %v4089 = vpop.f32.mrb[0].mxu0
      %4090 = vmatprep.mubr.bf16.mxu0 %v2509
      %4091 = vmatmul.mubr.bf16.gmra.mrb[0].mxu0 %v2669
      %v4092 = vpop.f32.mrb[0].mxu0
      %v4093 = vadd.f32 0.0, %v4092
      %v4094 = vpop.f32.mrb[0].mxu0
      %v4095 = vpop.f32.mrb[0].mxu0
      %v4096 = vadd.f32 0.0, %v4095
      %v4097 = vpop.f32.mrb[0].mxu0
      %4098 = vmatprep.mubr.bf16.mxu0 %v2510
      %4099 = vmatmul.mubr.bf16.gmra.mrb[0].mxu0 %v2670
      %v4100 = vpop.f32.mrb[0].mxu0
      %v4101 = vadd.f32 0.0, %v4100
      %v4102 = vpop.f32.mrb[0].mxu0
      %v4103 = vpop.f32.mrb[0].mxu0
      %v4104 = vadd.f32 0.0, %v4103
      %v4105 = vpop.f32.mrb[0].mxu0
      %4106 = vmatprep.mubr.bf16.mxu0 %v2511
      %4107 = vmatmul.mubr.bf16.gmra.mrb[0].mxu0 %v2671
      %v4108 = vpop.f32.mrb[0].mxu0
      %v4109 = vadd.f32 0.0, %v4108
      %v4110 = vpop.f32.mrb[0].mxu0
      %v4111 = vpop.f32.mrb[0].mxu0
      %v4112 = vadd.f32 0.0, %v4111
      %v4113 = vpop.f32.mrb[0].mxu0
      %4114 = vmatprep.mubr.bf16.mxu0 %v2512
      %4115 = vmatmul.mubr.bf16.gmra.mrb[0].mxu0 %v2672
      %v4116 = vpop.f32.mrb[0].mxu0
      %v4117 = vadd.f32 0.0, %v4116
      %v4118 = vpop.f32.mrb[0].mxu0
      %v4119 = vpop.f32.mrb[0].mxu0
      %v4120 = vadd.f32 0.0, %v4119
      %v4121 = vpop.f32.mrb[0].mxu0
      %4122 = vmatprep.mubr.bf16.mxu0 %v2513
      %4123 = vmatmul.mubr.bf16.gmra.mrb[0].mxu0 %v2673
      %v4124 = vpop.f32.mrb[0].mxu0
      %v4125 = vadd.f32 0.0, %v4124
      %v4126 = vpop.f32.mrb[0].mxu0
      %v4127 = vpop.f32.mrb[0].mxu0
      %v4128 = vadd.f32 0.0, %v4127
      %v4129 = vpop.f32.mrb[0].mxu0
      %4130 = vdwg.mxu0
      %4131 = vmatprep.subr.bf16.mxu0 0
      %4132 = vmatpush1.bf16.msra.mxu0 %v3940
      %4133 = vmatprep.subr.bf16.mxu0 0
      %4134 = vmatpush1.bf16.msra.mxu0 %v3941
      %4135 = vmatprep.subr.bf16.mxu0 0
      %4136 = vmatpush1.bf16.msra.mxu0 %v3942
      %4137 = vmatprep.subr.bf16.mxu0 0
      %4138 = vmatpush1.bf16.msra.mxu0 %v3943
      %4139 = vmatprep.subr.bf16.mxu0 0
      %4140 = vmatpush1.bf16.msra.mxu0 %v3944
      %4141 = vmatprep.subr.bf16.mxu0 0
      %4142 = vmatpush1.bf16.msra.mxu0 %v3945
      %4143 = vmatprep.subr.bf16.mxu0 0
      %4144 = vmatpush1.bf16.msra.mxu0 %v3946
      %4145 = vmatprep.subr.bf16.mxu0 0
      %4146 = vmatpush1.bf16.msra.mxu0 %v3947
      %4147 = vmatprep.subr.bf16.mxu0 0
      %4148 = vmatpush1.bf16.msra.mxu0 0
      %4149 = vmatprep.subr.bf16.mxu0 0
      %4150 = vmatpush1.bf16.msra.mxu0 0
      %4151 = vmatprep.subr.bf16.mxu0 0
      %4152 = vmatpush1.bf16.msra.mxu0 0
      %4153 = vmatprep.subr.bf16.mxu0 0
      %4154 = vmatpush1.bf16.msra.mxu0 0
      %4155 = vmatprep.subr.bf16.mxu0 0
      %4156 = vmatpush1.bf16.msra.mxu0 0
      %4157 = vmatprep.subr.bf16.mxu0 0
      %4158 = vmatpush1.bf16.msra.mxu0 0
      %4159 = vmatprep.subr.bf16.mxu0 0
      %4160 = vmatpush1.bf16.msra.mxu0 0
      %4161 = vmatprep.subr.bf16.mxu0 0
      %4162 = vmatpush1.bf16.msra.mxu0 0
      %4163 = vmatprep.mubr.bf16.mxu0 0
      %4164 = vmatmul.mubr.bf16.gmra.mrb[0].mxu0 %v2738
      %v4165 = vpop.f32.mrb[0].mxu0
      %v4166 = vpop.f32.mrb[0].mxu0
      %v4167 = vpop.f32.mrb[0].mxu0
      %v4168 = vpop.f32.mrb[0].mxu0
      %4169 = vmatprep.mubr.bf16.mxu0 0
      %4170 = vmatmul.mubr.bf16.gmra.mrb[0].mxu0 %v2739
      %v4171 = vpop.f32.mrb[0].mxu0
      %v4172 = vadd.f32 %v4013, %v4171
      %v4173 = vpop.f32.mrb[0].mxu0
      %v4174 = vpop.f32.mrb[0].mxu0
      %v4175 = vadd.f32 %v4016, %v4174
      %v4176 = vpop.f32.mrb[0].mxu0
      %4177 = vmatprep.mubr.bf16.mxu0 0
      %4178 = vmatmul.mubr.bf16.gmra.mrb[0].mxu0 %v2740
      %v4179 = vpop.f32.mrb[0].mxu0
      %v4180 = vadd.f32 %v4021, %v4179
      %v4181 = vpop.f32.mrb[0].mxu0
      %v4182 = vpop.f32.mrb[0].mxu0
      %v4183 = vadd.f32 %v4024, %v4182
      %v4184 = vpop.f32.mrb[0].mxu0
      %4185 = vmatprep.mubr.bf16.mxu0 0
      %4186 = vmatmul.mubr.bf16.gmra.mrb[0].mxu0 %v2741
      %v4187 = vpop.f32.mrb[0].mxu0
      %v4188 = vadd.f32 %v4029, %v4187
      %v4189 = vpop.f32.mrb[0].mxu0
      %v4190 = vpop.f32.mrb[0].mxu0
      %v4191 = vadd.f32 %v4032, %v4190
      %v4192 = vpop.f32.mrb[0].mxu0
      %4193 = vmatprep.mubr.bf16.mxu0 0
      %4194 = vmatmul.mubr.bf16.gmra.mrb[0].mxu0 %v2742
      %v4195 = vpop.f32.mrb[0].mxu0
      %v4196 = vadd.f32 %v4037, %v4195
      %v4197 = vpop.f32.mrb[0].mxu0
      %v4198 = vpop.f32.mrb[0].mxu0
      %v4199 = vadd.f32 %v4040, %v4198
      %v4200 = vpop.f32.mrb[0].mxu0
      %4201 = vmatprep.mubr.bf16.mxu0 0
      %4202 = vmatmul.mubr.bf16.gmra.mrb[0].mxu0 %v2743
      %v4203 = vpop.f32.mrb[0].mxu0
      %v4204 = vadd.f32 %v4045, %v4203
      %v4205 = vpop.f32.mrb[0].mxu0
      %v4206 = vpop.f32.mrb[0].mxu0
      %v4207 = vadd.f32 %v4048, %v4206
      %v4208 = vpop.f32.mrb[0].mxu0
      %4209 = vmatprep.mubr.bf16.mxu0 0
      %4210 = vmatmul.mubr.bf16.gmra.mrb[0].mxu0 %v2744
      %v4211 = vpop.f32.mrb[0].mxu0
      %v4212 = vadd.f32 %v4053, %v4211
      %v4213 = vpop.f32.mrb[0].mxu0
      %v4214 = vpop.f32.mrb[0].mxu0
      %v4215 = vadd.f32 %v4056, %v4214
      %v4216 = vpop.f32.mrb[0].mxu0
      %4217 = vmatprep.mubr.bf16.mxu0 0
      %4218 = vmatmul.mubr.bf16.gmra.mrb[0].mxu0 %v2745
      %v4219 = vpop.f32.mrb[0].mxu0
      %v4220 = vadd.f32 %v4061, %v4219
      %v4221 = vpop.f32.mrb[0].mxu0
      %v4222 = vpop.f32.mrb[0].mxu0
      %v4223 = vadd.f32 %v4064, %v4222
      %v4224 = vpop.f32.mrb[0].mxu0
      %4225 = vmatprep.mubr.bf16.mxu0 0
      %4226 = vmatmul.mubr.bf16.gmra.mrb[0].mxu0 %v2746
      %v4227 = vpop.f32.mrb[0].mxu0
      %v4228 = vadd.f32 %v4069, %v4227
      %v4229 = vpop.f32.mrb[0].mxu0
      %v4230 = vpop.f32.mrb[0].mxu0
      %v4231 = vadd.f32 %v4072, %v4230
      %v4232 = vpop.f32.mrb[0].mxu0
      %4233 = vmatprep.mubr.bf16.mxu0 0
      %4234 = vmatmul.mubr.bf16.gmra.mrb[0].mxu0 %v2747
      %v4235 = vpop.f32.mrb[0].mxu0
      %v4236 = vadd.f32 %v4077, %v4235
      %v4237 = vpop.f32.mrb[0].mxu0
      %v4238 = vpop.f32.mrb[0].mxu0
      %v4239 = vadd.f32 %v4080, %v4238
      %v4240 = vpop.f32.mrb[0].mxu0
      %4241 = vmatprep.mubr.bf16.mxu0 0
      %4242 = vmatmul.mubr.bf16.gmra.mrb[0].mxu0 %v2748
      %v4243 = vpop.f32.mrb[0].mxu0
      %v4244 = vadd.f32 %v4085, %v4243
      %v4245 = vpop.f32.mrb[0].mxu0
      %v4246 = vpop.f32.mrb[0].mxu0
      %v4247 = vadd.f32 %v4088, %v4246
      %v4248 = vpop.f32.mrb[0].mxu0
      %4249 = vmatprep.mubr.bf16.mxu0 0
      %4250 = vmatmul.mubr.bf16.gmra.mrb[0].mxu0 %v2749
      %v4251 = vpop.f32.mrb[0].mxu0
      %v4252 = vadd.f32 %v4093, %v4251
      %v4253 = vpop.f32.mrb[0].mxu0
      %v4254 = vpop.f32.mrb[0].mxu0
      %v4255 = vadd.f32 %v4096, %v4254
      %v4256 = vpop.f32.mrb[0].mxu0
      %4257 = vmatprep.mubr.bf16.mxu0 0
      %4258 = vmatmul.mubr.bf16.gmra.mrb[0].mxu0 %v2750
      %v4259 = vpop.f32.mrb[0].mxu0
      %v4260 = vadd.f32 %v4101, %v4259
      %v4261 = vpop.f32.mrb[0].mxu0
      %v4262 = vpop.f32.mrb[0].mxu0
      %v4263 = vadd.f32 %v4104, %v4262
      %v4264 = vpop.f32.mrb[0].mxu0
      %4265 = vmatprep.mubr.bf16.mxu0 0
      %4266 = vmatmul.mubr.bf16.gmra.mrb[0].mxu0 %v2751
      %v4267 = vpop.f32.mrb[0].mxu0
      %v4268 = vadd.f32 %v4109, %v4267
      %v4269 = vpop.f32.mrb[0].mxu0
      %v4270 = vpop.f32.mrb[0].mxu0
      %v4271 = vadd.f32 %v4112, %v4270
      %v4272 = vpop.f32.mrb[0].mxu0
      %4273 = vmatprep.mubr.bf16.mxu0 0
      %4274 = vmatmul.mubr.bf16.gmra.mrb[0].mxu0 %v2752
      %v4275 = vpop.f32.mrb[0].mxu0
      %v4276 = vadd.f32 %v4117, %v4275
      %v4277 = vpop.f32.mrb[0].mxu0
      %v4278 = vpop.f32.mrb[0].mxu0
      %v4279 = vadd.f32 %v4120, %v4278
      %v4280 = vpop.f32.mrb[0].mxu0
      %4281 = vmatprep.mubr.bf16.mxu0 0
      %4282 = vmatmul.mubr.bf16.gmra.mrb[0].mxu0 %v2753
      %v4283 = vpop.f32.mrb[0].mxu0
      %v4284 = vadd.f32 %v4125, %v4283
      %v4285 = vpop.f32.mrb[0].mxu0
      %v4286 = vpop.f32.mrb[0].mxu0
      %v4287 = vadd.f32 %v4128, %v4286
      %v4288 = vpop.f32.mrb[0].mxu0
      %4289 = vdwg.mxu0
      %v4290 = vadd.f32 %v3148, %v3653
      %v4291 = vadd.f32 %v3151, %v3656
      %v4292 = vadd.f32 %v3140, %v3661
      %v4293 = vadd.f32 %v3143, %v3664
      %v4294 = vadd.f32 %v3148, %v3669
      %v4295 = vadd.f32 %v3151, %v3672
      %v4296 = vadd.f32 %v3156, %v3677
      %v4297 = vadd.f32 %v3159, %v3680
      %v4298 = vadd.f32 %v3164, %v3685
      %v4299 = vadd.f32 %v3167, %v3688
      %v4300 = vadd.f32 %v3172, %v3693
      %v4301 = vadd.f32 %v3175, %v3696
      %v4302 = vadd.f32 %v3180, %v3701
      %v4303 = vadd.f32 %v3183, %v3704
      %v4304 = vadd.f32 %v3188, %v3709
      %v4305 = vadd.f32 %v3191, %v3712
      %v4306 = vadd.f32 %v3196, %v3717
      %v4307 = vadd.f32 %v3199, %v3720
      %v4308 = vadd.f32 %v3204, %v3725
      %v4309 = vadd.f32 %v3207, %v3728
      %v4310 = vadd.f32 %v3212, %v3733
      %v4311 = vadd.f32 %v3215, %v3736
      %v4312 = vadd.f32 %v3220, %v3741
      %v4313 = vadd.f32 %v3223, %v3744
      %v4314 = vadd.f32 %v3228, %v3749
      %v4315 = vadd.f32 %v3231, %v3752
      %v4316 = vadd.f32 %v3236, %v3757
      %v4317 = vadd.f32 %v3239, %v3760
      %v4318 = vadd.f32 %v3244, %v3765
      %v4319 = vadd.f32 %v3247, %v3768
      %v4320 = vadd.f32 %v3252, %v3773
      %v4321 = vadd.f32 %v3255, %v3776
      %v4322 = vadd.f32 %v4290, %v4172
      %v4323 = vadd.f32 %v4291, %v4175
      %v4324 = vadd.f32 %v4292, %v4180
      %v4325 = vadd.f32 %v4293, %v4183
      %v4326 = vadd.f32 %v4294, %v4188
      %v4327 = vadd.f32 %v4295, %v4191
      %v4328 = vadd.f32 %v4296, %v4196
      %v4329 = vadd.f32 %v4297, %v4199
      %v4330 = vadd.f32 %v4298, %v4204
      %v4331 = vadd.f32 %v4299, %v4207
      %v4332 = vadd.f32 %v4300, %v4212
      %v4333 = vadd.f32 %v4301, %v4215
      %v4334 = vadd.f32 %v4302, %v4220
      %v4335 = vadd.f32 %v4303, %v4223
      %v4336 = vadd.f32 %v4304, %v4228
      %v4337 = vadd.f32 %v4305, %v4231
      %v4338 = vadd.f32 %v4306, %v4236
      %v4339 = vadd.f32 %v4307, %v4239
      %v4340 = vadd.f32 %v4308, %v4244
      %v4341 = vadd.f32 %v4309, %v4247
      %v4342 = vadd.f32 %v4310, %v4252
      %v4343 = vadd.f32 %v4311, %v4255
      %v4344 = vadd.f32 %v4312, %v4260
      %v4345 = vadd.f32 %v4313, %v4263
      %v4346 = vadd.f32 %v4314, %v4268
      %v4347 = vadd.f32 %v4315, %v4271
      %v4348 = vadd.f32 %v4316, %v4276
      %v4349 = vadd.f32 %v4317, %v4279
      %v4350 = vadd.f32 %v4318, %v4284
      %v4351 = vadd.f32 %v4319, %v4287
      %v4352 = vadd.f32 %v4320, %v4276
      %v4353 = vadd.f32 %v4321, %v4279
      %v4354 = vadd.f32 %v4322, %v4323
      %v4355 = vadd.f32 %v4354, %v4324
      %v4356 = vadd.f32 %v4355, %v4325
      %v4357 = vadd.f32 %v4356, %v4326
      %v4358 = vadd.f32 %v4357, %v4327
      %v4359 = vadd.f32 %v4358, %v4328
      %v4360 = vadd.f32 %v4359, %v4329
      %v4361 = vadd.f32 %v4360, %v4330
      %v4362 = vadd.f32 %v4361, %v4331
      %v4363 = vadd.f32 %v4362, %v4332
      %v4364 = vadd.f32 %v4363, %v4333
      %v4365 = vadd.f32 %v4364, %v4334
      %v4366 = vadd.f32 %v4365, %v4335
      %v4367 = vadd.f32 %v4366, %v4336
      %v4368 = vadd.f32 %v4367, %v4337
      %v4369 = vadd.f32 %v4368, %v4338
      %v4370 = vadd.f32 %v4369, %v4339
      %v4371 = vadd.f32 %v4370, %v4340
      %v4372 = vadd.f32 %v4371, %v4341
      %v4373 = vadd.f32 %v4372, %v4342
      %v4374 = vadd.f32 %v4373, %v4343
      %v4375 = vadd.f32 %v4374, %v4344
      %v4376 = vadd.f32 %v4375, %v4345
      %v4377 = vadd.f32 %v4376, %v4346
      %v4378 = vadd.f32 %v4377, %v4347
      %v4379 = vadd.f32 %v4378, %v4348
      %v4380 = vadd.f32 %v4379, %v4349
      %v4381 = vadd.f32 %v4380, %v4350
      %v4382 = vadd.f32 %v4381, %v4351
      %v4383 = vadd.f32 %v4382, %v4352
      %v4384 = vadd.f32 %v4383, %v4353
      %v4385 = vrot.slane %v4384, 4
      %v4386 = vadd.f32 %v4384, %v4385
      %v4387 = vrot.slane %v4386, 2
      %v4388 = vadd.f32 %v4386, %v4387
      %v4389 = vrot.slane %v4388, 1
      %v4390 = vadd.f32 %v4388, %v4389
      %v4391 = vmul.f32 %v4390, 0.00390625
      %v4392 = vmul.f32 %v4322, %v4322
      %v4393 = vmul.f32 %v4323, %v4323
      %v4394 = vmul.f32 %v4324, %v4324
      %v4395 = vmul.f32 %v4325, %v4325
      %v4396 = vmul.f32 %v4326, %v4326
      %v4397 = vmul.f32 %v4327, %v4327
      %v4398 = vmul.f32 %v4328, %v4328
      %v4399 = vmul.f32 %v4329, %v4329
      %v4400 = vmul.f32 %v4330, %v4330
      %v4401 = vmul.f32 %v4331, %v4331
      %v4402 = vmul.f32 %v4332, %v4332
      %v4403 = vmul.f32 %v4333, %v4333
      %v4404 = vmul.f32 %v4334, %v4334
      %v4405 = vmul.f32 %v4335, %v4335
      %v4406 = vmul.f32 %v4336, %v4336
      %v4407 = vmul.f32 %v4337, %v4337
      %v4408 = vmul.f32 %v4338, %v4338
      %v4409 = vmul.f32 %v4339, %v4339
      %v4410 = vmul.f32 %v4340, %v4340
      %v4411 = vmul.f32 %v4341, %v4341
      %v4412 = vmul.f32 %v4342, %v4342
      %v4413 = vmul.f32 %v4343, %v4343
      %v4414 = vmul.f32 %v4344, %v4344
      %v4415 = vmul.f32 %v4345, %v4345
      %v4416 = vmul.f32 %v4346, %v4346
      %v4417 = vmul.f32 %v4347, %v4347
      %v4418 = vmul.f32 %v4348, %v4348
      %v4419 = vmul.f32 %v4349, %v4349
      %v4420 = vmul.f32 %v4350, %v4350
      %v4421 = vmul.f32 %v4351, %v4351
      %v4422 = vmul.f32 %v4352, %v4352
      %v4423 = vmul.f32 %v4353, %v4353
      %v4424 = vadd.f32 %v4392, %v4393
      %v4425 = vadd.f32 %v4424, %v4394
      %v4426 = vadd.f32 %v4425, %v4395
      %v4427 = vadd.f32 %v4426, %v4396
      %v4428 = vadd.f32 %v4427, %v4397
      %v4429 = vadd.f32 %v4428, %v4398
      %v4430 = vadd.f32 %v4429, %v4399
      %v4431 = vadd.f32 %v4430, %v4400
      %v4432 = vadd.f32 %v4431, %v4401
      %v4433 = vadd.f32 %v4432, %v4402
      %v4434 = vadd.f32 %v4433, %v4403
      %v4435 = vadd.f32 %v4434, %v4404
      %v4436 = vadd.f32 %v4435, %v4405
      %v4437 = vadd.f32 %v4436, %v4406
      %v4438 = vadd.f32 %v4437, %v4407
      %v4439 = vadd.f32 %v4438, %v4408
      %v4440 = vadd.f32 %v4439, %v4409
      %v4441 = vadd.f32 %v4440, %v4410
      %v4442 = vadd.f32 %v4441, %v4411
      %v4443 = vadd.f32 %v4442, %v4412
      %v4444 = vadd.f32 %v4443, %v4413
      %v4445 = vadd.f32 %v4444, %v4414
      %v4446 = vadd.f32 %v4445, %v4415
      %v4447 = vadd.f32 %v4446, %v4416
      %v4448 = vadd.f32 %v4447, %v4417
      %v4449 = vadd.f32 %v4448, %v4418
      %v4450 = vadd.f32 %v4449, %v4419
      %v4451 = vadd.f32 %v4450, %v4420
      %v4452 = vadd.f32 %v4451, %v4421
      %v4453 = vadd.f32 %v4452, %v4422
      %v4454 = vadd.f32 %v4453, %v4423
      %v4455 = vrot.slane %v4454, 4
      %v4456 = vadd.f32 %v4454, %v4455
      %v4457 = vrot.slane %v4456, 2
      %v4458 = vadd.f32 %v4456, %v4457
      %v4459 = vrot.slane %v4458, 1
      %v4460 = vadd.f32 %v4458, %v4459
      %v4461 = vmul.f32 %v4460, 0.00390625
      %v4462 = vmul.f32 %v4391, %v4391
      %v4463 = vsub.f32 %v4461, %v4462
      %v4464 = vadd.f32 %v4463, 1e-05
      %v4465 = vrsqrt.pop %v4464
      %v4466 = vsub.f32 %v4322, %v4391
      %v4467 = vsub.f32 %v4323, %v4391
      %v4468 = vsub.f32 %v4324, %v4391
      %v4469 = vsub.f32 %v4325, %v4391
      %v4470 = vsub.f32 %v4326, %v4391
      %v4471 = vsub.f32 %v4327, %v4391
      %v4472 = vsub.f32 %v4328, %v4391
      %v4473 = vsub.f32 %v4329, %v4391
      %v4474 = vsub.f32 %v4330, %v4391
      %v4475 = vsub.f32 %v4331, %v4391
      %v4476 = vsub.f32 %v4332, %v4391
      %v4477 = vsub.f32 %v4333, %v4391
      %v4478 = vsub.f32 %v4334, %v4391
      %v4479 = vsub.f32 %v4335, %v4391
      %v4480 = vsub.f32 %v4336, %v4391
      %v4481 = vsub.f32 %v4337, %v4391
      %v4482 = vsub.f32 %v4338, %v4391
      %v4483 = vsub.f32 %v4339, %v4391
      %v4484 = vsub.f32 %v4340, %v4391
      %v4485 = vsub.f32 %v4341, %v4391
      %v4486 = vsub.f32 %v4342, %v4391
      %v4487 = vsub.f32 %v4343, %v4391
      %v4488 = vsub.f32 %v4344, %v4391
      %v4489 = vsub.f32 %v4345, %v4391
      %v4490 = vsub.f32 %v4346, %v4391
      %v4491 = vsub.f32 %v4347, %v4391
      %v4492 = vsub.f32 %v4348, %v4391
      %v4493 = vsub.f32 %v4349, %v4391
      %v4494 = vsub.f32 %v4350, %v4391
      %v4495 = vsub.f32 %v4351, %v4391
      %v4496 = vsub.f32 %v4352, %v4391
      %v4497 = vsub.f32 %v4353, %v4391
      %v4498 = vmul.f32 %v4466, %v4465
      %v4499 = vmul.f32 %v4467, %v4465
      %v4500 = vmul.f32 %v4468, %v4465
      %v4501 = vmul.f32 %v4469, %v4465
      %v4502 = vmul.f32 %v4470, %v4465
      %v4503 = vmul.f32 %v4471, %v4465
      %v4504 = vmul.f32 %v4472, %v4465
      %v4505 = vmul.f32 %v4473, %v4465
      %v4506 = vmul.f32 %v4474, %v4465
      %v4507 = vmul.f32 %v4475, %v4465
      %v4508 = vmul.f32 %v4476, %v4465
      %v4509 = vmul.f32 %v4477, %v4465
      %v4510 = vmul.f32 %v4478, %v4465
      %v4511 = vmul.f32 %v4479, %v4465
      %v4512 = vmul.f32 %v4480, %v4465
      %v4513 = vmul.f32 %v4481, %v4465
      %v4514 = vmul.f32 %v4482, %v4465
      %v4515 = vmul.f32 %v4483, %v4465
      %v4516 = vmul.f32 %v4484, %v4465
      %v4517 = vmul.f32 %v4485, %v4465
      %v4518 = vmul.f32 %v4486, %v4465
      %v4519 = vmul.f32 %v4487, %v4465
      %v4520 = vmul.f32 %v4488, %v4465
      %v4521 = vmul.f32 %v4489, %v4465
      %v4522 = vmul.f32 %v4490, %v4465
      %v4523 = vmul.f32 %v4491, %v4465
      %v4524 = vmul.f32 %v4492, %v4465
      %v4525 = vmul.f32 %v4493, %v4465
      %v4526 = vmul.f32 %v4494, %v4465
      %v4527 = vmul.f32 %v4495, %v4465
      %v4528 = vmul.f32 %v4496, %v4465
      %v4529 = vmul.f32 %v4497, %v4465
      %v4530 = vunpack.c.l.bf16 %v172
      %v4531 = vunpack.c.l.bf16 %v173
      %v4532 = vunpack.c.l.bf16 %v174
      %v4533 = vunpack.c.l.bf16 %v175
      %v4534 = vunpack.c.l.bf16 %v176
      %v4535 = vunpack.c.l.bf16 %v177
      %v4536 = vunpack.c.l.bf16 %v178
      %v4537 = vunpack.c.l.bf16 %v179
      %v4538 = vunpack.c.l.bf16 %v180
      %v4539 = vunpack.c.l.bf16 %v181
      %v4540 = vunpack.c.l.bf16 %v182
      %v4541 = vunpack.c.l.bf16 %v183
      %v4542 = vunpack.c.l.bf16 %v184
      %v4543 = vunpack.c.l.bf16 %v185
      %v4544 = vunpack.c.l.bf16 %v186
      %v4545 = vunpack.c.l.bf16 %v187
      %v4546 = vunpack.c.l.bf16 %v188
      %v4547 = vunpack.c.l.bf16 %v189
      %v4548 = vunpack.c.l.bf16 %v190
      %v4549 = vunpack.c.l.bf16 %v191
      %v4550 = vunpack.c.l.bf16 %v192
      %v4551 = vunpack.c.l.bf16 %v193
      %v4552 = vunpack.c.l.bf16 %v194
      %v4553 = vunpack.c.l.bf16 %v195
      %v4554 = vunpack.c.l.bf16 %v196
      %v4555 = vunpack.c.l.bf16 %v197
      %v4556 = vunpack.c.l.bf16 %v198
      %v4557 = vunpack.c.l.bf16 %v199
      %v4558 = vunpack.c.l.bf16 %v200
      %v4559 = vunpack.c.l.bf16 %v201
      %v4560 = vunpack.c.l.bf16 %v202
      %v4561 = vunpack.c.l.bf16 %v203
      %v4562 = vadd.f32 %v4530, %v4498
      %v4563 = vadd.f32 %v4531, %v4499
      %v4564 = vadd.f32 %v4532, %v4500
      %v4565 = vadd.f32 %v4533, %v4501
      %v4566 = vadd.f32 %v4534, %v4502
      %v4567 = vadd.f32 %v4535, %v4503
      %v4568 = vadd.f32 %v4536, %v4504
      %v4569 = vadd.f32 %v4537, %v4505
      %v4570 = vadd.f32 %v4538, %v4506
      %v4571 = vadd.f32 %v4539, %v4507
      %v4572 = vadd.f32 %v4540, %v4508
      %v4573 = vadd.f32 %v4541, %v4509
      %v4574 = vadd.f32 %v4542, %v4510
      %v4575 = vadd.f32 %v4543, %v4511
      %v4576 = vadd.f32 %v4544, %v4512
      %v4577 = vadd.f32 %v4545, %v4513
      %v4578 = vadd.f32 %v4546, %v4514
      %v4579 = vadd.f32 %v4547, %v4515
      %v4580 = vadd.f32 %v4548, %v4516
      %v4581 = vadd.f32 %v4549, %v4517
      %v4582 = vadd.f32 %v4550, %v4518
      %v4583 = vadd.f32 %v4551, %v4519
      %v4584 = vadd.f32 %v4552, %v4520
      %v4585 = vadd.f32 %v4553, %v4521
      %v4586 = vadd.f32 %v4554, %v4522
      %v4587 = vadd.f32 %v4555, %v4523
      %v4588 = vadd.f32 %v4556, %v4524
      %v4589 = vadd.f32 %v4557, %v4525
      %v4590 = vadd.f32 %v4558, %v4526
      %v4591 = vadd.f32 %v4559, %v4527
      %v4592 = vadd.f32 %v4560, %v4528
      %v4593 = vadd.f32 %v4561, %v4529
      %4594 = vst [vmem:[%s170] sm:$0xff] %v4562
      %4595 = vst [vmem:[%s170 + $0x8] sm:$0xff] %v4563
      %4596 = vst [vmem:[%s170 + $0x10] sm:$0xff] %v4564
      %4597 = vst [vmem:[%s170 + $0x18] sm:$0xff] %v4565
      %4598 = vst [vmem:[%s170 + $0x20] sm:$0xff] %v4566
      %4599 = vst [vmem:[%s170 + $0x28] sm:$0xff] %v4567
      %4600 = vst [vmem:[%s170 + $0x30] sm:$0xff] %v4568
      %4601 = vst [vmem:[%s170 + $0x38] sm:$0xff] %v4569
      %4602 = vst [vmem:[%s170 + $0x40] sm:$0xff] %v4570
      %4603 = vst [vmem:[%s170 + $0x48] sm:$0xff] %v4571
      %4604 = vst [vmem:[%s170 + $0x50] sm:$0xff] %v4572
      %4605 = vst [vmem:[%s170 + $0x58] sm:$0xff] %v4573
      %4606 = vst [vmem:[%s170 + $0x60] sm:$0xff] %v4574
      %4607 = vst [vmem:[%s170 + $0x68] sm:$0xff] %v4575
      %4608 = vst [vmem:[%s170 + $0x70] sm:$0xff] %v4576
      %4609 = vst [vmem:[%s170 + $0x78] sm:$0xff] %v4577
      %4610 = vst [vmem:[%s170 + $0x80] sm:$0xff] %v4578
      %4611 = vst [vmem:[%s170 + $0x88] sm:$0xff] %v4579
      %4612 = vst [vmem:[%s170 + $0x90] sm:$0xff] %v4580
      %4613 = vst [vmem:[%s170 + $0x98] sm:$0xff] %v4581
      %4614 = vst [vmem:[%s170 + $0xa0] sm:$0xff] %v4582
      %4615 = vst [vmem:[%s170 + $0xa8] sm:$0xff] %v4583
      %4616 = vst [vmem:[%s170 + $0xb0] sm:$0xff] %v4584
      %4617 = vst [vmem:[%s170 + $0xb8] sm:$0xff] %v4585
      %4618 = vst [vmem:[%s170 + $0xc0] sm:$0xff] %v4586
      %4619 = vst [vmem:[%s170 + $0xc8] sm:$0xff] %v4587
      %4620 = vst [vmem:[%s170 + $0xd0] sm:$0xff] %v4588
      %4621 = vst [vmem:[%s170 + $0xd8] sm:$0xff] %v4589
      %4622 = vst [vmem:[%s170 + $0xe0] sm:$0xff] %v4590
      %4623 = vst [vmem:[%s170 + $0xe8] sm:$0xff] %v4591
      %4624 = vst [vmem:[%s170 + $0xf0] sm:$0xff] %v4592
      %4625 = vst [vmem:[%s170 + $0xf8] sm:$0xff] %v4593
      %p4626 = scmp.lt.s32.totalorder %s14, 1
      %s4627 = scalar_select %p4626, %s14, 1
      %s4628 = smul.addr %s4627, 32
      %s4629 = smul.addr %s4628, 8
      %s4630 = scalar_lea.vmem %s3, %s4629
      // Predicated region
      $region33: #{residual_block.1} parent=31 // pred_check
        %p4631 = pneg %p100
      $region34: #{residual_block.1} parent=31 // pred_check_branch
        %4633 = sbr.rel (%p4631) target = $region36
      $region35: #{residual_block.1} parent=31 // pred_region
        _
      $region36: #{residual_block.1} parent=31 // pred_fallthru
        _
    $region32: #{residual_block.1} parent=5 // pred_fallthru
      _
    %p4634 = scmp.le.s32.totalorder 2, %s9
    // Predicated region
    $region37: #{residual_block.1} parent=5 // pred_check
      %p4635 = pneg %p4634
    $region38: #{residual_block.1} parent=5 // pred_check_branch
      %4637 = sbr.rel (%p4635) target = $region40
    $region39: #{residual_block.1} parent=5 // pred_region
      %s4638 = ssub.s32 %s9, 2
      // Predicated region
      $region41: #{residual_block.1} parent=39 // pred_check
        %p4639 = pneg %p106
      $region42: #{residual_block.1} parent=39 // pred_check_branch
        %4641 = sbr.rel (%p4639) target = $region44
      $region43: #{residual_block.1} parent=39 // pred_region
        %p4642 = scmp.lt.s32.totalorder %s15, 1
        %s4643 = scalar_select %p4642, %s15, 1
        %s4644 = smul.addr %s4643, 32
        %s4645 = smul.addr %s4644, 8
        %s4646 = scalar_lea.vmem %s3, %s4645
      $region44: #{residual_block.1} parent=39 // pred_fallthru
        _
    $region40: #{residual_block.1} parent=5 // pred_fallthru
      _
  $region6: #{residual_block.1} parent=0 // loop_footer
    %s13 = sadd.s32 1, %s9
  $region7: #{residual_block.1} parent=0 // loop_footer_branch
    %8 = sbr.rel target = $region3
  $region8: #{residual_block.1} parent=0 // loop_exit
    _

</llo_original>
